<compile_context>
chip_gen: v5e
topology: v5e:2x2
jax: 0.10.0
libtpu: 0.0.40
codegen_flags: <defaults>
</compile_context>

<pallas_src>
from functools import reduce
from operator import mul

import jax
import jax.numpy as jnp
from jax.experimental import pallas as pl
from jax.experimental.pallas import tpu as pltpu

FC_OUT_FEATURES = [64, 64, 64]
N_CLASSES = 10

WEIGHT_BIT_WIDTH = 4
ACT_BIT_WIDTH = 4
IN_BIT_WIDTH = 8

INTERMEDIATE_FC_PER_OUT_CH_SCALING = True
LAST_FC_PER_OUT_CH_SCALING = False

BN_EPS = 1e-5

LANE = 128


def _round_up(x, m):
    return (x + m - 1) // m * m


# ----------------------------------------------------------------------------
# quantized ops (used both in-kernel and in the pure-JAX reference)
# ----------------------------------------------------------------------------
def _quant_hard_tanh(x, bit_width):
    # brevitas-style QuantHardTanh: clamp to [-1, 1] + symmetric uniform quant.
    # TODO(synk): brevitas uses learned/parameterised scaling; approximated here
    # with a fixed unit scale and 2^b symmetric levels.
    n = 2.0 ** (bit_width - 1) - 1.0
    x = jnp.clip(x, -1.0, 1.0)
    return jnp.round(x * n) / n


def _quantize_weight(w, bit_width, per_output_channel):
    # symmetric uniform weight quantization (int<bit_width>), w has shape (out, in)
    n = 2.0 ** (bit_width - 1) - 1.0
    if per_output_channel:
        scale = jnp.max(jnp.abs(w), axis=1, keepdims=True) / n
    else:
        scale = jnp.max(jnp.abs(w)) / n
    scale = jnp.maximum(scale, 1e-8)
    return jnp.round(w / scale) * scale


# ----------------------------------------------------------------------------
# Pallas kernel: the entire TFC forward for one batch tile
# ----------------------------------------------------------------------------
def tfc_kernel(x_ref, *refs):
    out_ref = refs[-1]
    param_refs = refs[:-1]           # groups of 2: (w_bf16, c_f32) per layer
    n_layers = len(param_refs) // 2

    # input quant hardtanh in f32 (Dropout is identity in eval mode)
    h = _quant_hard_tanh(x_ref[...].astype(jnp.float32), IN_BIT_WIDTH)

    for li in range(n_layers):
        w_ref, c_ref = param_refs[2 * li: 2 * li + 2]
        # QuantLinear + folded BatchNorm: bf16 MXU operands, f32 accumulation.
        h = jnp.dot(h.astype(jnp.bfloat16), w_ref[...],
                    preferred_element_type=jnp.float32) + c_ref[...]
        if li < n_layers - 1:
            # hidden quant hardtanh (+ Dropout identity in eval), f32 VPU math
            h = _quant_hard_tanh(h, ACT_BIT_WIDTH)

    out_ref[...] = h.astype(out_ref.dtype)


# ----------------------------------------------------------------------------
# wrapper
# ----------------------------------------------------------------------------
def quant_tfc_forward(x, params, n_classes, *, batch_tile=256):
    B = x.shape[0]
    xf = x.reshape(B, -1)                     # == torch x.view(B, -1)
    D = xf.shape[1]
    D_pad = params[0][0].shape[0]             # padded input width (multiple of 128)
    out_pad = params[-1][0].shape[1]          # padded output width (multiple of 128)

    # batch tiling: keep tiles sublane friendly, pad batch to a tile multiple
    bt = min(batch_tile, _round_up(B, 16))
    B_pad = _round_up(B, bt)

    # stream input as bf16 (half the HBM bytes); zero-pad batch & feature dims
    xp = jnp.zeros((B_pad, D_pad), jnp.bfloat16)
    xp = xp.at[:B, :D].set(xf.astype(jnp.bfloat16))

    flat_params = []
    in_specs = [pl.BlockSpec((bt, D_pad), lambda i: (i, 0))]
    for (w, c) in params:
        flat_params += [w, c]
        in_specs += [
            pl.BlockSpec(w.shape, lambda i: (0, 0)),   # VMEM-resident across grid
            pl.BlockSpec(c.shape, lambda i: (0, 0)),
        ]
    out_spec = pl.BlockSpec((bt, out_pad), lambda i: (i, 0))

    out_full = pl.pallas_call(
        tfc_kernel,
        out_shape=jax.ShapeDtypeStruct((B_pad, out_pad), jnp.float32),
        grid_spec=pltpu.PrefetchScalarGridSpec(
            num_scalar_prefetch=0,
            grid=(B_pad // bt,),
            in_specs=in_specs,
            out_specs=out_spec,
        ),
        compiler_params=pltpu.CompilerParams(dimension_semantics=("parallel",)),
    )(xp, *flat_params)

    return out_full[:B, :n_classes]


# ----------------------------------------------------------------------------
# deterministic parameter construction (synthetic, no checkpoint)
# BatchNorm is folded into each linear layer; all shapes zero-padded to 128.
# ----------------------------------------------------------------------------
def init_params(key, in_features, n_classes):
    dims = [in_features] + FC_OUT_FEATURES + [n_classes]
    per_ch = [INTERMEDIATE_FC_PER_OUT_CH_SCALING] * len(FC_OUT_FEATURES) + [
        LAST_FC_PER_OUT_CH_SCALING
    ]
    params = []
    for li in range(len(dims) - 1):
        fin, fout = dims[li], dims[li + 1]
        fin_p, fout_p = _round_up(fin, LANE), _round_up(fout, LANE)
        key, kw, kb, kg, kbe, km, kv = jax.random.split(key, 7)
        bound = 1.0 / jnp.sqrt(jnp.float32(fin))
        w = jax.random.uniform(kw, (fout, fin), jnp.float32, -bound, bound)
        w = _quantize_weight(w, WEIGHT_BIT_WIDTH, per_ch[li])
        b = jax.random.uniform(kb, (fout,), jnp.float32, -bound, bound)
        # BatchNorm1d parameters + running stats (eval mode)
        gamma = jax.random.uniform(kg, (fout,), jnp.float32, 0.5, 1.5)
        beta = jax.random.uniform(kbe, (fout,), jnp.float32, -0.1, 0.1)
        mean = jax.random.uniform(km, (fout,), jnp.float32, -0.5, 0.5)
        var = jax.random.uniform(kv, (fout,), jnp.float32, 0.5, 1.5)
        scale = gamma / jnp.sqrt(var + BN_EPS)
        shift = beta - mean * scale
        # fold BN:  (x @ W^T + b) * s + t  ==  x @ (W^T * s) + (b*s + t)
        w_folded = w.T * scale[None, :]              # (fin, fout)
        c_folded = b * scale + shift                 # (fout,)
        # zero-pad to lane-dense shapes (padded lanes stay exactly 0 end-to-end)
        w_pad = jnp.zeros((fin_p, fout_p), jnp.float32)
        w_pad = w_pad.at[:fin, :fout].set(w_folded)
        c_pad = jnp.zeros((1, fout_p), jnp.float32)
        c_pad = c_pad.at[0, :fout].set(c_folded)
        params.append((w_pad.astype(jnp.bfloat16), c_pad))
    return params


# ----------------------------------------------------------------------------
# pure-JAX reference with identical numerics (bf16 operands, f32 accumulation)
# ----------------------------------------------------------------------------
def reference_forward(x, params, n_classes):
    h = x.reshape(x.shape[0], -1)
    D = h.shape[1]
    D_pad = params[0][0].shape[0]
    h = h.astype(jnp.bfloat16).astype(jnp.float32)          # wrapper's bf16 stream
    h = jnp.pad(h, ((0, 0), (0, D_pad - D)))
    h = _quant_hard_tanh(h, IN_BIT_WIDTH)
    for li, (w, c) in enumerate(params):
        h = jnp.dot(h.astype(jnp.bfloat16), w,
                    preferred_element_type=jnp.float32) + c
        if li < len(params) - 1:
            h = _quant_hard_tanh(h, ACT_BIT_WIDTH)
    return h[:, :n_classes]


if __name__ == "__main__":
    key = jax.random.PRNGKey(0)
    kx, kp = jax.random.split(key)

    # NCHW input, flattened to B x (C*H*W); batch sized to give >= 2 grid steps
    B, C, H, W = 512, 3, 16, 16
    x = jax.random.normal(kx, (B, C, H, W), jnp.float32)

    in_features = reduce(mul, (H, W)) * C
    params = init_params(kp, in_features, N_CLASSES)

    out = quant_tfc_forward(x, params, N_CLASSES, batch_tile=256)
    out = jax.block_until_ready(out)

    ref = reference_forward(x, params, N_CLASSES)
    assert out.shape == (B, N_CLASSES), out.shape
    assert jnp.allclose(out, ref, atol=2e-2, rtol=1e-3), (
        float(jnp.max(jnp.abs(out - ref)))
    )
    print("KERNEL_OK")
</pallas_src>

<mosaic_0001>
module attributes {stable_mosaic.version = 11 : i64} {
  func.func @tfc_kernel(%arg0: i32, %arg1: memref<256x768xbf16, #tpu.memory_space<vmem>>, %arg2: memref<768x128xbf16, #tpu.memory_space<vmem>>, %arg3: memref<1x128xf32, #tpu.memory_space<vmem>>, %arg4: memref<128x128xbf16, #tpu.memory_space<vmem>>, %arg5: memref<1x128xf32, #tpu.memory_space<vmem>>, %arg6: memref<128x128xbf16, #tpu.memory_space<vmem>>, %arg7: memref<1x128xf32, #tpu.memory_space<vmem>>, %arg8: memref<128x128xbf16, #tpu.memory_space<vmem>>, %arg9: memref<1x128xf32, #tpu.memory_space<vmem>>, %arg10: memref<256x128xf32, #tpu.memory_space<vmem>>) attributes {dimension_semantics = [#tpu.dimension_semantics<parallel>], iteration_bounds = array<i64: 2>, scalar_prefetch = 0 : i64, scratch_operands = 0 : i64, tpu.core_type = #tpu.core_type<tc>, window_params = [{transform_indices = @transform_0, window_bounds = array<i64: 256, 768>}, {pipeline_mode = #tpu.pipeline_mode<synchronous>, transform_indices = @transform_1, window_bounds = array<i64: 768, 128>}, {pipeline_mode = #tpu.pipeline_mode<synchronous>, transform_indices = @transform_2, window_bounds = array<i64: 1, 128>}, {pipeline_mode = #tpu.pipeline_mode<synchronous>, transform_indices = @transform_3, window_bounds = array<i64: 128, 128>}, {pipeline_mode = #tpu.pipeline_mode<synchronous>, transform_indices = @transform_4, window_bounds = array<i64: 1, 128>}, {pipeline_mode = #tpu.pipeline_mode<synchronous>, transform_indices = @transform_5, window_bounds = array<i64: 128, 128>}, {pipeline_mode = #tpu.pipeline_mode<synchronous>, transform_indices = @transform_6, window_bounds = array<i64: 1, 128>}, {pipeline_mode = #tpu.pipeline_mode<synchronous>, transform_indices = @transform_7, window_bounds = array<i64: 128, 128>}, {pipeline_mode = #tpu.pipeline_mode<synchronous>, transform_indices = @transform_8, window_bounds = array<i64: 1, 128>}, {transform_indices = @transform_9, window_bounds = array<i64: 256, 128>}]} {
    %c0 = arith.constant 0 : index
    %c0_0 = arith.constant 0 : index
    %0 = vector.load %arg1[%c0, %c0_0] : memref<256x768xbf16, #tpu.memory_space<vmem>>, vector<256x768xbf16>
    %1 = arith.extf %0 : vector<256x768xbf16> to vector<256x768xf32>
    %cst = arith.constant -1.000000e+00 : f32
    %cst_1 = arith.constant 1.000000e+00 : f32
    %2 = vector.broadcast %cst : f32 to vector<256x768xf32>
    %3 = arith.maximumf %2, %1 : vector<256x768xf32>
    %4 = vector.broadcast %cst_1 : f32 to vector<256x768xf32>
    %5 = arith.minimumf %4, %3 : vector<256x768xf32>
    %cst_2 = arith.constant 1.270000e+02 : f32
    %6 = vector.broadcast %cst_2 : f32 to vector<256x768xf32>
    %7 = arith.mulf %5, %6 : vector<256x768xf32>
    %8 = math.roundeven %7 : vector<256x768xf32>
    %cst_3 = arith.constant 1.270000e+02 : f32
    %9 = vector.broadcast %cst_3 : f32 to vector<256x768xf32>
    %10 = arith.divf %8, %9 : vector<256x768xf32>
    %11 = arith.truncf %10 : vector<256x768xf32> to vector<256x768xbf16>
    %c0_4 = arith.constant 0 : index
    %c0_5 = arith.constant 0 : index
    %12 = vector.load %arg2[%c0_4, %c0_5] : memref<768x128xbf16, #tpu.memory_space<vmem>>, vector<768x128xbf16>
    %cst_6 = arith.constant dense<0.000000e+00> : vector<256x128xf32>
    %13 = tpu.matmul %11, %12, %cst_6 {dimension_numbers = #tpu.dot_dimension_numbers<[1], [0], [0], [1], [0, 0, 1, 1], [], []>} : vector<256x768xbf16>, vector<768x128xbf16>, vector<256x128xf32> -> vector<256x128xf32>
    %c0_7 = arith.constant 0 : index
    %c0_8 = arith.constant 0 : index
    %14 = vector.load %arg3[%c0_7, %c0_8] : memref<1x128xf32, #tpu.memory_space<vmem>>, vector<1x128xf32>
    %15 = vector.broadcast %14 : vector<1x128xf32> to vector<256x128xf32>
    %16 = arith.addf %13, %15 : vector<256x128xf32>
    %cst_9 = arith.constant -1.000000e+00 : f32
    %cst_10 = arith.constant 1.000000e+00 : f32
    %17 = vector.broadcast %cst_9 : f32 to vector<256x128xf32>
    %18 = arith.maximumf %17, %16 : vector<256x128xf32>
    %19 = vector.broadcast %cst_10 : f32 to vector<256x128xf32>
    %20 = arith.minimumf %19, %18 : vector<256x128xf32>
    %cst_11 = arith.constant 7.000000e+00 : f32
    %21 = vector.broadcast %cst_11 : f32 to vector<256x128xf32>
    %22 = arith.mulf %20, %21 : vector<256x128xf32>
    %23 = math.roundeven %22 : vector<256x128xf32>
    %cst_12 = arith.constant 7.000000e+00 : f32
    %24 = vector.broadcast %cst_12 : f32 to vector<256x128xf32>
    %25 = arith.divf %23, %24 : vector<256x128xf32>
    %26 = arith.truncf %25 : vector<256x128xf32> to vector<256x128xbf16>
    %c0_13 = arith.constant 0 : index
    %c0_14 = arith.constant 0 : index
    %27 = vector.load %arg4[%c0_13, %c0_14] : memref<128x128xbf16, #tpu.memory_space<vmem>>, vector<128x128xbf16>
    %cst_15 = arith.constant dense<0.000000e+00> : vector<256x128xf32>
    %28 = tpu.matmul %26, %27, %cst_15 {dimension_numbers = #tpu.dot_dimension_numbers<[1], [0], [0], [1], [0, 0, 1, 1], [], []>} : vector<256x128xbf16>, vector<128x128xbf16>, vector<256x128xf32> -> vector<256x128xf32>
    %c0_16 = arith.constant 0 : index
    %c0_17 = arith.constant 0 : index
    %29 = vector.load %arg5[%c0_16, %c0_17] : memref<1x128xf32, #tpu.memory_space<vmem>>, vector<1x128xf32>
    %30 = vector.broadcast %29 : vector<1x128xf32> to vector<256x128xf32>
    %31 = arith.addf %28, %30 : vector<256x128xf32>
    %cst_18 = arith.constant -1.000000e+00 : f32
    %cst_19 = arith.constant 1.000000e+00 : f32
    %32 = vector.broadcast %cst_18 : f32 to vector<256x128xf32>
    %33 = arith.maximumf %32, %31 : vector<256x128xf32>
    %34 = vector.broadcast %cst_19 : f32 to vector<256x128xf32>
    %35 = arith.minimumf %34, %33 : vector<256x128xf32>
    %cst_20 = arith.constant 7.000000e+00 : f32
    %36 = vector.broadcast %cst_20 : f32 to vector<256x128xf32>
    %37 = arith.mulf %35, %36 : vector<256x128xf32>
    %38 = math.roundeven %37 : vector<256x128xf32>
    %cst_21 = arith.constant 7.000000e+00 : f32
    %39 = vector.broadcast %cst_21 : f32 to vector<256x128xf32>
    %40 = arith.divf %38, %39 : vector<256x128xf32>
    %41 = arith.truncf %40 : vector<256x128xf32> to vector<256x128xbf16>
    %c0_22 = arith.constant 0 : index
    %c0_23 = arith.constant 0 : index
    %42 = vector.load %arg6[%c0_22, %c0_23] : memref<128x128xbf16, #tpu.memory_space<vmem>>, vector<128x128xbf16>
    %cst_24 = arith.constant dense<0.000000e+00> : vector<256x128xf32>
    %43 = tpu.matmul %41, %42, %cst_24 {dimension_numbers = #tpu.dot_dimension_numbers<[1], [0], [0], [1], [0, 0, 1, 1], [], []>} : vector<256x128xbf16>, vector<128x128xbf16>, vector<256x128xf32> -> vector<256x128xf32>
    %c0_25 = arith.constant 0 : index
    %c0_26 = arith.constant 0 : index
    %44 = vector.load %arg7[%c0_25, %c0_26] : memref<1x128xf32, #tpu.memory_space<vmem>>, vector<1x128xf32>
    %45 = vector.broadcast %44 : vector<1x128xf32> to vector<256x128xf32>
    %46 = arith.addf %43, %45 : vector<256x128xf32>
    %cst_27 = arith.constant -1.000000e+00 : f32
    %cst_28 = arith.constant 1.000000e+00 : f32
    %47 = vector.broadcast %cst_27 : f32 to vector<256x128xf32>
    %48 = arith.maximumf %47, %46 : vector<256x128xf32>
    %49 = vector.broadcast %cst_28 : f32 to vector<256x128xf32>
    %50 = arith.minimumf %49, %48 : vector<256x128xf32>
    %cst_29 = arith.constant 7.000000e+00 : f32
    %51 = vector.broadcast %cst_29 : f32 to vector<256x128xf32>
    %52 = arith.mulf %50, %51 : vector<256x128xf32>
    %53 = math.roundeven %52 : vector<256x128xf32>
    %cst_30 = arith.constant 7.000000e+00 : f32
    %54 = vector.broadcast %cst_30 : f32 to vector<256x128xf32>
    %55 = arith.divf %53, %54 : vector<256x128xf32>
    %56 = arith.truncf %55 : vector<256x128xf32> to vector<256x128xbf16>
    %c0_31 = arith.constant 0 : index
    %c0_32 = arith.constant 0 : index
    %57 = vector.load %arg8[%c0_31, %c0_32] : memref<128x128xbf16, #tpu.memory_space<vmem>>, vector<128x128xbf16>
    %cst_33 = arith.constant dense<0.000000e+00> : vector<256x128xf32>
    %58 = tpu.matmul %56, %57, %cst_33 {dimension_numbers = #tpu.dot_dimension_numbers<[1], [0], [0], [1], [0, 0, 1, 1], [], []>} : vector<256x128xbf16>, vector<128x128xbf16>, vector<256x128xf32> -> vector<256x128xf32>
    %c0_34 = arith.constant 0 : index
    %c0_35 = arith.constant 0 : index
    %59 = vector.load %arg9[%c0_34, %c0_35] : memref<1x128xf32, #tpu.memory_space<vmem>>, vector<1x128xf32>
    %60 = vector.broadcast %59 : vector<1x128xf32> to vector<256x128xf32>
    %61 = arith.addf %58, %60 : vector<256x128xf32>
    %c0_36 = arith.constant 0 : index
    %c0_37 = arith.constant 0 : index
    %62 = vector.load %arg10[%c0_36, %c0_37] : memref<256x128xf32, #tpu.memory_space<vmem>>, vector<256x128xf32>
    tpu.vector_store %arg10[%c0_36, %c0_37], %61 {strides = array<i32>} : memref<256x128xf32, #tpu.memory_space<vmem>>, vector<256x128xf32>,
    return
  }
  func.func @transform_0(%arg0: i32) -> (i32, i32) {
    %c0_i32 = arith.constant 0 : i32
    %c0_i32_0 = arith.constant 0 : i32
    return %arg0, %c0_i32 : i32, i32
  }
  func.func @transform_1(%arg0: i32) -> (i32, i32) {
    %c0_i32 = arith.constant 0 : i32
    %c0_i32_0 = arith.constant 0 : i32
    %c0_i32_1 = arith.constant 0 : i32
    return %c0_i32, %c0_i32_0 : i32, i32
  }
  func.func @transform_2(%arg0: i32) -> (i32, i32) {
    %c0_i32 = arith.constant 0 : i32
    %c0_i32_0 = arith.constant 0 : i32
    %c0_i32_1 = arith.constant 0 : i32
    return %c0_i32, %c0_i32_0 : i32, i32
  }
  func.func @transform_3(%arg0: i32) -> (i32, i32) {
    %c0_i32 = arith.constant 0 : i32
    %c0_i32_0 = arith.constant 0 : i32
    %c0_i32_1 = arith.constant 0 : i32
    return %c0_i32, %c0_i32_0 : i32, i32
  }
  func.func @transform_4(%arg0: i32) -> (i32, i32) {
    %c0_i32 = arith.constant 0 : i32
    %c0_i32_0 = arith.constant 0 : i32
    %c0_i32_1 = arith.constant 0 : i32
    return %c0_i32, %c0_i32_0 : i32, i32
  }
  func.func @transform_5(%arg0: i32) -> (i32, i32) {
    %c0_i32 = arith.constant 0 : i32
    %c0_i32_0 = arith.constant 0 : i32
    %c0_i32_1 = arith.constant 0 : i32
    return %c0_i32, %c0_i32_0 : i32, i32
  }
  func.func @transform_6(%arg0: i32) -> (i32, i32) {
    %c0_i32 = arith.constant 0 : i32
    %c0_i32_0 = arith.constant 0 : i32
    %c0_i32_1 = arith.constant 0 : i32
    return %c0_i32, %c0_i32_0 : i32, i32
  }
  func.func @transform_7(%arg0: i32) -> (i32, i32) {
    %c0_i32 = arith.constant 0 : i32
    %c0_i32_0 = arith.constant 0 : i32
    %c0_i32_1 = arith.constant 0 : i32
    return %c0_i32, %c0_i32_0 : i32, i32
  }
  func.func @transform_8(%arg0: i32) -> (i32, i32) {
    %c0_i32 = arith.constant 0 : i32
    %c0_i32_0 = arith.constant 0 : i32
    %c0_i32_1 = arith.constant 0 : i32
    return %c0_i32, %c0_i32_0 : i32, i32
  }
  func.func @transform_9(%arg0: i32) -> (i32, i32) {
    %c0_i32 = arith.constant 0 : i32
    %c0_i32_0 = arith.constant 0 : i32
    return %arg0, %c0_i32 : i32, i32
  }
}

</mosaic_0001>

<llo_original>
// kernel: tpu_custom_call.1
$region0: #{tpu_custom_call.1}
  #allocation0 [shape = 'u32[]', space=smem, size = 0x4, offset = 0x4, fixed_abs, tag = 'smem constant byte address 0x4 - core index']
  #allocation1 [shape = 'u32[72,128]{1,0:T(1,128)}', space=vmem, size = 0x9000, scoped, tag = 'internal scratch']
  %s0 = inlined_call_operand.hbm [shape: bf16[512,768], index: 0, kind: input, shape index: {}]
  %s1 = inlined_call_operand.hbm [shape: bf16[768,128], index: 1, kind: input, shape index: {}]
  %s2 = inlined_call_operand.vmem [shape: f32[1,128], index: 2, kind: input, shape index: {}]
  %s3 = inlined_call_operand.hbm [shape: bf16[128,128], index: 3, kind: input, shape index: {}]
  %s4 = inlined_call_operand.vmem [shape: f32[1,128], index: 4, kind: input, shape index: {}]
  %s5 = inlined_call_operand.hbm [shape: bf16[128,128], index: 5, kind: input, shape index: {}]
  %s6 = inlined_call_operand.vmem [shape: f32[1,128], index: 6, kind: input, shape index: {}]
  %s7 = inlined_call_operand.hbm [shape: bf16[128,128], index: 7, kind: input, shape index: {}]
  %s8 = inlined_call_operand.vmem [shape: f32[1,128], index: 8, kind: input, shape index: {}]
  %s9 = inlined_call_operand.hbm [shape: f32[512,128], index: 9, kind: output, shape index: {}]
  %s10 = sld [smem:[#allocation0]]
  $region89: #{tpu_custom_call.1} parent=0
    _
  %s12 = ssub.s32 1, %s10
  %s13 = scalar_select 0, %s12, %s10
  $region1: #{tpu_custom_call.1} parent=0
    #allocation2 [shape = 'u8[786432]{0}', space=vmem, size = 0xc0000, scoped, tag = 'input window, operand 0']
    #allocation3 [shape = 's32[2]{0}', space=sflag, size = 0x8, scoped, tag = 'scoped memory for tpu_custom_call.1']
    #allocation4 [shape = 's32[2]{0}', space=sflag, size = 0x8, scoped, tag = 'scoped memory for tpu_custom_call.1']
    #allocation5 [shape = 'u8[196608]{0}', space=vmem, size = 0x30000, scoped, tag = 'input window, operand 1, single buffered']
    #allocation6 [shape = 's32[1]{0}', space=sflag, size = 0x4, scoped, tag = 'scoped memory for tpu_custom_call.1']
    #allocation7 [shape = 'u8[32768]{0}', space=vmem, size = 0x8000, scoped, tag = 'input window, operand 3, single buffered']
    #allocation8 [shape = 'u8[32768]{0}', space=vmem, size = 0x8000, scoped, tag = 'input window, operand 5, single buffered']
    #allocation9 [shape = 's32[1]{0}', space=sflag, size = 0x4, scoped, tag = 'scoped memory for tpu_custom_call.1']
    #allocation10 [shape = 'u8[32768]{0}', space=vmem, size = 0x8000, scoped, tag = 'input window, operand 7, single buffered']
    #allocation11 [shape = 'u8[262144]{0}', space=vmem, size = 0x40000, scoped, tag = 'output window, operand 0']
    %14 = vsyncpa [#allocation3], 0
    %s15 = scalar_lea.sflag [#allocation3], 1
    %16 = vsyncpa %s15, 0
    %17 = vsyncpa [#allocation6], 0
    %18 = vsyncpa [#allocation9], 0
    %19 = vsyncpa [#allocation4], 0
    %s20 = scalar_lea.sflag [#allocation4], 1
    %21 = vsyncpa %s20, 0
    loop: start=0, step=1, limit=4
    $region2: #{tpu_custom_call.1} parent=1 // loop_pre_header
      _
    $region3: #{tpu_custom_call.1} parent=1 // loop_header
      %s23 = sphi 0, %s27
      %p24 = scmp.ge.s32.totalorder %s23, 4
      %s33 = sphi 0, %s35
      %s36 = sphi 0, %s33
      %s37 = sphi 0, %s36
      %s53 = sphi 0, %s37
      %s57 = sphi 0, %s57
      %s59 = sphi 0, %s57
      %s60 = sphi 0, %s59
      %s74 = sphi 0, %s60
      %s78 = sphi 0, %s78
      %s80 = sphi 0, %s78
      %s81 = sphi 0, %s80
      %s95 = sphi 0, %s81
      %s99 = sphi 0, %s99
      %s101 = sphi 0, %s99
      %s102 = sphi 0, %s101
      %s116 = sphi 0, %s102
      %s120 = sphi 0, %s120
      %s122 = sphi 0, %s120
      %s123 = sphi 0, %s122
      %s137 = sphi 0, %s123
      %s141 = sphi 0, %s141
      %s143 = sphi 0, %s141
      %s144 = sphi 0, %s143
      %s158 = sphi 0, %s144
      %s162 = sphi 0, %s162
      %s164 = sphi 0, %s162
      %s165 = sphi 0, %s164
      %s179 = sphi 0, %s165
      %s183 = sphi 0, %s183
      %s185 = sphi 0, %s183
      %s186 = sphi 0, %s185
      %s200 = sphi 0, %s186
      %s204 = sphi 0, %s204
      %s206 = sphi 0, %s204
      %s207 = sphi 0, %s206
      %s221 = sphi 0, %s207
      %s227 = sphi 0, %s229
      %s230 = sphi 0, %s227
      %s231 = sphi 0, %s230
      %s247 = sphi 0, %s231
    $region4: #{tpu_custom_call.1} parent=1 // loop_header_branch
      %26 = sbr.rel (%p24) target = $region8
    $region5: #{tpu_custom_call.1} parent=1 // loop_body
      %s28 = ssub.s32 %s23, 1
      %s29 = ssub.s32 %s23, 2
      %s30 = sadd.s32 %s23, 1
      %s31 = ssub.s32 %s23, %s30
      %p32 = scmp.eq.s32.totalorder %s31, 0
      %s34 = sadd.s32 %s33, 1
      %s35 = scalar_select %p32, %s33, %s34
      %p38 = pneg %p32
      %p39 = scmp.eq.s32.totalorder %s23, 1
      %p40 = por %p38, %p39
      %p41 = scmp.ne.s32.totalorder %s33, %s36
      %p42 = scmp.eq.s32.totalorder %s23, 0
      %p43 = por %p41, %p42
      %p44 = scmp.ne.s32.totalorder %s33, %s36
      %p45 = scmp.eq.s32.totalorder %s28, 1
      %p46 = por %p44, %p45
      %p47 = scmp.ne.s32.totalorder %s36, %s37
      %p48 = scmp.eq.s32.totalorder %s28, 0
      %p49 = por %p47, %p48
      %p50 = scmp.ne.s32.totalorder %s36, %s37
      %p51 = scmp.eq.s32.totalorder %s29, 1
      %p52 = por %p50, %p51
      %p54 = scmp.ne.s32.totalorder %s37, %s53
      %p55 = scmp.eq.s32.totalorder %s29, 0
      %p56 = por %p54, %p55
      %s58 = sadd.s32 %s57, 1
      %p61 = scmp.eq.s32.totalorder %s23, 1
      %p62 = scmp.ne.s32.totalorder %s57, %s59
      %p63 = scmp.eq.s32.totalorder %s23, 0
      %p64 = por %p62, %p63
      %p65 = scmp.ne.s32.totalorder %s57, %s59
      %p66 = scmp.eq.s32.totalorder %s28, 1
      %p67 = por %p65, %p66
      %p68 = scmp.ne.s32.totalorder %s59, %s60
      %p69 = scmp.eq.s32.totalorder %s28, 0
      %p70 = por %p68, %p69
      %p71 = scmp.ne.s32.totalorder %s59, %s60
      %p72 = scmp.eq.s32.totalorder %s29, 1
      %p73 = por %p71, %p72
      %p75 = scmp.ne.s32.totalorder %s60, %s74
      %p76 = scmp.eq.s32.totalorder %s29, 0
      %p77 = por %p75, %p76
      %s79 = sadd.s32 %s78, 1
      %p82 = scmp.eq.s32.totalorder %s23, 1
      %p83 = scmp.ne.s32.totalorder %s78, %s80
      %p84 = scmp.eq.s32.totalorder %s23, 0
      %p85 = por %p83, %p84
      %p86 = scmp.ne.s32.totalorder %s78, %s80
      %p87 = scmp.eq.s32.totalorder %s28, 1
      %p88 = por %p86, %p87
      %p89 = scmp.ne.s32.totalorder %s80, %s81
      %p90 = scmp.eq.s32.totalorder %s28, 0
      %p91 = por %p89, %p90
      %p92 = scmp.ne.s32.totalorder %s80, %s81
      %p93 = scmp.eq.s32.totalorder %s29, 1
      %p94 = por %p92, %p93
      %p96 = scmp.ne.s32.totalorder %s81, %s95
      %p97 = scmp.eq.s32.totalorder %s29, 0
      %p98 = por %p96, %p97
      %s100 = sadd.s32 %s99, 1
      %p103 = scmp.eq.s32.totalorder %s23, 1
      %p104 = scmp.ne.s32.totalorder %s99, %s101
      %p105 = scmp.eq.s32.totalorder %s23, 0
      %p106 = por %p104, %p105
      %p107 = scmp.ne.s32.totalorder %s99, %s101
      %p108 = scmp.eq.s32.totalorder %s28, 1
      %p109 = por %p107, %p108
      %p110 = scmp.ne.s32.totalorder %s101, %s102
      %p111 = scmp.eq.s32.totalorder %s28, 0
      %p112 = por %p110, %p111
      %p113 = scmp.ne.s32.totalorder %s101, %s102
      %p114 = scmp.eq.s32.totalorder %s29, 1
      %p115 = por %p113, %p114
      %p117 = scmp.ne.s32.totalorder %s102, %s116
      %p118 = scmp.eq.s32.totalorder %s29, 0
      %p119 = por %p117, %p118
      %s121 = sadd.s32 %s120, 1
      %p124 = scmp.eq.s32.totalorder %s23, 1
      %p125 = scmp.ne.s32.totalorder %s120, %s122
      %p126 = scmp.eq.s32.totalorder %s23, 0
      %p127 = por %p125, %p126
      %p128 = scmp.ne.s32.totalorder %s120, %s122
      %p129 = scmp.eq.s32.totalorder %s28, 1
      %p130 = por %p128, %p129
      %p131 = scmp.ne.s32.totalorder %s122, %s123
      %p132 = scmp.eq.s32.totalorder %s28, 0
      %p133 = por %p131, %p132
      %p134 = scmp.ne.s32.totalorder %s122, %s123
      %p135 = scmp.eq.s32.totalorder %s29, 1
      %p136 = por %p134, %p135
      %p138 = scmp.ne.s32.totalorder %s123, %s137
      %p139 = scmp.eq.s32.totalorder %s29, 0
      %p140 = por %p138, %p139
      %s142 = sadd.s32 %s141, 1
      %p145 = scmp.eq.s32.totalorder %s23, 1
      %p146 = scmp.ne.s32.totalorder %s141, %s143
      %p147 = scmp.eq.s32.totalorder %s23, 0
      %p148 = por %p146, %p147
      %p149 = scmp.ne.s32.totalorder %s141, %s143
      %p150 = scmp.eq.s32.totalorder %s28, 1
      %p151 = por %p149, %p150
      %p152 = scmp.ne.s32.totalorder %s143, %s144
      %p153 = scmp.eq.s32.totalorder %s28, 0
      %p154 = por %p152, %p153
      %p155 = scmp.ne.s32.totalorder %s143, %s144
      %p156 = scmp.eq.s32.totalorder %s29, 1
      %p157 = por %p155, %p156
      %p159 = scmp.ne.s32.totalorder %s144, %s158
      %p160 = scmp.eq.s32.totalorder %s29, 0
      %p161 = por %p159, %p160
      %s163 = sadd.s32 %s162, 1
      %p166 = scmp.eq.s32.totalorder %s23, 1
      %p167 = scmp.ne.s32.totalorder %s162, %s164
      %p168 = scmp.eq.s32.totalorder %s23, 0
      %p169 = por %p167, %p168
      %p170 = scmp.ne.s32.totalorder %s162, %s164
      %p171 = scmp.eq.s32.totalorder %s28, 1
      %p172 = por %p170, %p171
      %p173 = scmp.ne.s32.totalorder %s164, %s165
      %p174 = scmp.eq.s32.totalorder %s28, 0
      %p175 = por %p173, %p174
      %p176 = scmp.ne.s32.totalorder %s164, %s165
      %p177 = scmp.eq.s32.totalorder %s29, 1
      %p178 = por %p176, %p177
      %p180 = scmp.ne.s32.totalorder %s165, %s179
      %p181 = scmp.eq.s32.totalorder %s29, 0
      %p182 = por %p180, %p181
      %s184 = sadd.s32 %s183, 1
      %p187 = scmp.eq.s32.totalorder %s23, 1
      %p188 = scmp.ne.s32.totalorder %s183, %s185
      %p189 = scmp.eq.s32.totalorder %s23, 0
      %p190 = por %p188, %p189
      %p191 = scmp.ne.s32.totalorder %s183, %s185
      %p192 = scmp.eq.s32.totalorder %s28, 1
      %p193 = por %p191, %p192
      %p194 = scmp.ne.s32.totalorder %s185, %s186
      %p195 = scmp.eq.s32.totalorder %s28, 0
      %p196 = por %p194, %p195
      %p197 = scmp.ne.s32.totalorder %s185, %s186
      %p198 = scmp.eq.s32.totalorder %s29, 1
      %p199 = por %p197, %p198
      %p201 = scmp.ne.s32.totalorder %s186, %s200
      %p202 = scmp.eq.s32.totalorder %s29, 0
      %p203 = por %p201, %p202
      %s205 = sadd.s32 %s204, 1
      %p208 = scmp.eq.s32.totalorder %s23, 1
      %p209 = scmp.ne.s32.totalorder %s204, %s206
      %p210 = scmp.eq.s32.totalorder %s23, 0
      %p211 = por %p209, %p210
      %p212 = scmp.ne.s32.totalorder %s204, %s206
      %p213 = scmp.eq.s32.totalorder %s28, 1
      %p214 = por %p212, %p213
      %p215 = scmp.ne.s32.totalorder %s206, %s207
      %p216 = scmp.eq.s32.totalorder %s28, 0
      %p217 = por %p215, %p216
      %p218 = scmp.ne.s32.totalorder %s206, %s207
      %p219 = scmp.eq.s32.totalorder %s29, 1
      %p220 = por %p218, %p219
      %p222 = scmp.ne.s32.totalorder %s207, %s221
      %p223 = scmp.eq.s32.totalorder %s29, 0
      %p224 = por %p222, %p223
      %s225 = ssub.s32 %s23, %s30
      %p226 = scmp.eq.s32.totalorder %s225, 0
      %s228 = sadd.s32 %s227, 1
      %s229 = scalar_select %p226, %s227, %s228
      %p232 = pneg %p226
      %p233 = scmp.eq.s32.totalorder %s23, 1
      %p234 = por %p232, %p233
      %p235 = scmp.ne.s32.totalorder %s227, %s230
      %p236 = scmp.eq.s32.totalorder %s23, 0
      %p237 = por %p235, %p236
      %p238 = scmp.ne.s32.totalorder %s227, %s230
      %p239 = scmp.eq.s32.totalorder %s28, 1
      %p240 = por %p238, %p239
      %p241 = scmp.ne.s32.totalorder %s230, %s231
      %p242 = scmp.eq.s32.totalorder %s28, 0
      %p243 = por %p241, %p242
      %p244 = scmp.ne.s32.totalorder %s230, %s231
      %p245 = scmp.eq.s32.totalorder %s29, 1
      %p246 = por %p244, %p245
      %p248 = scmp.ne.s32.totalorder %s231, %s247
      %p249 = scmp.eq.s32.totalorder %s29, 0
      %p250 = por %p248, %p249
      %p251 = scmp.le.s32.totalorder 1, %s23
      %p252 = scmp.lt.s32.totalorder %s23, 3
      %p253 = pnand %p251, %p252
      %p254 = pneg %p253
      // Predicated region
      $region9: #{tpu_custom_call.1} parent=5 // pred_check
        _
      $region10: #{tpu_custom_call.1} parent=5 // pred_check_branch
        %256 = sbr.rel (%p253) target = $region12
      $region11: #{tpu_custom_call.1} parent=5 // pred_region
        %s257 = ssub.s32 %s23, 1
        // Predicated region
        $region13: #{tpu_custom_call.1} parent=11 // pred_check
          %p258 = pneg %p70
        $region14: #{tpu_custom_call.1} parent=11 // pred_check_branch
          %260 = sbr.rel (%p258) target = $region16
        $region15: #{tpu_custom_call.1} parent=11 // pred_region
          %262 = vsyncadd [#allocation6], 0
          %s263 = sshll.u32 %s1, 4
          %s264 = int_to_ptr.hbm [resolvable:$true] %s263
          %s265 = sshll.u32 [#allocation5], 4
          %s266 = int_to_ptr.vmem [resolvable:$true] %s265
          %271 = dma.hbm_to_vmem [thread:$0]  %s264, 6144, %s266, [#allocation6], 64, 64, 4
        $region16: #{tpu_custom_call.1} parent=11 // pred_fallthru
          _
        // Predicated region
        $region17: #{tpu_custom_call.1} parent=11 // pred_check
          %p272 = pneg %p91
        $region18: #{tpu_custom_call.1} parent=11 // pred_check_branch
          %274 = sbr.rel (%p272) target = $region20
        $region19: #{tpu_custom_call.1} parent=11 // pred_region
          _
        $region20: #{tpu_custom_call.1} parent=11 // pred_fallthru
          _
        // Predicated region
        $region21: #{tpu_custom_call.1} parent=11 // pred_check
          %p275 = pneg %p112
        $region22: #{tpu_custom_call.1} parent=11 // pred_check_branch
          %277 = sbr.rel (%p275) target = $region24
        $region23: #{tpu_custom_call.1} parent=11 // pred_region
          %279 = vsyncadd [#allocation6], 0
          %s280 = sshll.u32 %s3, 4
          %s281 = int_to_ptr.hbm [resolvable:$true] %s280
          %s282 = sshll.u32 [#allocation7], 4
          %s283 = int_to_ptr.vmem [resolvable:$true] %s282
          %288 = dma.hbm_to_vmem [thread:$0]  %s281, 1024, %s283, [#allocation6], 64, 64, 4
        $region24: #{tpu_custom_call.1} parent=11 // pred_fallthru
          _
        // Predicated region
        $region25: #{tpu_custom_call.1} parent=11 // pred_check
          %p289 = pneg %p133
        $region26: #{tpu_custom_call.1} parent=11 // pred_check_branch
          %291 = sbr.rel (%p289) target = $region28
        $region27: #{tpu_custom_call.1} parent=11 // pred_region
          _
        $region28: #{tpu_custom_call.1} parent=11 // pred_fallthru
          _
        // Predicated region
        $region29: #{tpu_custom_call.1} parent=11 // pred_check
          %p292 = pneg %p154
        $region30: #{tpu_custom_call.1} parent=11 // pred_check_branch
          %294 = sbr.rel (%p292) target = $region32
        $region31: #{tpu_custom_call.1} parent=11 // pred_region
          %296 = vsyncadd [#allocation9], 0
          %s297 = sshll.u32 %s5, 4
          %s298 = int_to_ptr.hbm [resolvable:$true] %s297
          %s299 = sshll.u32 [#allocation8], 4
          %s300 = int_to_ptr.vmem [resolvable:$true] %s299
          %305 = dma.hbm_to_vmem [thread:$0]  %s298, 1024, %s300, [#allocation9], 64, 64, 4
        $region32: #{tpu_custom_call.1} parent=11 // pred_fallthru
          _
        // Predicated region
        $region33: #{tpu_custom_call.1} parent=11 // pred_check
          %p306 = pneg %p175
        $region34: #{tpu_custom_call.1} parent=11 // pred_check_branch
          %308 = sbr.rel (%p306) target = $region36
        $region35: #{tpu_custom_call.1} parent=11 // pred_region
          _
        $region36: #{tpu_custom_call.1} parent=11 // pred_fallthru
          _
        // Predicated region
        $region37: #{tpu_custom_call.1} parent=11 // pred_check
          %p309 = pneg %p196
        $region38: #{tpu_custom_call.1} parent=11 // pred_check_branch
          %311 = sbr.rel (%p309) target = $region40
        $region39: #{tpu_custom_call.1} parent=11 // pred_region
          %313 = vsyncadd [#allocation9], 0
          %s314 = sshll.u32 %s7, 4
          %s315 = int_to_ptr.hbm [resolvable:$true] %s314
          %s316 = sshll.u32 [#allocation10], 4
          %s317 = int_to_ptr.vmem [resolvable:$true] %s316
          %322 = dma.hbm_to_vmem [thread:$0]  %s315, 1024, %s317, [#allocation9], 64, 64, 4
        $region40: #{tpu_custom_call.1} parent=11 // pred_fallthru
          _
        // Predicated region
        $region41: #{tpu_custom_call.1} parent=11 // pred_check
          %p323 = pneg %p217
        $region42: #{tpu_custom_call.1} parent=11 // pred_check_branch
          %325 = sbr.rel (%p323) target = $region44
        $region43: #{tpu_custom_call.1} parent=11 // pred_region
          _
        $region44: #{tpu_custom_call.1} parent=11 // pred_fallthru
          _
      $region12: #{tpu_custom_call.1} parent=5 // pred_fallthru
        _
      %p326 = scmp.lt.s32.totalorder %s23, 2
      // Predicated region
      $region45: #{tpu_custom_call.1} parent=5 // pred_check
        %p327 = pneg %p326
      $region46: #{tpu_custom_call.1} parent=5 // pred_check_branch
        %329 = sbr.rel (%p327) target = $region48
      $region47: #{tpu_custom_call.1} parent=5 // pred_region
        // Predicated region
        $region49: #{tpu_custom_call.1} parent=47 // pred_check
          %p330 = pneg %p43
        $region50: #{tpu_custom_call.1} parent=47 // pred_check_branch
          %332 = sbr.rel (%p330) target = $region52
        $region51: #{tpu_custom_call.1} parent=47 // pred_region
          %s333 = sand.u32 %s33, 1
          %s334 = scalar_lea.sflag [#allocation3], %s333
          %s335 = sand.u32 %s33, 1
          %s336 = smul.addr %s335, 768
          %s337 = scalar_lea.vmem [#allocation2], %s336
          %s338 = smul.u32 32, %s23
          %340 = vsyncadd %s334, 0
          %s341 = smul.addr %s338, 6
          %s342 = smul.addr %s341, 4
          %s343 = scalar_lea.hbm %s0, %s342
          %s344 = sshll.u32 %s343, 4
          %s345 = int_to_ptr.hbm [resolvable:$true] %s344
          %s346 = sshll.u32 %s337, 4
          %s347 = int_to_ptr.vmem [resolvable:$true] %s346
          %352 = dma.hbm_to_vmem [thread:$0]  %s345, 12288, %s347, %s334, 384, 384, 24
        $region52: #{tpu_custom_call.1} parent=47 // pred_fallthru
          _
      $region48: #{tpu_custom_call.1} parent=5 // pred_fallthru
        _
      %p353 = scmp.le.s32.totalorder 1, %s23
      %p354 = scmp.lt.s32.totalorder %s23, 3
      %p355 = pnand %p353, %p354
      %p356 = pneg %p355
      // Predicated region
      $region53: #{tpu_custom_call.1} parent=5 // pred_check
        _
      $region54: #{tpu_custom_call.1} parent=5 // pred_check_branch
        %358 = sbr.rel (%p355) target = $region56
      $region55: #{tpu_custom_call.1} parent=5 // pred_region
        %s359 = ssub.s32 %s23, 1
        %s360 = sand.u32 %s36, 1
        %s361 = scalar_lea.sflag [#allocation3], %s360
        %s362 = sand.u32 %s36, 1
        %s363 = smul.addr %s362, 768
        %s364 = scalar_lea.vmem [#allocation2], %s363
        // Predicated region
        $region57: #{tpu_custom_call.1} parent=55 // pred_check
          %p365 = pneg %p49
        $region58: #{tpu_custom_call.1} parent=55 // pred_check_branch
          %367 = sbr.rel (%p365) target = $region60
        $region59: #{tpu_custom_call.1} parent=55 // pred_region
          %369 = dma.done %s361, 12288
        $region60: #{tpu_custom_call.1} parent=55 // pred_fallthru
          _
        // Predicated region
        $region61: #{tpu_custom_call.1} parent=55 // pred_check
          %p370 = pneg %p70
        $region62: #{tpu_custom_call.1} parent=55 // pred_check_branch
          %372 = sbr.rel (%p370) target = $region64
        $region63: #{tpu_custom_call.1} parent=55 // pred_region
          %374 = dma.done [#allocation6], 6144
        $region64: #{tpu_custom_call.1} parent=55 // pred_fallthru
          _
        // Predicated region
        $region65: #{tpu_custom_call.1} parent=55 // pred_check
          %p375 = pneg %p112
        $region66: #{tpu_custom_call.1} parent=55 // pred_check_branch
          %377 = sbr.rel (%p375) target = $region68
        $region67: #{tpu_custom_call.1} parent=55 // pred_region
          %379 = dma.done [#allocation6], 1024
        $region68: #{tpu_custom_call.1} parent=55 // pred_fallthru
          _
        // Predicated region
        $region69: #{tpu_custom_call.1} parent=55 // pred_check
          %p380 = pneg %p154
        $region70: #{tpu_custom_call.1} parent=55 // pred_check_branch
          %382 = sbr.rel (%p380) target = $region72
        $region71: #{tpu_custom_call.1} parent=55 // pred_region
          %384 = dma.done [#allocation9], 1024
        $region72: #{tpu_custom_call.1} parent=55 // pred_fallthru
          _
        // Predicated region
        $region73: #{tpu_custom_call.1} parent=55 // pred_check
          %p385 = pneg %p196
        $region74: #{tpu_custom_call.1} parent=55 // pred_check_branch
          %387 = sbr.rel (%p385) target = $region76
        $region75: #{tpu_custom_call.1} parent=55 // pred_region
          %389 = dma.done [#allocation9], 1024
        $region76: #{tpu_custom_call.1} parent=55 // pred_fallthru
          _
        %s390 = sand.u32 %s36, 1
        %s391 = scalar_lea.sflag [#allocation3], %s390
        %s392 = sand.u32 %s36, 1
        %s393 = smul.addr %s392, 768
        %s394 = scalar_lea.vmem [#allocation2], %s393
        %p395 = pneg %p49
        %p396 = pneg %p46
        %p397 = pneg %p70
        %p398 = pneg %p67
        %p399 = pneg %p91
        %p400 = pneg %p88
        %p401 = pneg %p112
        %p402 = pneg %p109
        %p403 = pneg %p133
        %p404 = pneg %p130
        %p405 = pneg %p154
        %p406 = pneg %p151
        %p407 = pneg %p175
        %p408 = pneg %p172
        %p409 = pneg %p196
        %p410 = pneg %p193
        %p411 = pneg %p217
        %p412 = pneg %p214
        %p413 = pneg %p243
        %p414 = pneg %p240
        %s415 = sand.u32 %s230, 1
        %s416 = scalar_lea.sflag [#allocation4], %s415
        %s417 = sand.u32 %s230, 1
        %s418 = smul.addr %s417, 256
        %s419 = scalar_lea.vmem [#allocation11], %s418
        %s420 = smul.u32 32, %s28
        %s421 = smul.u32 32, %s28
        %v422 = vld [vmem:[%s364] sm:$0xff]
        %v423 = vld [vmem:[%s364 + $0x8] sm:$0xff]
        %v424 = vld [vmem:[%s364 + $0x10] sm:$0xff]
        %v425 = vld [vmem:[%s364 + $0x18] sm:$0xff]
        %v426 = vld [vmem:[%s364 + $0x20] sm:$0xff]
        %v427 = vld [vmem:[%s364 + $0x28] sm:$0xff]
        %v428 = vld [vmem:[%s364 + $0x30] sm:$0xff]
        %v429 = vld [vmem:[%s364 + $0x38] sm:$0xff]
        %v430 = vld [vmem:[%s364 + $0x40] sm:$0xff]
        %v431 = vld [vmem:[%s364 + $0x48] sm:$0xff]
        %v432 = vld [vmem:[%s364 + $0x50] sm:$0xff]
        %v433 = vld [vmem:[%s364 + $0x58] sm:$0xff]
        %v434 = vld [vmem:[%s364 + $0x60] sm:$0xff]
        %v435 = vld [vmem:[%s364 + $0x68] sm:$0xff]
        %v436 = vld [vmem:[%s364 + $0x70] sm:$0xff]
        %v437 = vld [vmem:[%s364 + $0x78] sm:$0xff]
        %v438 = vld [vmem:[%s364 + $0x80] sm:$0xff]
        %v439 = vld [vmem:[%s364 + $0x88] sm:$0xff]
        %v440 = vld [vmem:[%s364 + $0x90] sm:$0xff]
        %v441 = vld [vmem:[%s364 + $0x98] sm:$0xff]
        %v442 = vld [vmem:[%s364 + $0xa0] sm:$0xff]
        %v443 = vld [vmem:[%s364 + $0xa8] sm:$0xff]
        %v444 = vld [vmem:[%s364 + $0xb0] sm:$0xff]
        %v445 = vld [vmem:[%s364 + $0xb8] sm:$0xff]
        %v446 = vld [vmem:[%s364 + $0xc0] sm:$0xff]
        %v447 = vld [vmem:[%s364 + $0xc8] sm:$0xff]
        %v448 = vld [vmem:[%s364 + $0xd0] sm:$0xff]
        %v449 = vld [vmem:[%s364 + $0xd8] sm:$0xff]
        %v450 = vld [vmem:[%s364 + $0xe0] sm:$0xff]
        %v451 = vld [vmem:[%s364 + $0xe8] sm:$0xff]
        %v452 = vld [vmem:[%s364 + $0xf0] sm:$0xff]
        %v453 = vld [vmem:[%s364 + $0xf8] sm:$0xff]
        %v454 = vld [vmem:[%s364 + $0x100] sm:$0xff]
        %v455 = vld [vmem:[%s364 + $0x108] sm:$0xff]
        %v456 = vld [vmem:[%s364 + $0x110] sm:$0xff]
        %v457 = vld [vmem:[%s364 + $0x118] sm:$0xff]
        %v458 = vld [vmem:[%s364 + $0x120] sm:$0xff]
        %v459 = vld [vmem:[%s364 + $0x128] sm:$0xff]
        %v460 = vld [vmem:[%s364 + $0x130] sm:$0xff]
        %v461 = vld [vmem:[%s364 + $0x138] sm:$0xff]
        %v462 = vld [vmem:[%s364 + $0x140] sm:$0xff]
        %v463 = vld [vmem:[%s364 + $0x148] sm:$0xff]
        %v464 = vld [vmem:[%s364 + $0x150] sm:$0xff]
        %v465 = vld [vmem:[%s364 + $0x158] sm:$0xff]
        %v466 = vld [vmem:[%s364 + $0x160] sm:$0xff]
        %v467 = vld [vmem:[%s364 + $0x168] sm:$0xff]
        %v468 = vld [vmem:[%s364 + $0x170] sm:$0xff]
        %v469 = vld [vmem:[%s364 + $0x178] sm:$0xff]
        %v470 = vld [vmem:[%s364 + $0x180] sm:$0xff]
        %v471 = vld [vmem:[%s364 + $0x188] sm:$0xff]
        %v472 = vld [vmem:[%s364 + $0x190] sm:$0xff]
        %v473 = vld [vmem:[%s364 + $0x198] sm:$0xff]
        %v474 = vld [vmem:[%s364 + $0x1a0] sm:$0xff]
        %v475 = vld [vmem:[%s364 + $0x1a8] sm:$0xff]
        %v476 = vld [vmem:[%s364 + $0x1b0] sm:$0xff]
        %v477 = vld [vmem:[%s364 + $0x1b8] sm:$0xff]
        %v478 = vld [vmem:[%s364 + $0x1c0] sm:$0xff]
        %v479 = vld [vmem:[%s364 + $0x1c8] sm:$0xff]
        %v480 = vld [vmem:[%s364 + $0x1d0] sm:$0xff]
        %v481 = vld [vmem:[%s364 + $0x1d8] sm:$0xff]
        %v482 = vld [vmem:[%s364 + $0x1e0] sm:$0xff]
        %v483 = vld [vmem:[%s364 + $0x1e8] sm:$0xff]
        %v484 = vld [vmem:[%s364 + $0x1f0] sm:$0xff]
        %v485 = vld [vmem:[%s364 + $0x1f8] sm:$0xff]
        %v486 = vld [vmem:[%s364 + $0x200] sm:$0xff]
        %v487 = vld [vmem:[%s364 + $0x208] sm:$0xff]
        %v488 = vld [vmem:[%s364 + $0x210] sm:$0xff]
        %v489 = vld [vmem:[%s364 + $0x218] sm:$0xff]
        %v490 = vld [vmem:[%s364 + $0x220] sm:$0xff]
        %v491 = vld [vmem:[%s364 + $0x228] sm:$0xff]
        %v492 = vld [vmem:[%s364 + $0x230] sm:$0xff]
        %v493 = vld [vmem:[%s364 + $0x238] sm:$0xff]
        %v494 = vld [vmem:[%s364 + $0x240] sm:$0xff]
        %v495 = vld [vmem:[%s364 + $0x248] sm:$0xff]
        %v496 = vld [vmem:[%s364 + $0x250] sm:$0xff]
        %v497 = vld [vmem:[%s364 + $0x258] sm:$0xff]
        %v498 = vld [vmem:[%s364 + $0x260] sm:$0xff]
        %v499 = vld [vmem:[%s364 + $0x268] sm:$0xff]
        %v500 = vld [vmem:[%s364 + $0x270] sm:$0xff]
        %v501 = vld [vmem:[%s364 + $0x278] sm:$0xff]
        %v502 = vld [vmem:[%s364 + $0x280] sm:$0xff]
        %v503 = vld [vmem:[%s364 + $0x288] sm:$0xff]
        %v504 = vld [vmem:[%s364 + $0x290] sm:$0xff]
        %v505 = vld [vmem:[%s364 + $0x298] sm:$0xff]
        %v506 = vld [vmem:[%s364 + $0x2a0] sm:$0xff]
        %v507 = vld [vmem:[%s364 + $0x2a8] sm:$0xff]
        %v508 = vld [vmem:[%s364 + $0x2b0] sm:$0xff]
        %v509 = vld [vmem:[%s364 + $0x2b8] sm:$0xff]
        %v510 = vld [vmem:[%s364 + $0x2c0] sm:$0xff]
        %v511 = vld [vmem:[%s364 + $0x2c8] sm:$0xff]
        %v512 = vld [vmem:[%s364 + $0x2d0] sm:$0xff]
        %v513 = vld [vmem:[%s364 + $0x2d8] sm:$0xff]
        %v514 = vld [vmem:[%s364 + $0x2e0] sm:$0xff]
        %v515 = vld [vmem:[%s364 + $0x2e8] sm:$0xff]
        %v516 = vld [vmem:[%s364 + $0x2f0] sm:$0xff]
        %v517 = vld [vmem:[%s364 + $0x2f8] sm:$0xff]
        %v518 = vunpack.c.l.bf16 %v422
        %v519 = vunpack.c.h.bf16 %v422
        %v520 = vunpack.c.l.bf16 %v423
        %v521 = vunpack.c.h.bf16 %v423
        %v522 = vunpack.c.l.bf16 %v424
        %v523 = vunpack.c.h.bf16 %v424
        %v524 = vunpack.c.l.bf16 %v425
        %v525 = vunpack.c.h.bf16 %v425
        %v526 = vunpack.c.l.bf16 %v426
        %v527 = vunpack.c.h.bf16 %v426
        %v528 = vunpack.c.l.bf16 %v427
        %v529 = vunpack.c.h.bf16 %v427
        %v530 = vunpack.c.l.bf16 %v428
        %v531 = vunpack.c.h.bf16 %v428
        %v532 = vunpack.c.l.bf16 %v429
        %v533 = vunpack.c.h.bf16 %v429
        %v534 = vunpack.c.l.bf16 %v430
        %v535 = vunpack.c.h.bf16 %v430
        %v536 = vunpack.c.l.bf16 %v431
        %v537 = vunpack.c.h.bf16 %v431
        %v538 = vunpack.c.l.bf16 %v432
        %v539 = vunpack.c.h.bf16 %v432
        %v540 = vunpack.c.l.bf16 %v433
        %v541 = vunpack.c.h.bf16 %v433
        %v542 = vunpack.c.l.bf16 %v434
        %v543 = vunpack.c.h.bf16 %v434
        %v544 = vunpack.c.l.bf16 %v435
        %v545 = vunpack.c.h.bf16 %v435
        %v546 = vunpack.c.l.bf16 %v436
        %v547 = vunpack.c.h.bf16 %v436
        %v548 = vunpack.c.l.bf16 %v437
        %v549 = vunpack.c.h.bf16 %v437
        %v550 = vunpack.c.l.bf16 %v438
        %v551 = vunpack.c.h.bf16 %v438
        %v552 = vunpack.c.l.bf16 %v439
        %v553 = vunpack.c.h.bf16 %v439
        %v554 = vunpack.c.l.bf16 %v440
        %v555 = vunpack.c.h.bf16 %v440
        %v556 = vunpack.c.l.bf16 %v441
        %v557 = vunpack.c.h.bf16 %v441
        %v558 = vunpack.c.l.bf16 %v442
        %v559 = vunpack.c.h.bf16 %v442
        %v560 = vunpack.c.l.bf16 %v443
        %v561 = vunpack.c.h.bf16 %v443
        %v562 = vunpack.c.l.bf16 %v444
        %v563 = vunpack.c.h.bf16 %v444
        %v564 = vunpack.c.l.bf16 %v445
        %v565 = vunpack.c.h.bf16 %v445
        %v566 = vunpack.c.l.bf16 %v446
        %v567 = vunpack.c.h.bf16 %v446
        %v568 = vunpack.c.l.bf16 %v447
        %v569 = vunpack.c.h.bf16 %v447
        %v570 = vunpack.c.l.bf16 %v448
        %v571 = vunpack.c.h.bf16 %v448
        %v572 = vunpack.c.l.bf16 %v449
        %v573 = vunpack.c.h.bf16 %v449
        %v574 = vunpack.c.l.bf16 %v450
        %v575 = vunpack.c.h.bf16 %v450
        %v576 = vunpack.c.l.bf16 %v451
        %v577 = vunpack.c.h.bf16 %v451
        %v578 = vunpack.c.l.bf16 %v452
        %v579 = vunpack.c.h.bf16 %v452
        %v580 = vunpack.c.l.bf16 %v453
        %v581 = vunpack.c.h.bf16 %v453
        %v582 = vunpack.c.l.bf16 %v454
        %v583 = vunpack.c.h.bf16 %v454
        %v584 = vunpack.c.l.bf16 %v455
        %v585 = vunpack.c.h.bf16 %v455
        %v586 = vunpack.c.l.bf16 %v456
        %v587 = vunpack.c.h.bf16 %v456
        %v588 = vunpack.c.l.bf16 %v457
        %v589 = vunpack.c.h.bf16 %v457
        %v590 = vunpack.c.l.bf16 %v458
        %v591 = vunpack.c.h.bf16 %v458
        %v592 = vunpack.c.l.bf16 %v459
        %v593 = vunpack.c.h.bf16 %v459
        %v594 = vunpack.c.l.bf16 %v460
        %v595 = vunpack.c.h.bf16 %v460
        %v596 = vunpack.c.l.bf16 %v461
        %v597 = vunpack.c.h.bf16 %v461
        %v598 = vunpack.c.l.bf16 %v462
        %v599 = vunpack.c.h.bf16 %v462
        %v600 = vunpack.c.l.bf16 %v463
        %v601 = vunpack.c.h.bf16 %v463
        %v602 = vunpack.c.l.bf16 %v464
        %v603 = vunpack.c.h.bf16 %v464
        %v604 = vunpack.c.l.bf16 %v465
        %v605 = vunpack.c.h.bf16 %v465
        %v606 = vunpack.c.l.bf16 %v466
        %v607 = vunpack.c.h.bf16 %v466
        %v608 = vunpack.c.l.bf16 %v467
        %v609 = vunpack.c.h.bf16 %v467
        %v610 = vunpack.c.l.bf16 %v468
        %v611 = vunpack.c.h.bf16 %v468
        %v612 = vunpack.c.l.bf16 %v469
        %v613 = vunpack.c.h.bf16 %v469
        %v614 = vunpack.c.l.bf16 %v470
        %v615 = vunpack.c.h.bf16 %v470
        %v616 = vunpack.c.l.bf16 %v471
        %v617 = vunpack.c.h.bf16 %v471
        %v618 = vunpack.c.l.bf16 %v472
        %v619 = vunpack.c.h.bf16 %v472
        %v620 = vunpack.c.l.bf16 %v473
        %v621 = vunpack.c.h.bf16 %v473
        %v622 = vunpack.c.l.bf16 %v474
        %v623 = vunpack.c.h.bf16 %v474
        %v624 = vunpack.c.l.bf16 %v475
        %v625 = vunpack.c.h.bf16 %v475
        %v626 = vunpack.c.l.bf16 %v476
        %v627 = vunpack.c.h.bf16 %v476
        %v628 = vunpack.c.l.bf16 %v477
        %v629 = vunpack.c.h.bf16 %v477
        %v630 = vunpack.c.l.bf16 %v478
        %v631 = vunpack.c.h.bf16 %v478
        %v632 = vunpack.c.l.bf16 %v479
        %v633 = vunpack.c.h.bf16 %v479
        %v634 = vunpack.c.l.bf16 %v480
        %v635 = vunpack.c.h.bf16 %v480
        %v636 = vunpack.c.l.bf16 %v481
        %v637 = vunpack.c.h.bf16 %v481
        %v638 = vunpack.c.l.bf16 %v482
        %v639 = vunpack.c.h.bf16 %v482
        %v640 = vunpack.c.l.bf16 %v483
        %v641 = vunpack.c.h.bf16 %v483
        %v642 = vunpack.c.l.bf16 %v484
        %v643 = vunpack.c.h.bf16 %v484
        %v644 = vunpack.c.l.bf16 %v485
        %v645 = vunpack.c.h.bf16 %v485
        %v646 = vunpack.c.l.bf16 %v486
        %v647 = vunpack.c.h.bf16 %v486
        %v648 = vunpack.c.l.bf16 %v487
        %v649 = vunpack.c.h.bf16 %v487
        %v650 = vunpack.c.l.bf16 %v488
        %v651 = vunpack.c.h.bf16 %v488
        %v652 = vunpack.c.l.bf16 %v489
        %v653 = vunpack.c.h.bf16 %v489
        %v654 = vunpack.c.l.bf16 %v490
        %v655 = vunpack.c.h.bf16 %v490
        %v656 = vunpack.c.l.bf16 %v491
        %v657 = vunpack.c.h.bf16 %v491
        %v658 = vunpack.c.l.bf16 %v492
        %v659 = vunpack.c.h.bf16 %v492
        %v660 = vunpack.c.l.bf16 %v493
        %v661 = vunpack.c.h.bf16 %v493
        %v662 = vunpack.c.l.bf16 %v494
        %v663 = vunpack.c.h.bf16 %v494
        %v664 = vunpack.c.l.bf16 %v495
        %v665 = vunpack.c.h.bf16 %v495
        %v666 = vunpack.c.l.bf16 %v496
        %v667 = vunpack.c.h.bf16 %v496
        %v668 = vunpack.c.l.bf16 %v497
        %v669 = vunpack.c.h.bf16 %v497
        %v670 = vunpack.c.l.bf16 %v498
        %v671 = vunpack.c.h.bf16 %v498
        %v672 = vunpack.c.l.bf16 %v499
        %v673 = vunpack.c.h.bf16 %v499
        %v674 = vunpack.c.l.bf16 %v500
        %v675 = vunpack.c.h.bf16 %v500
        %v676 = vunpack.c.l.bf16 %v501
        %v677 = vunpack.c.h.bf16 %v501
        %v678 = vunpack.c.l.bf16 %v502
        %v679 = vunpack.c.h.bf16 %v502
        %v680 = vunpack.c.l.bf16 %v503
        %v681 = vunpack.c.h.bf16 %v503
        %v682 = vunpack.c.l.bf16 %v504
        %v683 = vunpack.c.h.bf16 %v504
        %v684 = vunpack.c.l.bf16 %v505
        %v685 = vunpack.c.h.bf16 %v505
        %v686 = vunpack.c.l.bf16 %v506
        %v687 = vunpack.c.h.bf16 %v506
        %v688 = vunpack.c.l.bf16 %v507
        %v689 = vunpack.c.h.bf16 %v507
        %v690 = vunpack.c.l.bf16 %v508
        %v691 = vunpack.c.h.bf16 %v508
        %v692 = vunpack.c.l.bf16 %v509
        %v693 = vunpack.c.h.bf16 %v509
        %v694 = vunpack.c.l.bf16 %v510
        %v695 = vunpack.c.h.bf16 %v510
        %v696 = vunpack.c.l.bf16 %v511
        %v697 = vunpack.c.h.bf16 %v511
        %v698 = vunpack.c.l.bf16 %v512
        %v699 = vunpack.c.h.bf16 %v512
        %v700 = vunpack.c.l.bf16 %v513
        %v701 = vunpack.c.h.bf16 %v513
        %v702 = vunpack.c.l.bf16 %v514
        %v703 = vunpack.c.h.bf16 %v514
        %v704 = vunpack.c.l.bf16 %v515
        %v705 = vunpack.c.h.bf16 %v515
        %v706 = vunpack.c.l.bf16 %v516
        %v707 = vunpack.c.h.bf16 %v516
        %v708 = vunpack.c.l.bf16 %v517
        %v709 = vunpack.c.h.bf16 %v517
        %v710 = vmax.f32 %v518, -1.0
        %v711 = vmax.f32 %v519, -1.0
        %v712 = vmax.f32 %v520, -1.0
        %v713 = vmax.f32 %v521, -1.0
        %v714 = vmax.f32 %v522, -1.0
        %v715 = vmax.f32 %v523, -1.0
        %v716 = vmax.f32 %v524, -1.0
        %v717 = vmax.f32 %v525, -1.0
        %v718 = vmax.f32 %v526, -1.0
        %v719 = vmax.f32 %v527, -1.0
        %v720 = vmax.f32 %v528, -1.0
        %v721 = vmax.f32 %v529, -1.0
        %v722 = vmax.f32 %v530, -1.0
        %v723 = vmax.f32 %v531, -1.0
        %v724 = vmax.f32 %v532, -1.0
        %v725 = vmax.f32 %v533, -1.0
        %v726 = vmax.f32 %v534, -1.0
        %v727 = vmax.f32 %v535, -1.0
        %v728 = vmax.f32 %v536, -1.0
        %v729 = vmax.f32 %v537, -1.0
        %v730 = vmax.f32 %v538, -1.0
        %v731 = vmax.f32 %v539, -1.0
        %v732 = vmax.f32 %v540, -1.0
        %v733 = vmax.f32 %v541, -1.0
        %v734 = vmax.f32 %v542, -1.0
        %v735 = vmax.f32 %v543, -1.0
        %v736 = vmax.f32 %v544, -1.0
        %v737 = vmax.f32 %v545, -1.0
        %v738 = vmax.f32 %v546, -1.0
        %v739 = vmax.f32 %v547, -1.0
        %v740 = vmax.f32 %v548, -1.0
        %v741 = vmax.f32 %v549, -1.0
        %v742 = vmax.f32 %v550, -1.0
        %v743 = vmax.f32 %v551, -1.0
        %v744 = vmax.f32 %v552, -1.0
        %v745 = vmax.f32 %v553, -1.0
        %v746 = vmax.f32 %v554, -1.0
        %v747 = vmax.f32 %v555, -1.0
        %v748 = vmax.f32 %v556, -1.0
        %v749 = vmax.f32 %v557, -1.0
        %v750 = vmax.f32 %v558, -1.0
        %v751 = vmax.f32 %v559, -1.0
        %v752 = vmax.f32 %v560, -1.0
        %v753 = vmax.f32 %v561, -1.0
        %v754 = vmax.f32 %v562, -1.0
        %v755 = vmax.f32 %v563, -1.0
        %v756 = vmax.f32 %v564, -1.0
        %v757 = vmax.f32 %v565, -1.0
        %v758 = vmax.f32 %v566, -1.0
        %v759 = vmax.f32 %v567, -1.0
        %v760 = vmax.f32 %v568, -1.0
        %v761 = vmax.f32 %v569, -1.0
        %v762 = vmax.f32 %v570, -1.0
        %v763 = vmax.f32 %v571, -1.0
        %v764 = vmax.f32 %v572, -1.0
        %v765 = vmax.f32 %v573, -1.0
        %v766 = vmax.f32 %v574, -1.0
        %v767 = vmax.f32 %v575, -1.0
        %v768 = vmax.f32 %v576, -1.0
        %v769 = vmax.f32 %v577, -1.0
        %v770 = vmax.f32 %v578, -1.0
        %v771 = vmax.f32 %v579, -1.0
        %v772 = vmax.f32 %v580, -1.0
        %v773 = vmax.f32 %v581, -1.0
        %v774 = vmax.f32 %v582, -1.0
        %v775 = vmax.f32 %v583, -1.0
        %v776 = vmax.f32 %v584, -1.0
        %v777 = vmax.f32 %v585, -1.0
        %v778 = vmax.f32 %v586, -1.0
        %v779 = vmax.f32 %v587, -1.0
        %v780 = vmax.f32 %v588, -1.0
        %v781 = vmax.f32 %v589, -1.0
        %v782 = vmax.f32 %v590, -1.0
        %v783 = vmax.f32 %v591, -1.0
        %v784 = vmax.f32 %v592, -1.0
        %v785 = vmax.f32 %v593, -1.0
        %v786 = vmax.f32 %v594, -1.0
        %v787 = vmax.f32 %v595, -1.0
        %v788 = vmax.f32 %v596, -1.0
        %v789 = vmax.f32 %v597, -1.0
        %v790 = vmax.f32 %v598, -1.0
        %v791 = vmax.f32 %v599, -1.0
        %v792 = vmax.f32 %v600, -1.0
        %v793 = vmax.f32 %v601, -1.0
        %v794 = vmax.f32 %v602, -1.0
        %v795 = vmax.f32 %v603, -1.0
        %v796 = vmax.f32 %v604, -1.0
        %v797 = vmax.f32 %v605, -1.0
        %v798 = vmax.f32 %v606, -1.0
        %v799 = vmax.f32 %v607, -1.0
        %v800 = vmax.f32 %v608, -1.0
        %v801 = vmax.f32 %v609, -1.0
        %v802 = vmax.f32 %v610, -1.0
        %v803 = vmax.f32 %v611, -1.0
        %v804 = vmax.f32 %v612, -1.0
        %v805 = vmax.f32 %v613, -1.0
        %v806 = vmax.f32 %v614, -1.0
        %v807 = vmax.f32 %v615, -1.0
        %v808 = vmax.f32 %v616, -1.0
        %v809 = vmax.f32 %v617, -1.0
        %v810 = vmax.f32 %v618, -1.0
        %v811 = vmax.f32 %v619, -1.0
        %v812 = vmax.f32 %v620, -1.0
        %v813 = vmax.f32 %v621, -1.0
        %v814 = vmax.f32 %v622, -1.0
        %v815 = vmax.f32 %v623, -1.0
        %v816 = vmax.f32 %v624, -1.0
        %v817 = vmax.f32 %v625, -1.0
        %v818 = vmax.f32 %v626, -1.0
        %v819 = vmax.f32 %v627, -1.0
        %v820 = vmax.f32 %v628, -1.0
        %v821 = vmax.f32 %v629, -1.0
        %v822 = vmax.f32 %v630, -1.0
        %v823 = vmax.f32 %v631, -1.0
        %v824 = vmax.f32 %v632, -1.0
        %v825 = vmax.f32 %v633, -1.0
        %v826 = vmax.f32 %v634, -1.0
        %v827 = vmax.f32 %v635, -1.0
        %v828 = vmax.f32 %v636, -1.0
        %v829 = vmax.f32 %v637, -1.0
        %v830 = vmax.f32 %v638, -1.0
        %v831 = vmax.f32 %v639, -1.0
        %v832 = vmax.f32 %v640, -1.0
        %v833 = vmax.f32 %v641, -1.0
        %v834 = vmax.f32 %v642, -1.0
        %v835 = vmax.f32 %v643, -1.0
        %v836 = vmax.f32 %v644, -1.0
        %v837 = vmax.f32 %v645, -1.0
        %v838 = vmax.f32 %v646, -1.0
        %v839 = vmax.f32 %v647, -1.0
        %v840 = vmax.f32 %v648, -1.0
        %v841 = vmax.f32 %v649, -1.0
        %v842 = vmax.f32 %v650, -1.0
        %v843 = vmax.f32 %v651, -1.0
        %v844 = vmax.f32 %v652, -1.0
        %v845 = vmax.f32 %v653, -1.0
        %v846 = vmax.f32 %v654, -1.0
        %v847 = vmax.f32 %v655, -1.0
        %v848 = vmax.f32 %v656, -1.0
        %v849 = vmax.f32 %v657, -1.0
        %v850 = vmax.f32 %v658, -1.0
        %v851 = vmax.f32 %v659, -1.0
        %v852 = vmax.f32 %v660, -1.0
        %v853 = vmax.f32 %v661, -1.0
        %v854 = vmax.f32 %v662, -1.0
        %v855 = vmax.f32 %v663, -1.0
        %v856 = vmax.f32 %v664, -1.0
        %v857 = vmax.f32 %v665, -1.0
        %v858 = vmax.f32 %v666, -1.0
        %v859 = vmax.f32 %v667, -1.0
        %v860 = vmax.f32 %v668, -1.0
        %v861 = vmax.f32 %v669, -1.0
        %v862 = vmax.f32 %v670, -1.0
        %v863 = vmax.f32 %v671, -1.0
        %v864 = vmax.f32 %v672, -1.0
        %v865 = vmax.f32 %v673, -1.0
        %v866 = vmax.f32 %v674, -1.0
        %v867 = vmax.f32 %v675, -1.0
        %v868 = vmax.f32 %v676, -1.0
        %v869 = vmax.f32 %v677, -1.0
        %v870 = vmax.f32 %v678, -1.0
        %v871 = vmax.f32 %v679, -1.0
        %v872 = vmax.f32 %v680, -1.0
        %v873 = vmax.f32 %v681, -1.0
        %v874 = vmax.f32 %v682, -1.0
        %v875 = vmax.f32 %v683, -1.0
        %v876 = vmax.f32 %v684, -1.0
        %v877 = vmax.f32 %v685, -1.0
        %v878 = vmax.f32 %v686, -1.0
        %v879 = vmax.f32 %v687, -1.0
        %v880 = vmax.f32 %v688, -1.0
        %v881 = vmax.f32 %v689, -1.0
        %v882 = vmax.f32 %v690, -1.0
        %v883 = vmax.f32 %v691, -1.0
        %v884 = vmax.f32 %v692, -1.0
        %v885 = vmax.f32 %v693, -1.0
        %v886 = vmax.f32 %v694, -1.0
        %v887 = vmax.f32 %v695, -1.0
        %v888 = vmax.f32 %v696, -1.0
        %v889 = vmax.f32 %v697, -1.0
        %v890 = vmax.f32 %v698, -1.0
        %v891 = vmax.f32 %v699, -1.0
        %v892 = vmax.f32 %v700, -1.0
        %v893 = vmax.f32 %v701, -1.0
        %v894 = vmax.f32 %v702, -1.0
        %v895 = vmax.f32 %v703, -1.0
        %v896 = vmax.f32 %v704, -1.0
        %v897 = vmax.f32 %v705, -1.0
        %v898 = vmax.f32 %v706, -1.0
        %v899 = vmax.f32 %v707, -1.0
        %v900 = vmax.f32 %v708, -1.0
        %v901 = vmax.f32 %v709, -1.0
        %v902 = vmin.f32 %v710, 1.0
        %v903 = vmin.f32 %v711, 1.0
        %v904 = vmin.f32 %v712, 1.0
        %v905 = vmin.f32 %v713, 1.0
        %v906 = vmin.f32 %v714, 1.0
        %v907 = vmin.f32 %v715, 1.0
        %v908 = vmin.f32 %v716, 1.0
        %v909 = vmin.f32 %v717, 1.0
        %v910 = vmin.f32 %v718, 1.0
        %v911 = vmin.f32 %v719, 1.0
        %v912 = vmin.f32 %v720, 1.0
        %v913 = vmin.f32 %v721, 1.0
        %v914 = vmin.f32 %v722, 1.0
        %v915 = vmin.f32 %v723, 1.0
        %v916 = vmin.f32 %v724, 1.0
        %v917 = vmin.f32 %v725, 1.0
        %v918 = vmin.f32 %v726, 1.0
        %v919 = vmin.f32 %v727, 1.0
        %v920 = vmin.f32 %v728, 1.0
        %v921 = vmin.f32 %v729, 1.0
        %v922 = vmin.f32 %v730, 1.0
        %v923 = vmin.f32 %v731, 1.0
        %v924 = vmin.f32 %v732, 1.0
        %v925 = vmin.f32 %v733, 1.0
        %v926 = vmin.f32 %v734, 1.0
        %v927 = vmin.f32 %v735, 1.0
        %v928 = vmin.f32 %v736, 1.0
        %v929 = vmin.f32 %v737, 1.0
        %v930 = vmin.f32 %v738, 1.0
        %v931 = vmin.f32 %v739, 1.0
        %v932 = vmin.f32 %v740, 1.0
        %v933 = vmin.f32 %v741, 1.0
        %v934 = vmin.f32 %v742, 1.0
        %v935 = vmin.f32 %v743, 1.0
        %v936 = vmin.f32 %v744, 1.0
        %v937 = vmin.f32 %v745, 1.0
        %v938 = vmin.f32 %v746, 1.0
        %v939 = vmin.f32 %v747, 1.0
        %v940 = vmin.f32 %v748, 1.0
        %v941 = vmin.f32 %v749, 1.0
        %v942 = vmin.f32 %v750, 1.0
        %v943 = vmin.f32 %v751, 1.0
        %v944 = vmin.f32 %v752, 1.0
        %v945 = vmin.f32 %v753, 1.0
        %v946 = vmin.f32 %v754, 1.0
        %v947 = vmin.f32 %v755, 1.0
        %v948 = vmin.f32 %v756, 1.0
        %v949 = vmin.f32 %v757, 1.0
        %v950 = vmin.f32 %v758, 1.0
        %v951 = vmin.f32 %v759, 1.0
        %v952 = vmin.f32 %v760, 1.0
        %v953 = vmin.f32 %v761, 1.0
        %v954 = vmin.f32 %v762, 1.0
        %v955 = vmin.f32 %v763, 1.0
        %v956 = vmin.f32 %v764, 1.0
        %v957 = vmin.f32 %v765, 1.0
        %v958 = vmin.f32 %v766, 1.0
        %v959 = vmin.f32 %v767, 1.0
        %v960 = vmin.f32 %v768, 1.0
        %v961 = vmin.f32 %v769, 1.0
        %v962 = vmin.f32 %v770, 1.0
        %v963 = vmin.f32 %v771, 1.0
        %v964 = vmin.f32 %v772, 1.0
        %v965 = vmin.f32 %v773, 1.0
        %v966 = vmin.f32 %v774, 1.0
        %v967 = vmin.f32 %v775, 1.0
        %v968 = vmin.f32 %v776, 1.0
        %v969 = vmin.f32 %v777, 1.0
        %v970 = vmin.f32 %v778, 1.0
        %v971 = vmin.f32 %v779, 1.0
        %v972 = vmin.f32 %v780, 1.0
        %v973 = vmin.f32 %v781, 1.0
        %v974 = vmin.f32 %v782, 1.0
        %v975 = vmin.f32 %v783, 1.0
        %v976 = vmin.f32 %v784, 1.0
        %v977 = vmin.f32 %v785, 1.0
        %v978 = vmin.f32 %v786, 1.0
        %v979 = vmin.f32 %v787, 1.0
        %v980 = vmin.f32 %v788, 1.0
        %v981 = vmin.f32 %v789, 1.0
        %v982 = vmin.f32 %v790, 1.0
        %v983 = vmin.f32 %v791, 1.0
        %v984 = vmin.f32 %v792, 1.0
        %v985 = vmin.f32 %v793, 1.0
        %v986 = vmin.f32 %v794, 1.0
        %v987 = vmin.f32 %v795, 1.0
        %v988 = vmin.f32 %v796, 1.0
        %v989 = vmin.f32 %v797, 1.0
        %v990 = vmin.f32 %v798, 1.0
        %v991 = vmin.f32 %v799, 1.0
        %v992 = vmin.f32 %v800, 1.0
        %v993 = vmin.f32 %v801, 1.0
        %v994 = vmin.f32 %v802, 1.0
        %v995 = vmin.f32 %v803, 1.0
        %v996 = vmin.f32 %v804, 1.0
        %v997 = vmin.f32 %v805, 1.0
        %v998 = vmin.f32 %v806, 1.0
        %v999 = vmin.f32 %v807, 1.0
        %v1000 = vmin.f32 %v808, 1.0
        %v1001 = vmin.f32 %v809, 1.0
        %v1002 = vmin.f32 %v810, 1.0
        %v1003 = vmin.f32 %v811, 1.0
        %v1004 = vmin.f32 %v812, 1.0
        %v1005 = vmin.f32 %v813, 1.0
        %v1006 = vmin.f32 %v814, 1.0
        %v1007 = vmin.f32 %v815, 1.0
        %v1008 = vmin.f32 %v816, 1.0
        %v1009 = vmin.f32 %v817, 1.0
        %v1010 = vmin.f32 %v818, 1.0
        %v1011 = vmin.f32 %v819, 1.0
        %v1012 = vmin.f32 %v820, 1.0
        %v1013 = vmin.f32 %v821, 1.0
        %v1014 = vmin.f32 %v822, 1.0
        %v1015 = vmin.f32 %v823, 1.0
        %v1016 = vmin.f32 %v824, 1.0
        %v1017 = vmin.f32 %v825, 1.0
        %v1018 = vmin.f32 %v826, 1.0
        %v1019 = vmin.f32 %v827, 1.0
        %v1020 = vmin.f32 %v828, 1.0
        %v1021 = vmin.f32 %v829, 1.0
        %v1022 = vmin.f32 %v830, 1.0
        %v1023 = vmin.f32 %v831, 1.0
        %v1024 = vmin.f32 %v832, 1.0
        %v1025 = vmin.f32 %v833, 1.0
        %v1026 = vmin.f32 %v834, 1.0
        %v1027 = vmin.f32 %v835, 1.0
        %v1028 = vmin.f32 %v836, 1.0
        %v1029 = vmin.f32 %v837, 1.0
        %v1030 = vmin.f32 %v838, 1.0
        %v1031 = vmin.f32 %v839, 1.0
        %v1032 = vmin.f32 %v840, 1.0
        %v1033 = vmin.f32 %v841, 1.0
        %v1034 = vmin.f32 %v842, 1.0
        %v1035 = vmin.f32 %v843, 1.0
        %v1036 = vmin.f32 %v844, 1.0
        %v1037 = vmin.f32 %v845, 1.0
        %v1038 = vmin.f32 %v846, 1.0
        %v1039 = vmin.f32 %v847, 1.0
        %v1040 = vmin.f32 %v848, 1.0
        %v1041 = vmin.f32 %v849, 1.0
        %v1042 = vmin.f32 %v850, 1.0
        %v1043 = vmin.f32 %v851, 1.0
        %v1044 = vmin.f32 %v852, 1.0
        %v1045 = vmin.f32 %v853, 1.0
        %v1046 = vmin.f32 %v854, 1.0
        %v1047 = vmin.f32 %v855, 1.0
        %v1048 = vmin.f32 %v856, 1.0
        %v1049 = vmin.f32 %v857, 1.0
        %v1050 = vmin.f32 %v858, 1.0
        %v1051 = vmin.f32 %v859, 1.0
        %v1052 = vmin.f32 %v860, 1.0
        %v1053 = vmin.f32 %v861, 1.0
        %v1054 = vmin.f32 %v862, 1.0
        %v1055 = vmin.f32 %v863, 1.0
        %v1056 = vmin.f32 %v864, 1.0
        %v1057 = vmin.f32 %v865, 1.0
        %v1058 = vmin.f32 %v866, 1.0
        %v1059 = vmin.f32 %v867, 1.0
        %v1060 = vmin.f32 %v868, 1.0
        %v1061 = vmin.f32 %v869, 1.0
        %v1062 = vmin.f32 %v870, 1.0
        %v1063 = vmin.f32 %v871, 1.0
        %v1064 = vmin.f32 %v872, 1.0
        %v1065 = vmin.f32 %v873, 1.0
        %v1066 = vmin.f32 %v874, 1.0
        %v1067 = vmin.f32 %v875, 1.0
        %v1068 = vmin.f32 %v876, 1.0
        %v1069 = vmin.f32 %v877, 1.0
        %v1070 = vmin.f32 %v878, 1.0
        %v1071 = vmin.f32 %v879, 1.0
        %v1072 = vmin.f32 %v880, 1.0
        %v1073 = vmin.f32 %v881, 1.0
        %v1074 = vmin.f32 %v882, 1.0
        %v1075 = vmin.f32 %v883, 1.0
        %v1076 = vmin.f32 %v884, 1.0
        %v1077 = vmin.f32 %v885, 1.0
        %v1078 = vmin.f32 %v886, 1.0
        %v1079 = vmin.f32 %v887, 1.0
        %v1080 = vmin.f32 %v888, 1.0
        %v1081 = vmin.f32 %v889, 1.0
        %v1082 = vmin.f32 %v890, 1.0
        %v1083 = vmin.f32 %v891, 1.0
        %v1084 = vmin.f32 %v892, 1.0
        %v1085 = vmin.f32 %v893, 1.0
        %v1086 = vmin.f32 %v894, 1.0
        %v1087 = vmin.f32 %v895, 1.0
        %v1088 = vmin.f32 %v896, 1.0
        %v1089 = vmin.f32 %v897, 1.0
        %v1090 = vmin.f32 %v898, 1.0
        %v1091 = vmin.f32 %v899, 1.0
        %v1092 = vmin.f32 %v900, 1.0
        %v1093 = vmin.f32 %v901, 1.0
        %v1094 = vmul.f32 %v902, 127.0
        %v1095 = vmul.f32 %v903, 127.0
        %v1096 = vmul.f32 %v904, 127.0
        %v1097 = vmul.f32 %v905, 127.0
        %v1098 = vmul.f32 %v906, 127.0
        %v1099 = vmul.f32 %v907, 127.0
        %v1100 = vmul.f32 %v908, 127.0
        %v1101 = vmul.f32 %v909, 127.0
        %v1102 = vmul.f32 %v910, 127.0
        %v1103 = vmul.f32 %v911, 127.0
        %v1104 = vmul.f32 %v912, 127.0
        %v1105 = vmul.f32 %v913, 127.0
        %v1106 = vmul.f32 %v914, 127.0
        %v1107 = vmul.f32 %v915, 127.0
        %v1108 = vmul.f32 %v916, 127.0
        %v1109 = vmul.f32 %v917, 127.0
        %v1110 = vmul.f32 %v918, 127.0
        %v1111 = vmul.f32 %v919, 127.0
        %v1112 = vmul.f32 %v920, 127.0
        %v1113 = vmul.f32 %v921, 127.0
        %v1114 = vmul.f32 %v922, 127.0
        %v1115 = vmul.f32 %v923, 127.0
        %v1116 = vmul.f32 %v924, 127.0
        %v1117 = vmul.f32 %v925, 127.0
        %v1118 = vmul.f32 %v926, 127.0
        %v1119 = vmul.f32 %v927, 127.0
        %v1120 = vmul.f32 %v928, 127.0
        %v1121 = vmul.f32 %v929, 127.0
        %v1122 = vmul.f32 %v930, 127.0
        %v1123 = vmul.f32 %v931, 127.0
        %v1124 = vmul.f32 %v932, 127.0
        %v1125 = vmul.f32 %v933, 127.0
        %v1126 = vmul.f32 %v934, 127.0
        %v1127 = vmul.f32 %v935, 127.0
        %v1128 = vmul.f32 %v936, 127.0
        %v1129 = vmul.f32 %v937, 127.0
        %v1130 = vmul.f32 %v938, 127.0
        %v1131 = vmul.f32 %v939, 127.0
        %v1132 = vmul.f32 %v940, 127.0
        %v1133 = vmul.f32 %v941, 127.0
        %v1134 = vmul.f32 %v942, 127.0
        %v1135 = vmul.f32 %v943, 127.0
        %v1136 = vmul.f32 %v944, 127.0
        %v1137 = vmul.f32 %v945, 127.0
        %v1138 = vmul.f32 %v946, 127.0
        %v1139 = vmul.f32 %v947, 127.0
        %v1140 = vmul.f32 %v948, 127.0
        %v1141 = vmul.f32 %v949, 127.0
        %v1142 = vmul.f32 %v950, 127.0
        %v1143 = vmul.f32 %v951, 127.0
        %v1144 = vmul.f32 %v952, 127.0
        %v1145 = vmul.f32 %v953, 127.0
        %v1146 = vmul.f32 %v954, 127.0
        %v1147 = vmul.f32 %v955, 127.0
        %v1148 = vmul.f32 %v956, 127.0
        %v1149 = vmul.f32 %v957, 127.0
        %v1150 = vmul.f32 %v958, 127.0
        %v1151 = vmul.f32 %v959, 127.0
        %v1152 = vmul.f32 %v960, 127.0
        %v1153 = vmul.f32 %v961, 127.0
        %v1154 = vmul.f32 %v962, 127.0
        %v1155 = vmul.f32 %v963, 127.0
        %v1156 = vmul.f32 %v964, 127.0
        %v1157 = vmul.f32 %v965, 127.0
        %v1158 = vmul.f32 %v966, 127.0
        %v1159 = vmul.f32 %v967, 127.0
        %v1160 = vmul.f32 %v968, 127.0
        %v1161 = vmul.f32 %v969, 127.0
        %v1162 = vmul.f32 %v970, 127.0
        %v1163 = vmul.f32 %v971, 127.0
        %v1164 = vmul.f32 %v972, 127.0
        %v1165 = vmul.f32 %v973, 127.0
        %v1166 = vmul.f32 %v974, 127.0
        %v1167 = vmul.f32 %v975, 127.0
        %v1168 = vmul.f32 %v976, 127.0
        %v1169 = vmul.f32 %v977, 127.0
        %v1170 = vmul.f32 %v978, 127.0
        %v1171 = vmul.f32 %v979, 127.0
        %v1172 = vmul.f32 %v980, 127.0
        %v1173 = vmul.f32 %v981, 127.0
        %v1174 = vmul.f32 %v982, 127.0
        %v1175 = vmul.f32 %v983, 127.0
        %v1176 = vmul.f32 %v984, 127.0
        %v1177 = vmul.f32 %v985, 127.0
        %v1178 = vmul.f32 %v986, 127.0
        %v1179 = vmul.f32 %v987, 127.0
        %v1180 = vmul.f32 %v988, 127.0
        %v1181 = vmul.f32 %v989, 127.0
        %v1182 = vmul.f32 %v990, 127.0
        %v1183 = vmul.f32 %v991, 127.0
        %v1184 = vmul.f32 %v992, 127.0
        %v1185 = vmul.f32 %v993, 127.0
        %v1186 = vmul.f32 %v994, 127.0
        %v1187 = vmul.f32 %v995, 127.0
        %v1188 = vmul.f32 %v996, 127.0
        %v1189 = vmul.f32 %v997, 127.0
        %v1190 = vmul.f32 %v998, 127.0
        %v1191 = vmul.f32 %v999, 127.0
        %v1192 = vmul.f32 %v1000, 127.0
        %v1193 = vmul.f32 %v1001, 127.0
        %v1194 = vmul.f32 %v1002, 127.0
        %v1195 = vmul.f32 %v1003, 127.0
        %v1196 = vmul.f32 %v1004, 127.0
        %v1197 = vmul.f32 %v1005, 127.0
        %v1198 = vmul.f32 %v1006, 127.0
        %v1199 = vmul.f32 %v1007, 127.0
        %v1200 = vmul.f32 %v1008, 127.0
        %v1201 = vmul.f32 %v1009, 127.0
        %v1202 = vmul.f32 %v1010, 127.0
        %v1203 = vmul.f32 %v1011, 127.0
        %v1204 = vmul.f32 %v1012, 127.0
        %v1205 = vmul.f32 %v1013, 127.0
        %v1206 = vmul.f32 %v1014, 127.0
        %v1207 = vmul.f32 %v1015, 127.0
        %v1208 = vmul.f32 %v1016, 127.0
        %v1209 = vmul.f32 %v1017, 127.0
        %v1210 = vmul.f32 %v1018, 127.0
        %v1211 = vmul.f32 %v1019, 127.0
        %v1212 = vmul.f32 %v1020, 127.0
        %v1213 = vmul.f32 %v1021, 127.0
        %v1214 = vmul.f32 %v1022, 127.0
        %v1215 = vmul.f32 %v1023, 127.0
        %v1216 = vmul.f32 %v1024, 127.0
        %v1217 = vmul.f32 %v1025, 127.0
        %v1218 = vmul.f32 %v1026, 127.0
        %v1219 = vmul.f32 %v1027, 127.0
        %v1220 = vmul.f32 %v1028, 127.0
        %v1221 = vmul.f32 %v1029, 127.0
        %v1222 = vmul.f32 %v1030, 127.0
        %v1223 = vmul.f32 %v1031, 127.0
        %v1224 = vmul.f32 %v1032, 127.0
        %v1225 = vmul.f32 %v1033, 127.0
        %v1226 = vmul.f32 %v1034, 127.0
        %v1227 = vmul.f32 %v1035, 127.0
        %v1228 = vmul.f32 %v1036, 127.0
        %v1229 = vmul.f32 %v1037, 127.0
        %v1230 = vmul.f32 %v1038, 127.0
        %v1231 = vmul.f32 %v1039, 127.0
        %v1232 = vmul.f32 %v1040, 127.0
        %v1233 = vmul.f32 %v1041, 127.0
        %v1234 = vmul.f32 %v1042, 127.0
        %v1235 = vmul.f32 %v1043, 127.0
        %v1236 = vmul.f32 %v1044, 127.0
        %v1237 = vmul.f32 %v1045, 127.0
        %v1238 = vmul.f32 %v1046, 127.0
        %v1239 = vmul.f32 %v1047, 127.0
        %v1240 = vmul.f32 %v1048, 127.0
        %v1241 = vmul.f32 %v1049, 127.0
        %v1242 = vmul.f32 %v1050, 127.0
        %v1243 = vmul.f32 %v1051, 127.0
        %v1244 = vmul.f32 %v1052, 127.0
        %v1245 = vmul.f32 %v1053, 127.0
        %v1246 = vmul.f32 %v1054, 127.0
        %v1247 = vmul.f32 %v1055, 127.0
        %v1248 = vmul.f32 %v1056, 127.0
        %v1249 = vmul.f32 %v1057, 127.0
        %v1250 = vmul.f32 %v1058, 127.0
        %v1251 = vmul.f32 %v1059, 127.0
        %v1252 = vmul.f32 %v1060, 127.0
        %v1253 = vmul.f32 %v1061, 127.0
        %v1254 = vmul.f32 %v1062, 127.0
        %v1255 = vmul.f32 %v1063, 127.0
        %v1256 = vmul.f32 %v1064, 127.0
        %v1257 = vmul.f32 %v1065, 127.0
        %v1258 = vmul.f32 %v1066, 127.0
        %v1259 = vmul.f32 %v1067, 127.0
        %v1260 = vmul.f32 %v1068, 127.0
        %v1261 = vmul.f32 %v1069, 127.0
        %v1262 = vmul.f32 %v1070, 127.0
        %v1263 = vmul.f32 %v1071, 127.0
        %v1264 = vmul.f32 %v1072, 127.0
        %v1265 = vmul.f32 %v1073, 127.0
        %v1266 = vmul.f32 %v1074, 127.0
        %v1267 = vmul.f32 %v1075, 127.0
        %v1268 = vmul.f32 %v1076, 127.0
        %v1269 = vmul.f32 %v1077, 127.0
        %v1270 = vmul.f32 %v1078, 127.0
        %v1271 = vmul.f32 %v1079, 127.0
        %v1272 = vmul.f32 %v1080, 127.0
        %v1273 = vmul.f32 %v1081, 127.0
        %v1274 = vmul.f32 %v1082, 127.0
        %v1275 = vmul.f32 %v1083, 127.0
        %v1276 = vmul.f32 %v1084, 127.0
        %v1277 = vmul.f32 %v1085, 127.0
        %v1278 = vmul.f32 %v1086, 127.0
        %v1279 = vmul.f32 %v1087, 127.0
        %v1280 = vmul.f32 %v1088, 127.0
        %v1281 = vmul.f32 %v1089, 127.0
        %v1282 = vmul.f32 %v1090, 127.0
        %v1283 = vmul.f32 %v1091, 127.0
        %v1284 = vmul.f32 %v1092, 127.0
        %v1285 = vmul.f32 %v1093, 127.0
        %v1286 = vround.ne.pseudo %v1094
        %v1287 = vround.ne.pseudo %v1095
        %v1288 = vround.ne.pseudo %v1096
        %v1289 = vround.ne.pseudo %v1097
        %v1290 = vround.ne.pseudo %v1098
        %v1291 = vround.ne.pseudo %v1099
        %v1292 = vround.ne.pseudo %v1100
        %v1293 = vround.ne.pseudo %v1101
        %v1294 = vround.ne.pseudo %v1102
        %v1295 = vround.ne.pseudo %v1103
        %v1296 = vround.ne.pseudo %v1104
        %v1297 = vround.ne.pseudo %v1105
        %v1298 = vround.ne.pseudo %v1106
        %v1299 = vround.ne.pseudo %v1107
        %v1300 = vround.ne.pseudo %v1108
        %v1301 = vround.ne.pseudo %v1109
        %v1302 = vround.ne.pseudo %v1110
        %v1303 = vround.ne.pseudo %v1111
        %v1304 = vround.ne.pseudo %v1112
        %v1305 = vround.ne.pseudo %v1113
        %v1306 = vround.ne.pseudo %v1114
        %v1307 = vround.ne.pseudo %v1115
        %v1308 = vround.ne.pseudo %v1116
        %v1309 = vround.ne.pseudo %v1117
        %v1310 = vround.ne.pseudo %v1118
        %v1311 = vround.ne.pseudo %v1119
        %v1312 = vround.ne.pseudo %v1120
        %v1313 = vround.ne.pseudo %v1121
        %v1314 = vround.ne.pseudo %v1122
        %v1315 = vround.ne.pseudo %v1123
        %v1316 = vround.ne.pseudo %v1124
        %v1317 = vround.ne.pseudo %v1125
        %v1318 = vround.ne.pseudo %v1126
        %v1319 = vround.ne.pseudo %v1127
        %v1320 = vround.ne.pseudo %v1128
        %v1321 = vround.ne.pseudo %v1129
        %v1322 = vround.ne.pseudo %v1130
        %v1323 = vround.ne.pseudo %v1131
        %v1324 = vround.ne.pseudo %v1132
        %v1325 = vround.ne.pseudo %v1133
        %v1326 = vround.ne.pseudo %v1134
        %v1327 = vround.ne.pseudo %v1135
        %v1328 = vround.ne.pseudo %v1136
        %v1329 = vround.ne.pseudo %v1137
        %v1330 = vround.ne.pseudo %v1138
        %v1331 = vround.ne.pseudo %v1139
        %v1332 = vround.ne.pseudo %v1140
        %v1333 = vround.ne.pseudo %v1141
        %v1334 = vround.ne.pseudo %v1142
        %v1335 = vround.ne.pseudo %v1143
        %v1336 = vround.ne.pseudo %v1144
        %v1337 = vround.ne.pseudo %v1145
        %v1338 = vround.ne.pseudo %v1146
        %v1339 = vround.ne.pseudo %v1147
        %v1340 = vround.ne.pseudo %v1148
        %v1341 = vround.ne.pseudo %v1149
        %v1342 = vround.ne.pseudo %v1150
        %v1343 = vround.ne.pseudo %v1151
        %v1344 = vround.ne.pseudo %v1152
        %v1345 = vround.ne.pseudo %v1153
        %v1346 = vround.ne.pseudo %v1154
        %v1347 = vround.ne.pseudo %v1155
        %v1348 = vround.ne.pseudo %v1156
        %v1349 = vround.ne.pseudo %v1157
        %v1350 = vround.ne.pseudo %v1158
        %v1351 = vround.ne.pseudo %v1159
        %v1352 = vround.ne.pseudo %v1160
        %v1353 = vround.ne.pseudo %v1161
        %v1354 = vround.ne.pseudo %v1162
        %v1355 = vround.ne.pseudo %v1163
        %v1356 = vround.ne.pseudo %v1164
        %v1357 = vround.ne.pseudo %v1165
        %v1358 = vround.ne.pseudo %v1166
        %v1359 = vround.ne.pseudo %v1167
        %v1360 = vround.ne.pseudo %v1168
        %v1361 = vround.ne.pseudo %v1169
        %v1362 = vround.ne.pseudo %v1170
        %v1363 = vround.ne.pseudo %v1171
        %v1364 = vround.ne.pseudo %v1172
        %v1365 = vround.ne.pseudo %v1173
        %v1366 = vround.ne.pseudo %v1174
        %v1367 = vround.ne.pseudo %v1175
        %v1368 = vround.ne.pseudo %v1176
        %v1369 = vround.ne.pseudo %v1177
        %v1370 = vround.ne.pseudo %v1178
        %v1371 = vround.ne.pseudo %v1179
        %v1372 = vround.ne.pseudo %v1180
        %v1373 = vround.ne.pseudo %v1181
        %v1374 = vround.ne.pseudo %v1182
        %v1375 = vround.ne.pseudo %v1183
        %v1376 = vround.ne.pseudo %v1184
        %v1377 = vround.ne.pseudo %v1185
        %v1378 = vround.ne.pseudo %v1186
        %v1379 = vround.ne.pseudo %v1187
        %v1380 = vround.ne.pseudo %v1188
        %v1381 = vround.ne.pseudo %v1189
        %v1382 = vround.ne.pseudo %v1190
        %v1383 = vround.ne.pseudo %v1191
        %v1384 = vround.ne.pseudo %v1192
        %v1385 = vround.ne.pseudo %v1193
        %v1386 = vround.ne.pseudo %v1194
        %v1387 = vround.ne.pseudo %v1195
        %v1388 = vround.ne.pseudo %v1196
        %v1389 = vround.ne.pseudo %v1197
        %v1390 = vround.ne.pseudo %v1198
        %v1391 = vround.ne.pseudo %v1199
        %v1392 = vround.ne.pseudo %v1200
        %v1393 = vround.ne.pseudo %v1201
        %v1394 = vround.ne.pseudo %v1202
        %v1395 = vround.ne.pseudo %v1203
        %v1396 = vround.ne.pseudo %v1204
        %v1397 = vround.ne.pseudo %v1205
        %v1398 = vround.ne.pseudo %v1206
        %v1399 = vround.ne.pseudo %v1207
        %v1400 = vround.ne.pseudo %v1208
        %v1401 = vround.ne.pseudo %v1209
        %v1402 = vround.ne.pseudo %v1210
        %v1403 = vround.ne.pseudo %v1211
        %v1404 = vround.ne.pseudo %v1212
        %v1405 = vround.ne.pseudo %v1213
        %v1406 = vround.ne.pseudo %v1214
        %v1407 = vround.ne.pseudo %v1215
        %v1408 = vround.ne.pseudo %v1216
        %v1409 = vround.ne.pseudo %v1217
        %v1410 = vround.ne.pseudo %v1218
        %v1411 = vround.ne.pseudo %v1219
        %v1412 = vround.ne.pseudo %v1220
        %v1413 = vround.ne.pseudo %v1221
        %v1414 = vround.ne.pseudo %v1222
        %v1415 = vround.ne.pseudo %v1223
        %v1416 = vround.ne.pseudo %v1224
        %v1417 = vround.ne.pseudo %v1225
        %v1418 = vround.ne.pseudo %v1226
        %v1419 = vround.ne.pseudo %v1227
        %v1420 = vround.ne.pseudo %v1228
        %v1421 = vround.ne.pseudo %v1229
        %v1422 = vround.ne.pseudo %v1230
        %v1423 = vround.ne.pseudo %v1231
        %v1424 = vround.ne.pseudo %v1232
        %v1425 = vround.ne.pseudo %v1233
        %v1426 = vround.ne.pseudo %v1234
        %v1427 = vround.ne.pseudo %v1235
        %v1428 = vround.ne.pseudo %v1236
        %v1429 = vround.ne.pseudo %v1237
        %v1430 = vround.ne.pseudo %v1238
        %v1431 = vround.ne.pseudo %v1239
        %v1432 = vround.ne.pseudo %v1240
        %v1433 = vround.ne.pseudo %v1241
        %v1434 = vround.ne.pseudo %v1242
        %v1435 = vround.ne.pseudo %v1243
        %v1436 = vround.ne.pseudo %v1244
        %v1437 = vround.ne.pseudo %v1245
        %v1438 = vround.ne.pseudo %v1246
        %v1439 = vround.ne.pseudo %v1247
        %v1440 = vround.ne.pseudo %v1248
        %v1441 = vround.ne.pseudo %v1249
        %v1442 = vround.ne.pseudo %v1250
        %v1443 = vround.ne.pseudo %v1251
        %v1444 = vround.ne.pseudo %v1252
        %v1445 = vround.ne.pseudo %v1253
        %v1446 = vround.ne.pseudo %v1254
        %v1447 = vround.ne.pseudo %v1255
        %v1448 = vround.ne.pseudo %v1256
        %v1449 = vround.ne.pseudo %v1257
        %v1450 = vround.ne.pseudo %v1258
        %v1451 = vround.ne.pseudo %v1259
        %v1452 = vround.ne.pseudo %v1260
        %v1453 = vround.ne.pseudo %v1261
        %v1454 = vround.ne.pseudo %v1262
        %v1455 = vround.ne.pseudo %v1263
        %v1456 = vround.ne.pseudo %v1264
        %v1457 = vround.ne.pseudo %v1265
        %v1458 = vround.ne.pseudo %v1266
        %v1459 = vround.ne.pseudo %v1267
        %v1460 = vround.ne.pseudo %v1268
        %v1461 = vround.ne.pseudo %v1269
        %v1462 = vround.ne.pseudo %v1270
        %v1463 = vround.ne.pseudo %v1271
        %v1464 = vround.ne.pseudo %v1272
        %v1465 = vround.ne.pseudo %v1273
        %v1466 = vround.ne.pseudo %v1274
        %v1467 = vround.ne.pseudo %v1275
        %v1468 = vround.ne.pseudo %v1276
        %v1469 = vround.ne.pseudo %v1277
        %v1470 = vround.ne.pseudo %v1278
        %v1471 = vround.ne.pseudo %v1279
        %v1472 = vround.ne.pseudo %v1280
        %v1473 = vround.ne.pseudo %v1281
        %v1474 = vround.ne.pseudo %v1282
        %v1475 = vround.ne.pseudo %v1283
        %v1476 = vround.ne.pseudo %v1284
        %v1477 = vround.ne.pseudo %v1285
        %v1478 = vrcp.pop 127.0
        %v1479 = vmul.f32 127.0, %v1478
        %v1480 = vsub.f32 1.0, %v1479
        %v1481 = vmul.f32 %v1478, %v1480
        %v1482 = vadd.f32 %v1478, %v1481
        %vm1483 = vweird.f32 %v1478
        %v1484 = vsel %vm1483, %v1478, %v1482
        %v1485 = vmul.f32 %v1286, %v1484
        %v1486 = vmul.f32 %v1287, %v1484
        %v1487 = vmul.f32 %v1288, %v1484
        %v1488 = vmul.f32 %v1289, %v1484
        %v1489 = vmul.f32 %v1290, %v1484
        %v1490 = vmul.f32 %v1291, %v1484
        %v1491 = vmul.f32 %v1292, %v1484
        %v1492 = vmul.f32 %v1293, %v1484
        %v1493 = vmul.f32 %v1294, %v1484
        %v1494 = vmul.f32 %v1295, %v1484
        %v1495 = vmul.f32 %v1296, %v1484
        %v1496 = vmul.f32 %v1297, %v1484
        %v1497 = vmul.f32 %v1298, %v1484
        %v1498 = vmul.f32 %v1299, %v1484
        %v1499 = vmul.f32 %v1300, %v1484
        %v1500 = vmul.f32 %v1301, %v1484
        %v1501 = vmul.f32 %v1302, %v1484
        %v1502 = vmul.f32 %v1303, %v1484
        %v1503 = vmul.f32 %v1304, %v1484
        %v1504 = vmul.f32 %v1305, %v1484
        %v1505 = vmul.f32 %v1306, %v1484
        %v1506 = vmul.f32 %v1307, %v1484
        %v1507 = vmul.f32 %v1308, %v1484
        %v1508 = vmul.f32 %v1309, %v1484
        %v1509 = vmul.f32 %v1310, %v1484
        %v1510 = vmul.f32 %v1311, %v1484
        %v1511 = vmul.f32 %v1312, %v1484
        %v1512 = vmul.f32 %v1313, %v1484
        %v1513 = vmul.f32 %v1314, %v1484
        %v1514 = vmul.f32 %v1315, %v1484
        %v1515 = vmul.f32 %v1316, %v1484
        %v1516 = vmul.f32 %v1317, %v1484
        %v1517 = vmul.f32 %v1318, %v1484
        %v1518 = vmul.f32 %v1319, %v1484
        %v1519 = vmul.f32 %v1320, %v1484
        %v1520 = vmul.f32 %v1321, %v1484
        %v1521 = vmul.f32 %v1322, %v1484
        %v1522 = vmul.f32 %v1323, %v1484
        %v1523 = vmul.f32 %v1324, %v1484
        %v1524 = vmul.f32 %v1325, %v1484
        %v1525 = vmul.f32 %v1326, %v1484
        %v1526 = vmul.f32 %v1327, %v1484
        %v1527 = vmul.f32 %v1328, %v1484
        %v1528 = vmul.f32 %v1329, %v1484
        %v1529 = vmul.f32 %v1330, %v1484
        %v1530 = vmul.f32 %v1331, %v1484
        %v1531 = vmul.f32 %v1332, %v1484
        %v1532 = vmul.f32 %v1333, %v1484
        %v1533 = vmul.f32 %v1334, %v1484
        %v1534 = vmul.f32 %v1335, %v1484
        %v1535 = vmul.f32 %v1336, %v1484
        %v1536 = vmul.f32 %v1337, %v1484
        %v1537 = vmul.f32 %v1338, %v1484
        %v1538 = vmul.f32 %v1339, %v1484
        %v1539 = vmul.f32 %v1340, %v1484
        %v1540 = vmul.f32 %v1341, %v1484
        %v1541 = vmul.f32 %v1342, %v1484
        %v1542 = vmul.f32 %v1343, %v1484
        %v1543 = vmul.f32 %v1344, %v1484
        %v1544 = vmul.f32 %v1345, %v1484
        %v1545 = vmul.f32 %v1346, %v1484
        %v1546 = vmul.f32 %v1347, %v1484
        %v1547 = vmul.f32 %v1348, %v1484
        %v1548 = vmul.f32 %v1349, %v1484
        %v1549 = vmul.f32 %v1350, %v1484
        %v1550 = vmul.f32 %v1351, %v1484
        %v1551 = vmul.f32 %v1352, %v1484
        %v1552 = vmul.f32 %v1353, %v1484
        %v1553 = vmul.f32 %v1354, %v1484
        %v1554 = vmul.f32 %v1355, %v1484
        %v1555 = vmul.f32 %v1356, %v1484
        %v1556 = vmul.f32 %v1357, %v1484
        %v1557 = vmul.f32 %v1358, %v1484
        %v1558 = vmul.f32 %v1359, %v1484
        %v1559 = vmul.f32 %v1360, %v1484
        %v1560 = vmul.f32 %v1361, %v1484
        %v1561 = vmul.f32 %v1362, %v1484
        %v1562 = vmul.f32 %v1363, %v1484
        %v1563 = vmul.f32 %v1364, %v1484
        %v1564 = vmul.f32 %v1365, %v1484
        %v1565 = vmul.f32 %v1366, %v1484
        %v1566 = vmul.f32 %v1367, %v1484
        %v1567 = vmul.f32 %v1368, %v1484
        %v1568 = vmul.f32 %v1369, %v1484
        %v1569 = vmul.f32 %v1370, %v1484
        %v1570 = vmul.f32 %v1371, %v1484
        %v1571 = vmul.f32 %v1372, %v1484
        %v1572 = vmul.f32 %v1373, %v1484
        %v1573 = vmul.f32 %v1374, %v1484
        %v1574 = vmul.f32 %v1375, %v1484
        %v1575 = vmul.f32 %v1376, %v1484
        %v1576 = vmul.f32 %v1377, %v1484
        %v1577 = vmul.f32 %v1378, %v1484
        %v1578 = vmul.f32 %v1379, %v1484
        %v1579 = vmul.f32 %v1380, %v1484
        %v1580 = vmul.f32 %v1381, %v1484
        %v1581 = vmul.f32 %v1382, %v1484
        %v1582 = vmul.f32 %v1383, %v1484
        %v1583 = vmul.f32 %v1384, %v1484
        %v1584 = vmul.f32 %v1385, %v1484
        %v1585 = vmul.f32 %v1386, %v1484
        %v1586 = vmul.f32 %v1387, %v1484
        %v1587 = vmul.f32 %v1388, %v1484
        %v1588 = vmul.f32 %v1389, %v1484
        %v1589 = vmul.f32 %v1390, %v1484
        %v1590 = vmul.f32 %v1391, %v1484
        %v1591 = vmul.f32 %v1392, %v1484
        %v1592 = vmul.f32 %v1393, %v1484
        %v1593 = vmul.f32 %v1394, %v1484
        %v1594 = vmul.f32 %v1395, %v1484
        %v1595 = vmul.f32 %v1396, %v1484
        %v1596 = vmul.f32 %v1397, %v1484
        %v1597 = vmul.f32 %v1398, %v1484
        %v1598 = vmul.f32 %v1399, %v1484
        %v1599 = vmul.f32 %v1400, %v1484
        %v1600 = vmul.f32 %v1401, %v1484
        %v1601 = vmul.f32 %v1402, %v1484
        %v1602 = vmul.f32 %v1403, %v1484
        %v1603 = vmul.f32 %v1404, %v1484
        %v1604 = vmul.f32 %v1405, %v1484
        %v1605 = vmul.f32 %v1406, %v1484
        %v1606 = vmul.f32 %v1407, %v1484
        %v1607 = vmul.f32 %v1408, %v1484
        %v1608 = vmul.f32 %v1409, %v1484
        %v1609 = vmul.f32 %v1410, %v1484
        %v1610 = vmul.f32 %v1411, %v1484
        %v1611 = vmul.f32 %v1412, %v1484
        %v1612 = vmul.f32 %v1413, %v1484
        %v1613 = vmul.f32 %v1414, %v1484
        %v1614 = vmul.f32 %v1415, %v1484
        %v1615 = vmul.f32 %v1416, %v1484
        %v1616 = vmul.f32 %v1417, %v1484
        %v1617 = vmul.f32 %v1418, %v1484
        %v1618 = vmul.f32 %v1419, %v1484
        %v1619 = vmul.f32 %v1420, %v1484
        %v1620 = vmul.f32 %v1421, %v1484
        %v1621 = vmul.f32 %v1422, %v1484
        %v1622 = vmul.f32 %v1423, %v1484
        %v1623 = vmul.f32 %v1424, %v1484
        %v1624 = vmul.f32 %v1425, %v1484
        %v1625 = vmul.f32 %v1426, %v1484
        %v1626 = vmul.f32 %v1427, %v1484
        %v1627 = vmul.f32 %v1428, %v1484
        %v1628 = vmul.f32 %v1429, %v1484
        %v1629 = vmul.f32 %v1430, %v1484
        %v1630 = vmul.f32 %v1431, %v1484
        %v1631 = vmul.f32 %v1432, %v1484
        %v1632 = vmul.f32 %v1433, %v1484
        %v1633 = vmul.f32 %v1434, %v1484
        %v1634 = vmul.f32 %v1435, %v1484
        %v1635 = vmul.f32 %v1436, %v1484
        %v1636 = vmul.f32 %v1437, %v1484
        %v1637 = vmul.f32 %v1438, %v1484
        %v1638 = vmul.f32 %v1439, %v1484
        %v1639 = vmul.f32 %v1440, %v1484
        %v1640 = vmul.f32 %v1441, %v1484
        %v1641 = vmul.f32 %v1442, %v1484
        %v1642 = vmul.f32 %v1443, %v1484
        %v1643 = vmul.f32 %v1444, %v1484
        %v1644 = vmul.f32 %v1445, %v1484
        %v1645 = vmul.f32 %v1446, %v1484
        %v1646 = vmul.f32 %v1447, %v1484
        %v1647 = vmul.f32 %v1448, %v1484
        %v1648 = vmul.f32 %v1449, %v1484
        %v1649 = vmul.f32 %v1450, %v1484
        %v1650 = vmul.f32 %v1451, %v1484
        %v1651 = vmul.f32 %v1452, %v1484
        %v1652 = vmul.f32 %v1453, %v1484
        %v1653 = vmul.f32 %v1454, %v1484
        %v1654 = vmul.f32 %v1455, %v1484
        %v1655 = vmul.f32 %v1456, %v1484
        %v1656 = vmul.f32 %v1457, %v1484
        %v1657 = vmul.f32 %v1458, %v1484
        %v1658 = vmul.f32 %v1459, %v1484
        %v1659 = vmul.f32 %v1460, %v1484
        %v1660 = vmul.f32 %v1461, %v1484
        %v1661 = vmul.f32 %v1462, %v1484
        %v1662 = vmul.f32 %v1463, %v1484
        %v1663 = vmul.f32 %v1464, %v1484
        %v1664 = vmul.f32 %v1465, %v1484
        %v1665 = vmul.f32 %v1466, %v1484
        %v1666 = vmul.f32 %v1467, %v1484
        %v1667 = vmul.f32 %v1468, %v1484
        %v1668 = vmul.f32 %v1469, %v1484
        %v1669 = vmul.f32 %v1470, %v1484
        %v1670 = vmul.f32 %v1471, %v1484
        %v1671 = vmul.f32 %v1472, %v1484
        %v1672 = vmul.f32 %v1473, %v1484
        %v1673 = vmul.f32 %v1474, %v1484
        %v1674 = vmul.f32 %v1475, %v1484
        %v1675 = vmul.f32 %v1476, %v1484
        %v1676 = vmul.f32 %v1477, %v1484
        %v1677 = vpack.c.bf16 %v1491, %v1485
        %v1678 = vpack.c.bf16 %v1492, %v1486
        %v1679 = vpack.c.bf16 %v1493, %v1487
        %v1680 = vpack.c.bf16 %v1494, %v1488
        %v1681 = vpack.c.bf16 %v1495, %v1489
        %v1682 = vpack.c.bf16 %v1496, %v1490
        %v1683 = vpack.c.bf16 %v1503, %v1497
        %v1684 = vpack.c.bf16 %v1504, %v1498
        %v1685 = vpack.c.bf16 %v1505, %v1499
        %v1686 = vpack.c.bf16 %v1506, %v1500
        %v1687 = vpack.c.bf16 %v1507, %v1501
        %v1688 = vpack.c.bf16 %v1508, %v1502
        %v1689 = vpack.c.bf16 %v1515, %v1509
        %v1690 = vpack.c.bf16 %v1516, %v1510
        %v1691 = vpack.c.bf16 %v1517, %v1511
        %v1692 = vpack.c.bf16 %v1518, %v1512
        %v1693 = vpack.c.bf16 %v1519, %v1513
        %v1694 = vpack.c.bf16 %v1520, %v1514
        %v1695 = vpack.c.bf16 %v1527, %v1521
        %v1696 = vpack.c.bf16 %v1528, %v1522
        %v1697 = vpack.c.bf16 %v1529, %v1523
        %v1698 = vpack.c.bf16 %v1530, %v1524
        %v1699 = vpack.c.bf16 %v1531, %v1525
        %v1700 = vpack.c.bf16 %v1532, %v1526
        %v1701 = vpack.c.bf16 %v1539, %v1533
        %v1702 = vpack.c.bf16 %v1540, %v1534
        %v1703 = vpack.c.bf16 %v1541, %v1535
        %v1704 = vpack.c.bf16 %v1542, %v1536
        %v1705 = vpack.c.bf16 %v1543, %v1537
        %v1706 = vpack.c.bf16 %v1544, %v1538
        %v1707 = vpack.c.bf16 %v1551, %v1545
        %v1708 = vpack.c.bf16 %v1552, %v1546
        %v1709 = vpack.c.bf16 %v1553, %v1547
        %v1710 = vpack.c.bf16 %v1554, %v1548
        %v1711 = vpack.c.bf16 %v1555, %v1549
        %v1712 = vpack.c.bf16 %v1556, %v1550
        %v1713 = vpack.c.bf16 %v1563, %v1557
        %v1714 = vpack.c.bf16 %v1564, %v1558
        %v1715 = vpack.c.bf16 %v1565, %v1559
        %v1716 = vpack.c.bf16 %v1566, %v1560
        %v1717 = vpack.c.bf16 %v1567, %v1561
        %v1718 = vpack.c.bf16 %v1568, %v1562
        %v1719 = vpack.c.bf16 %v1575, %v1569
        %v1720 = vpack.c.bf16 %v1576, %v1570
        %v1721 = vpack.c.bf16 %v1577, %v1571
        %v1722 = vpack.c.bf16 %v1578, %v1572
        %v1723 = vpack.c.bf16 %v1579, %v1573
        %v1724 = vpack.c.bf16 %v1580, %v1574
        %v1725 = vpack.c.bf16 %v1587, %v1581
        %v1726 = vpack.c.bf16 %v1588, %v1582
        %v1727 = vpack.c.bf16 %v1589, %v1583
        %v1728 = vpack.c.bf16 %v1590, %v1584
        %v1729 = vpack.c.bf16 %v1591, %v1585
        %v1730 = vpack.c.bf16 %v1592, %v1586
        %v1731 = vpack.c.bf16 %v1599, %v1593
        %v1732 = vpack.c.bf16 %v1600, %v1594
        %v1733 = vpack.c.bf16 %v1601, %v1595
        %v1734 = vpack.c.bf16 %v1602, %v1596
        %v1735 = vpack.c.bf16 %v1603, %v1597
        %v1736 = vpack.c.bf16 %v1604, %v1598
        %v1737 = vpack.c.bf16 %v1611, %v1605
        %v1738 = vpack.c.bf16 %v1612, %v1606
        %v1739 = vpack.c.bf16 %v1613, %v1607
        %v1740 = vpack.c.bf16 %v1614, %v1608
        %v1741 = vpack.c.bf16 %v1615, %v1609
        %v1742 = vpack.c.bf16 %v1616, %v1610
        %v1743 = vpack.c.bf16 %v1623, %v1617
        %v1744 = vpack.c.bf16 %v1624, %v1618
        %v1745 = vpack.c.bf16 %v1625, %v1619
        %v1746 = vpack.c.bf16 %v1626, %v1620
        %v1747 = vpack.c.bf16 %v1627, %v1621
        %v1748 = vpack.c.bf16 %v1628, %v1622
        %v1749 = vpack.c.bf16 %v1635, %v1629
        %v1750 = vpack.c.bf16 %v1636, %v1630
        %v1751 = vpack.c.bf16 %v1637, %v1631
        %v1752 = vpack.c.bf16 %v1638, %v1632
        %v1753 = vpack.c.bf16 %v1639, %v1633
        %v1754 = vpack.c.bf16 %v1640, %v1634
        %v1755 = vpack.c.bf16 %v1647, %v1641
        %v1756 = vpack.c.bf16 %v1648, %v1642
        %v1757 = vpack.c.bf16 %v1649, %v1643
        %v1758 = vpack.c.bf16 %v1650, %v1644
        %v1759 = vpack.c.bf16 %v1651, %v1645
        %v1760 = vpack.c.bf16 %v1652, %v1646
        %v1761 = vpack.c.bf16 %v1659, %v1653
        %v1762 = vpack.c.bf16 %v1660, %v1654
        %v1763 = vpack.c.bf16 %v1661, %v1655
        %v1764 = vpack.c.bf16 %v1662, %v1656
        %v1765 = vpack.c.bf16 %v1663, %v1657
        %v1766 = vpack.c.bf16 %v1664, %v1658
        %v1767 = vpack.c.bf16 %v1671, %v1665
        %v1768 = vpack.c.bf16 %v1672, %v1666
        %v1769 = vpack.c.bf16 %v1673, %v1667
        %v1770 = vpack.c.bf16 %v1674, %v1668
        %v1771 = vpack.c.bf16 %v1675, %v1669
        %v1772 = vpack.c.bf16 %v1676, %v1670
        %v1773 = vld [vmem:[#allocation5] sm:$0xf]
        %v1774 = vld [vmem:[#allocation5 + $0x4] sm:$0xf]
        %v1775 = vld [vmem:[#allocation5 + $0x8] sm:$0xf]
        %v1776 = vld [vmem:[#allocation5 + $0xc] sm:$0xf]
        %v1777 = vld [vmem:[#allocation5 + $0x10] sm:$0xf]
        %v1778 = vld [vmem:[#allocation5 + $0x14] sm:$0xf]
        %v1779 = vld [vmem:[#allocation5 + $0x18] sm:$0xf]
        %v1780 = vld [vmem:[#allocation5 + $0x1c] sm:$0xf]
        %v1781 = vld [vmem:[#allocation5 + $0x20] sm:$0xf]
        %v1782 = vld [vmem:[#allocation5 + $0x24] sm:$0xf]
        %v1783 = vld [vmem:[#allocation5 + $0x28] sm:$0xf]
        %v1784 = vld [vmem:[#allocation5 + $0x2c] sm:$0xf]
        %v1785 = vld [vmem:[#allocation5 + $0x30] sm:$0xf]
        %v1786 = vld [vmem:[#allocation5 + $0x34] sm:$0xf]
        %v1787 = vld [vmem:[#allocation5 + $0x38] sm:$0xf]
        %v1788 = vld [vmem:[#allocation5 + $0x3c] sm:$0xf]
        %v1789 = vld [vmem:[#allocation5 + $0x40] sm:$0xf]
        %v1790 = vld [vmem:[#allocation5 + $0x44] sm:$0xf]
        %v1791 = vld [vmem:[#allocation5 + $0x48] sm:$0xf]
        %v1792 = vld [vmem:[#allocation5 + $0x4c] sm:$0xf]
        %v1793 = vld [vmem:[#allocation5 + $0x50] sm:$0xf]
        %v1794 = vld [vmem:[#allocation5 + $0x54] sm:$0xf]
        %v1795 = vld [vmem:[#allocation5 + $0x58] sm:$0xf]
        %v1796 = vld [vmem:[#allocation5 + $0x5c] sm:$0xf]
        %v1797 = vld [vmem:[#allocation5 + $0x60] sm:$0xf]
        %v1798 = vld [vmem:[#allocation5 + $0x64] sm:$0xf]
        %v1799 = vld [vmem:[#allocation5 + $0x68] sm:$0xf]
        %v1800 = vld [vmem:[#allocation5 + $0x6c] sm:$0xf]
        %v1801 = vld [vmem:[#allocation5 + $0x70] sm:$0xf]
        %v1802 = vld [vmem:[#allocation5 + $0x74] sm:$0xf]
        %v1803 = vld [vmem:[#allocation5 + $0x78] sm:$0xf]
        %v1804 = vld [vmem:[#allocation5 + $0x7c] sm:$0xf]
        %v1805 = vld [vmem:[#allocation5 + $0x80] sm:$0xf]
        %v1806 = vld [vmem:[#allocation5 + $0x84] sm:$0xf]
        %v1807 = vld [vmem:[#allocation5 + $0x88] sm:$0xf]
        %v1808 = vld [vmem:[#allocation5 + $0x8c] sm:$0xf]
        %v1809 = vld [vmem:[#allocation5 + $0x90] sm:$0xf]
        %v1810 = vld [vmem:[#allocation5 + $0x94] sm:$0xf]
        %v1811 = vld [vmem:[#allocation5 + $0x98] sm:$0xf]
        %v1812 = vld [vmem:[#allocation5 + $0x9c] sm:$0xf]
        %v1813 = vld [vmem:[#allocation5 + $0xa0] sm:$0xf]
        %v1814 = vld [vmem:[#allocation5 + $0xa4] sm:$0xf]
        %v1815 = vld [vmem:[#allocation5 + $0xa8] sm:$0xf]
        %v1816 = vld [vmem:[#allocation5 + $0xac] sm:$0xf]
        %v1817 = vld [vmem:[#allocation5 + $0xb0] sm:$0xf]
        %v1818 = vld [vmem:[#allocation5 + $0xb4] sm:$0xf]
        %v1819 = vld [vmem:[#allocation5 + $0xb8] sm:$0xf]
        %v1820 = vld [vmem:[#allocation5 + $0xbc] sm:$0xf]
        %v1821 = vld [vmem:[#allocation5 + $0xc0] sm:$0xf]
        %v1822 = vld [vmem:[#allocation5 + $0xc4] sm:$0xf]
        %v1823 = vld [vmem:[#allocation5 + $0xc8] sm:$0xf]
        %v1824 = vld [vmem:[#allocation5 + $0xcc] sm:$0xf]
        %v1825 = vld [vmem:[#allocation5 + $0xd0] sm:$0xf]
        %v1826 = vld [vmem:[#allocation5 + $0xd4] sm:$0xf]
        %v1827 = vld [vmem:[#allocation5 + $0xd8] sm:$0xf]
        %v1828 = vld [vmem:[#allocation5 + $0xdc] sm:$0xf]
        %v1829 = vld [vmem:[#allocation5 + $0xe0] sm:$0xf]
        %v1830 = vld [vmem:[#allocation5 + $0xe4] sm:$0xf]
        %v1831 = vld [vmem:[#allocation5 + $0xe8] sm:$0xf]
        %v1832 = vld [vmem:[#allocation5 + $0xec] sm:$0xf]
        %v1833 = vld [vmem:[#allocation5 + $0xf0] sm:$0xf]
        %v1834 = vld [vmem:[#allocation5 + $0xf4] sm:$0xf]
        %v1835 = vld [vmem:[#allocation5 + $0xf8] sm:$0xf]
        %v1836 = vld [vmem:[#allocation5 + $0xfc] sm:$0xf]
        %v1837 = vld [vmem:[#allocation5 + $0x100] sm:$0xf]
        %v1838 = vld [vmem:[#allocation5 + $0x104] sm:$0xf]
        %v1839 = vld [vmem:[#allocation5 + $0x108] sm:$0xf]
        %v1840 = vld [vmem:[#allocation5 + $0x10c] sm:$0xf]
        %v1841 = vld [vmem:[#allocation5 + $0x110] sm:$0xf]
        %v1842 = vld [vmem:[#allocation5 + $0x114] sm:$0xf]
        %v1843 = vld [vmem:[#allocation5 + $0x118] sm:$0xf]
        %v1844 = vld [vmem:[#allocation5 + $0x11c] sm:$0xf]
        %v1845 = vld [vmem:[#allocation5 + $0x120] sm:$0xf]
        %v1846 = vld [vmem:[#allocation5 + $0x124] sm:$0xf]
        %v1847 = vld [vmem:[#allocation5 + $0x128] sm:$0xf]
        %v1848 = vld [vmem:[#allocation5 + $0x12c] sm:$0xf]
        %v1849 = vld [vmem:[#allocation5 + $0x130] sm:$0xf]
        %v1850 = vld [vmem:[#allocation5 + $0x134] sm:$0xf]
        %v1851 = vld [vmem:[#allocation5 + $0x138] sm:$0xf]
        %v1852 = vld [vmem:[#allocation5 + $0x13c] sm:$0xf]
        %v1853 = vld [vmem:[#allocation5 + $0x140] sm:$0xf]
        %v1854 = vld [vmem:[#allocation5 + $0x144] sm:$0xf]
        %v1855 = vld [vmem:[#allocation5 + $0x148] sm:$0xf]
        %v1856 = vld [vmem:[#allocation5 + $0x14c] sm:$0xf]
        %v1857 = vld [vmem:[#allocation5 + $0x150] sm:$0xf]
        %v1858 = vld [vmem:[#allocation5 + $0x154] sm:$0xf]
        %v1859 = vld [vmem:[#allocation5 + $0x158] sm:$0xf]
        %v1860 = vld [vmem:[#allocation5 + $0x15c] sm:$0xf]
        %v1861 = vld [vmem:[#allocation5 + $0x160] sm:$0xf]
        %v1862 = vld [vmem:[#allocation5 + $0x164] sm:$0xf]
        %v1863 = vld [vmem:[#allocation5 + $0x168] sm:$0xf]
        %v1864 = vld [vmem:[#allocation5 + $0x16c] sm:$0xf]
        %v1865 = vld [vmem:[#allocation5 + $0x170] sm:$0xf]
        %v1866 = vld [vmem:[#allocation5 + $0x174] sm:$0xf]
        %v1867 = vld [vmem:[#allocation5 + $0x178] sm:$0xf]
        %v1868 = vld [vmem:[#allocation5 + $0x17c] sm:$0xf]
        %v1869 = vld [vmem:[%s2] sm:$0x1]
        %v1871 = vperm.slane %v1869, 0
        %v1969 = vunpack.c.l.b16 %v1773
        %v1970 = vunpack.c.l.b16 %v1774
        %v1971 = vunpack.c.l.b16 %v1775
        %v1972 = vunpack.c.l.b16 %v1776
        %v1973 = vunpack.c.l.b16 %v1777
        %v1974 = vunpack.c.l.b16 %v1778
        %v1975 = vunpack.c.l.b16 %v1779
        %v1976 = vunpack.c.l.b16 %v1780
        %v1977 = vunpack.c.l.b16 %v1781
        %v1978 = vunpack.c.l.b16 %v1782
        %v1979 = vunpack.c.l.b16 %v1783
        %v1980 = vunpack.c.l.b16 %v1784
        %v1981 = vunpack.c.l.b16 %v1785
        %v1982 = vunpack.c.l.b16 %v1786
        %v1983 = vunpack.c.l.b16 %v1787
        %v1984 = vunpack.c.l.b16 %v1788
        %v1985 = vunpack.c.l.b16 %v1789
        %v1986 = vunpack.c.l.b16 %v1790
        %v1987 = vunpack.c.l.b16 %v1791
        %v1988 = vunpack.c.l.b16 %v1792
        %v1989 = vunpack.c.l.b16 %v1793
        %v1990 = vunpack.c.l.b16 %v1794
        %v1991 = vunpack.c.l.b16 %v1795
        %v1992 = vunpack.c.l.b16 %v1796
        %v1993 = vunpack.c.l.b16 %v1797
        %v1994 = vunpack.c.l.b16 %v1798
        %v1995 = vunpack.c.l.b16 %v1799
        %v1996 = vunpack.c.l.b16 %v1800
        %v1997 = vunpack.c.l.b16 %v1801
        %v1998 = vunpack.c.l.b16 %v1802
        %v1999 = vunpack.c.l.b16 %v1803
        %v2000 = vunpack.c.l.b16 %v1804
        %v2001 = vunpack.c.l.b16 %v1805
        %v2002 = vunpack.c.l.b16 %v1806
        %v2003 = vunpack.c.l.b16 %v1807
        %v2004 = vunpack.c.l.b16 %v1808
        %v2005 = vunpack.c.l.b16 %v1809
        %v2006 = vunpack.c.l.b16 %v1810
        %v2007 = vunpack.c.l.b16 %v1811
        %v2008 = vunpack.c.l.b16 %v1812
        %v2009 = vunpack.c.l.b16 %v1813
        %v2010 = vunpack.c.l.b16 %v1814
        %v2011 = vunpack.c.l.b16 %v1815
        %v2012 = vunpack.c.l.b16 %v1816
        %v2013 = vunpack.c.l.b16 %v1817
        %v2014 = vunpack.c.l.b16 %v1818
        %v2015 = vunpack.c.l.b16 %v1819
        %v2016 = vunpack.c.l.b16 %v1820
        %v2017 = vunpack.c.l.b16 %v1821
        %v2018 = vunpack.c.l.b16 %v1822
        %v2019 = vunpack.c.l.b16 %v1823
        %v2020 = vunpack.c.l.b16 %v1824
        %v2021 = vunpack.c.l.b16 %v1825
        %v2022 = vunpack.c.l.b16 %v1826
        %v2023 = vunpack.c.l.b16 %v1827
        %v2024 = vunpack.c.l.b16 %v1828
        %v2025 = vunpack.c.l.b16 %v1829
        %v2026 = vunpack.c.l.b16 %v1830
        %v2027 = vunpack.c.l.b16 %v1831
        %v2028 = vunpack.c.l.b16 %v1832
        %v2029 = vunpack.c.l.b16 %v1833
        %v2030 = vunpack.c.l.b16 %v1834
        %v2031 = vunpack.c.l.b16 %v1835
        %v2032 = vunpack.c.l.b16 %v1836
        %v2033 = vunpack.c.l.b16 %v1837
        %v2034 = vunpack.c.l.b16 %v1838
        %v2035 = vunpack.c.l.b16 %v1839
        %v2036 = vunpack.c.l.b16 %v1840
        %v2037 = vunpack.c.l.b16 %v1841
        %v2038 = vunpack.c.l.b16 %v1842
        %v2039 = vunpack.c.l.b16 %v1843
        %v2040 = vunpack.c.l.b16 %v1844
        %v2041 = vunpack.c.l.b16 %v1845
        %v2042 = vunpack.c.l.b16 %v1846
        %v2043 = vunpack.c.l.b16 %v1847
        %v2044 = vunpack.c.l.b16 %v1848
        %v2045 = vunpack.c.l.b16 %v1849
        %v2046 = vunpack.c.l.b16 %v1850
        %v2047 = vunpack.c.l.b16 %v1851
        %v2048 = vunpack.c.l.b16 %v1852
        %v2049 = vunpack.c.l.b16 %v1853
        %v2050 = vunpack.c.l.b16 %v1854
        %v2051 = vunpack.c.l.b16 %v1855
        %v2052 = vunpack.c.l.b16 %v1856
        %v2053 = vunpack.c.l.b16 %v1857
        %v2054 = vunpack.c.l.b16 %v1858
        %v2055 = vunpack.c.l.b16 %v1859
        %v2056 = vunpack.c.l.b16 %v1860
        %v2057 = vunpack.c.l.b16 %v1861
        %v2058 = vunpack.c.l.b16 %v1862
        %v2059 = vunpack.c.l.b16 %v1863
        %v2060 = vunpack.c.l.b16 %v1864
        %v2061 = vunpack.c.l.b16 %v1865
        %v2062 = vunpack.c.l.b16 %v1866
        %v2063 = vunpack.c.l.b16 %v1867
        %v2064 = vunpack.c.l.b16 %v1868
        %v2065 = vpack.c.b16 %v1970, %v1969
        %v2066 = vpack.c.b16 %v1972, %v1971
        %v2067 = vpack.c.b16 %v1974, %v1973
        %v2068 = vpack.c.b16 %v1976, %v1975
        %v2069 = vpack.c.b16 %v1978, %v1977
        %v2070 = vpack.c.b16 %v1980, %v1979
        %v2071 = vpack.c.b16 %v1982, %v1981
        %v2072 = vpack.c.b16 %v1984, %v1983
        %v2073 = vpack.c.b16 %v1986, %v1985
        %v2074 = vpack.c.b16 %v1988, %v1987
        %v2075 = vpack.c.b16 %v1990, %v1989
        %v2076 = vpack.c.b16 %v1992, %v1991
        %v2077 = vpack.c.b16 %v1994, %v1993
        %v2078 = vpack.c.b16 %v1996, %v1995
        %v2079 = vpack.c.b16 %v1998, %v1997
        %v2080 = vpack.c.b16 %v2000, %v1999
        %v2081 = vpack.c.b16 %v2002, %v2001
        %v2082 = vpack.c.b16 %v2004, %v2003
        %v2083 = vpack.c.b16 %v2006, %v2005
        %v2084 = vpack.c.b16 %v2008, %v2007
        %v2085 = vpack.c.b16 %v2010, %v2009
        %v2086 = vpack.c.b16 %v2012, %v2011
        %v2087 = vpack.c.b16 %v2014, %v2013
        %v2088 = vpack.c.b16 %v2016, %v2015
        %v2089 = vpack.c.b16 %v2018, %v2017
        %v2090 = vpack.c.b16 %v2020, %v2019
        %v2091 = vpack.c.b16 %v2022, %v2021
        %v2092 = vpack.c.b16 %v2024, %v2023
        %v2093 = vpack.c.b16 %v2026, %v2025
        %v2094 = vpack.c.b16 %v2028, %v2027
        %v2095 = vpack.c.b16 %v2030, %v2029
        %v2096 = vpack.c.b16 %v2032, %v2031
        %v2097 = vpack.c.b16 %v2034, %v2033
        %v2098 = vpack.c.b16 %v2036, %v2035
        %v2099 = vpack.c.b16 %v2038, %v2037
        %v2100 = vpack.c.b16 %v2040, %v2039
        %v2101 = vpack.c.b16 %v2042, %v2041
        %v2102 = vpack.c.b16 %v2044, %v2043
        %v2103 = vpack.c.b16 %v2046, %v2045
        %v2104 = vpack.c.b16 %v2048, %v2047
        %v2105 = vpack.c.b16 %v2050, %v2049
        %v2106 = vpack.c.b16 %v2052, %v2051
        %v2107 = vpack.c.b16 %v2054, %v2053
        %v2108 = vpack.c.b16 %v2056, %v2055
        %v2109 = vpack.c.b16 %v2058, %v2057
        %v2110 = vpack.c.b16 %v2060, %v2059
        %v2111 = vpack.c.b16 %v2062, %v2061
        %v2112 = vpack.c.b16 %v2064, %v2063
        %2161 = vmatpush.bf16.msra.mxu0 %v2072
        %2162 = vmatpush.bf16.msra.mxu0 %v2071
        %2163 = vmatpush.bf16.msra.mxu0 %v2070
        %2164 = vmatpush.bf16.msra.mxu0 %v2069
        %2165 = vmatpush.bf16.msra.mxu0 %v2068
        %2166 = vmatpush.bf16.msra.mxu0 %v2067
        %2167 = vmatpush.bf16.msra.mxu0 %v2066
        %2168 = vmatpush.bf16.msra.mxu0 %v2065
        %2169 = vmatmul.bf16.gmra.mxu0 %v1677
        %v2170 = vpop.f32.mrf.mxu0
        %v2171 = vadd.f32 %v1871, %v2170
        %v2172 = vpop.f32.mrf.mxu0
        %v2173 = vadd.f32 %v1871, %v2172
        %2174 = vmatmul.bf16.gmra.mxu0 %v1683
        %v2175 = vpop.f32.mrf.mxu0
        %v2176 = vadd.f32 %v1871, %v2175
        %v2177 = vpop.f32.mrf.mxu0
        %v2178 = vadd.f32 %v1871, %v2177
        %2179 = vmatmul.bf16.gmra.mxu0 %v1689
        %v2180 = vpop.f32.mrf.mxu0
        %v2181 = vadd.f32 %v1871, %v2180
        %v2182 = vpop.f32.mrf.mxu0
        %v2183 = vadd.f32 %v1871, %v2182
        %2184 = vmatmul.bf16.gmra.mxu0 %v1695
        %v2185 = vpop.f32.mrf.mxu0
        %v2186 = vadd.f32 %v1871, %v2185
        %v2187 = vpop.f32.mrf.mxu0
        %v2188 = vadd.f32 %v1871, %v2187
        %2189 = vmatmul.bf16.gmra.mxu0 %v1701
        %v2190 = vpop.f32.mrf.mxu0
        %v2191 = vadd.f32 %v1871, %v2190
        %v2192 = vpop.f32.mrf.mxu0
        %v2193 = vadd.f32 %v1871, %v2192
        %2194 = vmatmul.bf16.gmra.mxu0 %v1707
        %v2195 = vpop.f32.mrf.mxu0
        %v2196 = vadd.f32 %v1871, %v2195
        %v2197 = vpop.f32.mrf.mxu0
        %v2198 = vadd.f32 %v1871, %v2197
        %2199 = vmatmul.bf16.gmra.mxu0 %v1713
        %v2200 = vpop.f32.mrf.mxu0
        %v2201 = vadd.f32 %v1871, %v2200
        %v2202 = vpop.f32.mrf.mxu0
        %v2203 = vadd.f32 %v1871, %v2202
        %2204 = vmatmul.bf16.gmra.mxu0 %v1719
        %v2205 = vpop.f32.mrf.mxu0
        %v2206 = vadd.f32 %v1871, %v2205
        %v2207 = vpop.f32.mrf.mxu0
        %v2208 = vadd.f32 %v1871, %v2207
        %2209 = vmatmul.bf16.gmra.mxu0 %v1725
        %v2210 = vpop.f32.mrf.mxu0
        %v2211 = vadd.f32 %v1871, %v2210
        %v2212 = vpop.f32.mrf.mxu0
        %v2213 = vadd.f32 %v1871, %v2212
        %2214 = vmatmul.bf16.gmra.mxu0 %v1731
        %v2215 = vpop.f32.mrf.mxu0
        %v2216 = vadd.f32 %v1871, %v2215
        %v2217 = vpop.f32.mrf.mxu0
        %v2218 = vadd.f32 %v1871, %v2217
        %2219 = vmatmul.bf16.gmra.mxu0 %v1737
        %v2220 = vpop.f32.mrf.mxu0
        %v2221 = vadd.f32 %v1871, %v2220
        %v2222 = vpop.f32.mrf.mxu0
        %v2223 = vadd.f32 %v1871, %v2222
        %2224 = vmatmul.bf16.gmra.mxu0 %v1743
        %v2225 = vpop.f32.mrf.mxu0
        %v2226 = vadd.f32 %v1871, %v2225
        %v2227 = vpop.f32.mrf.mxu0
        %v2228 = vadd.f32 %v1871, %v2227
        %2229 = vmatmul.bf16.gmra.mxu0 %v1749
        %v2230 = vpop.f32.mrf.mxu0
        %v2231 = vadd.f32 %v1871, %v2230
        %v2232 = vpop.f32.mrf.mxu0
        %v2233 = vadd.f32 %v1871, %v2232
        %2234 = vmatmul.bf16.gmra.mxu0 %v1755
        %v2235 = vpop.f32.mrf.mxu0
        %v2236 = vadd.f32 %v1871, %v2235
        %v2237 = vpop.f32.mrf.mxu0
        %v2238 = vadd.f32 %v1871, %v2237
        %2239 = vmatmul.bf16.gmra.mxu0 %v1761
        %v2240 = vpop.f32.mrf.mxu0
        %v2241 = vadd.f32 %v1871, %v2240
        %v2242 = vpop.f32.mrf.mxu0
        %v2243 = vadd.f32 %v1871, %v2242
        %2244 = vmatmul.bf16.gmra.mxu0 %v1767
        %v2245 = vpop.f32.mrf.mxu0
        %v2246 = vadd.f32 %v1871, %v2245
        %v2247 = vpop.f32.mrf.mxu0
        %v2248 = vadd.f32 %v1871, %v2247
        %2249 = vdwg.mxu0
        %2250 = vmatpush.bf16.msra.mxu0 %v2080
        %2251 = vmatpush.bf16.msra.mxu0 %v2079
        %2252 = vmatpush.bf16.msra.mxu0 %v2078
        %2253 = vmatpush.bf16.msra.mxu0 %v2077
        %2254 = vmatpush.bf16.msra.mxu0 %v2076
        %2255 = vmatpush.bf16.msra.mxu0 %v2075
        %2256 = vmatpush.bf16.msra.mxu0 %v2074
        %2257 = vmatpush.bf16.msra.mxu0 %v2073
        %2258 = vmatmul.bf16.gmra.mxu0 %v1678
        %v2259 = vpop.f32.mrf.mxu0
        %v2260 = vadd.f32 %v2171, %v2259
        %v2261 = vpop.f32.mrf.mxu0
        %v2262 = vadd.f32 %v2173, %v2261
        %2263 = vmatmul.bf16.gmra.mxu0 %v1684
        %v2264 = vpop.f32.mrf.mxu0
        %v2265 = vadd.f32 %v2176, %v2264
        %v2266 = vpop.f32.mrf.mxu0
        %v2267 = vadd.f32 %v2178, %v2266
        %2268 = vmatmul.bf16.gmra.mxu0 %v1690
        %v2269 = vpop.f32.mrf.mxu0
        %v2270 = vadd.f32 %v2181, %v2269
        %v2271 = vpop.f32.mrf.mxu0
        %v2272 = vadd.f32 %v2183, %v2271
        %2273 = vmatmul.bf16.gmra.mxu0 %v1696
        %v2274 = vpop.f32.mrf.mxu0
        %v2275 = vadd.f32 %v2186, %v2274
        %v2276 = vpop.f32.mrf.mxu0
        %v2277 = vadd.f32 %v2188, %v2276
        %2278 = vmatmul.bf16.gmra.mxu0 %v1702
        %v2279 = vpop.f32.mrf.mxu0
        %v2280 = vadd.f32 %v2191, %v2279
        %v2281 = vpop.f32.mrf.mxu0
        %v2282 = vadd.f32 %v2193, %v2281
        %2283 = vmatmul.bf16.gmra.mxu0 %v1708
        %v2284 = vpop.f32.mrf.mxu0
        %v2285 = vadd.f32 %v2196, %v2284
        %v2286 = vpop.f32.mrf.mxu0
        %v2287 = vadd.f32 %v2198, %v2286
        %2288 = vmatmul.bf16.gmra.mxu0 %v1714
        %v2289 = vpop.f32.mrf.mxu0
        %v2290 = vadd.f32 %v2201, %v2289
        %v2291 = vpop.f32.mrf.mxu0
        %v2292 = vadd.f32 %v2203, %v2291
        %2293 = vmatmul.bf16.gmra.mxu0 %v1720
        %v2294 = vpop.f32.mrf.mxu0
        %v2295 = vadd.f32 %v2206, %v2294
        %v2296 = vpop.f32.mrf.mxu0
        %v2297 = vadd.f32 %v2208, %v2296
        %2298 = vmatmul.bf16.gmra.mxu0 %v1726
        %v2299 = vpop.f32.mrf.mxu0
        %v2300 = vadd.f32 %v2211, %v2299
        %v2301 = vpop.f32.mrf.mxu0
        %v2302 = vadd.f32 %v2213, %v2301
        %2303 = vmatmul.bf16.gmra.mxu0 %v1732
        %v2304 = vpop.f32.mrf.mxu0
        %v2305 = vadd.f32 %v2216, %v2304
        %v2306 = vpop.f32.mrf.mxu0
        %v2307 = vadd.f32 %v2218, %v2306
        %2308 = vmatmul.bf16.gmra.mxu0 %v1738
        %v2309 = vpop.f32.mrf.mxu0
        %v2310 = vadd.f32 %v2221, %v2309
        %v2311 = vpop.f32.mrf.mxu0
        %v2312 = vadd.f32 %v2223, %v2311
        %2313 = vmatmul.bf16.gmra.mxu0 %v1744
        %v2314 = vpop.f32.mrf.mxu0
        %v2315 = vadd.f32 %v2226, %v2314
        %v2316 = vpop.f32.mrf.mxu0
        %v2317 = vadd.f32 %v2228, %v2316
        %2318 = vmatmul.bf16.gmra.mxu0 %v1750
        %v2319 = vpop.f32.mrf.mxu0
        %v2320 = vadd.f32 %v2231, %v2319
        %v2321 = vpop.f32.mrf.mxu0
        %v2322 = vadd.f32 %v2233, %v2321
        %2323 = vmatmul.bf16.gmra.mxu0 %v1756
        %v2324 = vpop.f32.mrf.mxu0
        %v2325 = vadd.f32 %v2236, %v2324
        %v2326 = vpop.f32.mrf.mxu0
        %v2327 = vadd.f32 %v2238, %v2326
        %2328 = vmatmul.bf16.gmra.mxu0 %v1762
        %v2329 = vpop.f32.mrf.mxu0
        %v2330 = vadd.f32 %v2241, %v2329
        %v2331 = vpop.f32.mrf.mxu0
        %v2332 = vadd.f32 %v2243, %v2331
        %2333 = vmatmul.bf16.gmra.mxu0 %v1768
        %v2334 = vpop.f32.mrf.mxu0
        %v2335 = vadd.f32 %v2246, %v2334
        %v2336 = vpop.f32.mrf.mxu0
        %v2337 = vadd.f32 %v2248, %v2336
        %2338 = vdwg.mxu0
        %2339 = vmatpush.bf16.msra.mxu0 %v2088
        %2340 = vmatpush.bf16.msra.mxu0 %v2087
        %2341 = vmatpush.bf16.msra.mxu0 %v2086
        %2342 = vmatpush.bf16.msra.mxu0 %v2085
        %2343 = vmatpush.bf16.msra.mxu0 %v2084
        %2344 = vmatpush.bf16.msra.mxu0 %v2083
        %2345 = vmatpush.bf16.msra.mxu0 %v2082
        %2346 = vmatpush.bf16.msra.mxu0 %v2081
        %2347 = vmatmul.bf16.gmra.mxu0 %v1679
        %v2348 = vpop.f32.mrf.mxu0
        %v2349 = vadd.f32 %v2260, %v2348
        %v2350 = vpop.f32.mrf.mxu0
        %v2351 = vadd.f32 %v2262, %v2350
        %2352 = vmatmul.bf16.gmra.mxu0 %v1685
        %v2353 = vpop.f32.mrf.mxu0
        %v2354 = vadd.f32 %v2265, %v2353
        %v2355 = vpop.f32.mrf.mxu0
        %v2356 = vadd.f32 %v2267, %v2355
        %2357 = vmatmul.bf16.gmra.mxu0 %v1691
        %v2358 = vpop.f32.mrf.mxu0
        %v2359 = vadd.f32 %v2270, %v2358
        %v2360 = vpop.f32.mrf.mxu0
        %v2361 = vadd.f32 %v2272, %v2360
        %2362 = vmatmul.bf16.gmra.mxu0 %v1697
        %v2363 = vpop.f32.mrf.mxu0
        %v2364 = vadd.f32 %v2275, %v2363
        %v2365 = vpop.f32.mrf.mxu0
        %v2366 = vadd.f32 %v2277, %v2365
        %2367 = vmatmul.bf16.gmra.mxu0 %v1703
        %v2368 = vpop.f32.mrf.mxu0
        %v2369 = vadd.f32 %v2280, %v2368
        %v2370 = vpop.f32.mrf.mxu0
        %v2371 = vadd.f32 %v2282, %v2370
        %2372 = vmatmul.bf16.gmra.mxu0 %v1709
        %v2373 = vpop.f32.mrf.mxu0
        %v2374 = vadd.f32 %v2285, %v2373
        %v2375 = vpop.f32.mrf.mxu0
        %v2376 = vadd.f32 %v2287, %v2375
        %2377 = vmatmul.bf16.gmra.mxu0 %v1715
        %v2378 = vpop.f32.mrf.mxu0
        %v2379 = vadd.f32 %v2290, %v2378
        %v2380 = vpop.f32.mrf.mxu0
        %v2381 = vadd.f32 %v2292, %v2380
        %2382 = vmatmul.bf16.gmra.mxu0 %v1721
        %v2383 = vpop.f32.mrf.mxu0
        %v2384 = vadd.f32 %v2295, %v2383
        %v2385 = vpop.f32.mrf.mxu0
        %v2386 = vadd.f32 %v2297, %v2385
        %2387 = vmatmul.bf16.gmra.mxu0 %v1727
        %v2388 = vpop.f32.mrf.mxu0
        %v2389 = vadd.f32 %v2300, %v2388
        %v2390 = vpop.f32.mrf.mxu0
        %v2391 = vadd.f32 %v2302, %v2390
        %2392 = vmatmul.bf16.gmra.mxu0 %v1733
        %v2393 = vpop.f32.mrf.mxu0
        %v2394 = vadd.f32 %v2305, %v2393
        %v2395 = vpop.f32.mrf.mxu0
        %v2396 = vadd.f32 %v2307, %v2395
        %2397 = vmatmul.bf16.gmra.mxu0 %v1739
        %v2398 = vpop.f32.mrf.mxu0
        %v2399 = vadd.f32 %v2310, %v2398
        %v2400 = vpop.f32.mrf.mxu0
        %v2401 = vadd.f32 %v2312, %v2400
        %2402 = vmatmul.bf16.gmra.mxu0 %v1745
        %v2403 = vpop.f32.mrf.mxu0
        %v2404 = vadd.f32 %v2315, %v2403
        %v2405 = vpop.f32.mrf.mxu0
        %v2406 = vadd.f32 %v2317, %v2405
        %2407 = vmatmul.bf16.gmra.mxu0 %v1751
        %v2408 = vpop.f32.mrf.mxu0
        %v2409 = vadd.f32 %v2320, %v2408
        %v2410 = vpop.f32.mrf.mxu0
        %v2411 = vadd.f32 %v2322, %v2410
        %2412 = vmatmul.bf16.gmra.mxu0 %v1757
        %v2413 = vpop.f32.mrf.mxu0
        %v2414 = vadd.f32 %v2325, %v2413
        %v2415 = vpop.f32.mrf.mxu0
        %v2416 = vadd.f32 %v2327, %v2415
        %2417 = vmatmul.bf16.gmra.mxu0 %v1763
        %v2418 = vpop.f32.mrf.mxu0
        %v2419 = vadd.f32 %v2330, %v2418
        %v2420 = vpop.f32.mrf.mxu0
        %v2421 = vadd.f32 %v2332, %v2420
        %2422 = vmatmul.bf16.gmra.mxu0 %v1769
        %v2423 = vpop.f32.mrf.mxu0
        %v2424 = vadd.f32 %v2335, %v2423
        %v2425 = vpop.f32.mrf.mxu0
        %v2426 = vadd.f32 %v2337, %v2425
        %2427 = vdwg.mxu0
        %2428 = vmatpush.bf16.msra.mxu0 %v2096
        %2429 = vmatpush.bf16.msra.mxu0 %v2095
        %2430 = vmatpush.bf16.msra.mxu0 %v2094
        %2431 = vmatpush.bf16.msra.mxu0 %v2093
        %2432 = vmatpush.bf16.msra.mxu0 %v2092
        %2433 = vmatpush.bf16.msra.mxu0 %v2091
        %2434 = vmatpush.bf16.msra.mxu0 %v2090
        %2435 = vmatpush.bf16.msra.mxu0 %v2089
        %2436 = vmatmul.bf16.gmra.mxu0 %v1680
        %v2437 = vpop.f32.mrf.mxu0
        %v2438 = vadd.f32 %v2349, %v2437
        %v2439 = vpop.f32.mrf.mxu0
        %v2440 = vadd.f32 %v2351, %v2439
        %2441 = vmatmul.bf16.gmra.mxu0 %v1686
        %v2442 = vpop.f32.mrf.mxu0
        %v2443 = vadd.f32 %v2354, %v2442
        %v2444 = vpop.f32.mrf.mxu0
        %v2445 = vadd.f32 %v2356, %v2444
        %2446 = vmatmul.bf16.gmra.mxu0 %v1692
        %v2447 = vpop.f32.mrf.mxu0
        %v2448 = vadd.f32 %v2359, %v2447
        %v2449 = vpop.f32.mrf.mxu0
        %v2450 = vadd.f32 %v2361, %v2449
        %2451 = vmatmul.bf16.gmra.mxu0 %v1698
        %v2452 = vpop.f32.mrf.mxu0
        %v2453 = vadd.f32 %v2364, %v2452
        %v2454 = vpop.f32.mrf.mxu0
        %v2455 = vadd.f32 %v2366, %v2454
        %2456 = vmatmul.bf16.gmra.mxu0 %v1704
        %v2457 = vpop.f32.mrf.mxu0
        %v2458 = vadd.f32 %v2369, %v2457
        %v2459 = vpop.f32.mrf.mxu0
        %v2460 = vadd.f32 %v2371, %v2459
        %2461 = vmatmul.bf16.gmra.mxu0 %v1710
        %v2462 = vpop.f32.mrf.mxu0
        %v2463 = vadd.f32 %v2374, %v2462
        %v2464 = vpop.f32.mrf.mxu0
        %v2465 = vadd.f32 %v2376, %v2464
        %2466 = vmatmul.bf16.gmra.mxu0 %v1716
        %v2467 = vpop.f32.mrf.mxu0
        %v2468 = vadd.f32 %v2379, %v2467
        %v2469 = vpop.f32.mrf.mxu0
        %v2470 = vadd.f32 %v2381, %v2469
        %2471 = vmatmul.bf16.gmra.mxu0 %v1722
        %v2472 = vpop.f32.mrf.mxu0
        %v2473 = vadd.f32 %v2384, %v2472
        %v2474 = vpop.f32.mrf.mxu0
        %v2475 = vadd.f32 %v2386, %v2474
        %2476 = vmatmul.bf16.gmra.mxu0 %v1728
        %v2477 = vpop.f32.mrf.mxu0
        %v2478 = vadd.f32 %v2389, %v2477
        %v2479 = vpop.f32.mrf.mxu0
        %v2480 = vadd.f32 %v2391, %v2479
        %2481 = vmatmul.bf16.gmra.mxu0 %v1734
        %v2482 = vpop.f32.mrf.mxu0
        %v2483 = vadd.f32 %v2394, %v2482
        %v2484 = vpop.f32.mrf.mxu0
        %v2485 = vadd.f32 %v2396, %v2484
        %2486 = vmatmul.bf16.gmra.mxu0 %v1740
        %v2487 = vpop.f32.mrf.mxu0
        %v2488 = vadd.f32 %v2399, %v2487
        %v2489 = vpop.f32.mrf.mxu0
        %v2490 = vadd.f32 %v2401, %v2489
        %2491 = vmatmul.bf16.gmra.mxu0 %v1746
        %v2492 = vpop.f32.mrf.mxu0
        %v2493 = vadd.f32 %v2404, %v2492
        %v2494 = vpop.f32.mrf.mxu0
        %v2495 = vadd.f32 %v2406, %v2494
        %2496 = vmatmul.bf16.gmra.mxu0 %v1752
        %v2497 = vpop.f32.mrf.mxu0
        %v2498 = vadd.f32 %v2409, %v2497
        %v2499 = vpop.f32.mrf.mxu0
        %v2500 = vadd.f32 %v2411, %v2499
        %2501 = vmatmul.bf16.gmra.mxu0 %v1758
        %v2502 = vpop.f32.mrf.mxu0
        %v2503 = vadd.f32 %v2414, %v2502
        %v2504 = vpop.f32.mrf.mxu0
        %v2505 = vadd.f32 %v2416, %v2504
        %2506 = vmatmul.bf16.gmra.mxu0 %v1764
        %v2507 = vpop.f32.mrf.mxu0
        %v2508 = vadd.f32 %v2419, %v2507
        %v2509 = vpop.f32.mrf.mxu0
        %v2510 = vadd.f32 %v2421, %v2509
        %2511 = vmatmul.bf16.gmra.mxu0 %v1770
        %v2512 = vpop.f32.mrf.mxu0
        %v2513 = vadd.f32 %v2424, %v2512
        %v2514 = vpop.f32.mrf.mxu0
        %v2515 = vadd.f32 %v2426, %v2514
        %2516 = vdwg.mxu0
        %2517 = vmatpush.bf16.msra.mxu0 %v2104
        %2518 = vmatpush.bf16.msra.mxu0 %v2103
        %2519 = vmatpush.bf16.msra.mxu0 %v2102
        %2520 = vmatpush.bf16.msra.mxu0 %v2101
        %2521 = vmatpush.bf16.msra.mxu0 %v2100
        %2522 = vmatpush.bf16.msra.mxu0 %v2099
        %2523 = vmatpush.bf16.msra.mxu0 %v2098
        %2524 = vmatpush.bf16.msra.mxu0 %v2097
        %2525 = vmatmul.bf16.gmra.mxu0 %v1681
        %v2526 = vpop.f32.mrf.mxu0
        %v2527 = vadd.f32 %v2438, %v2526
        %v2528 = vpop.f32.mrf.mxu0
        %v2529 = vadd.f32 %v2440, %v2528
        %2530 = vmatmul.bf16.gmra.mxu0 %v1687
        %v2531 = vpop.f32.mrf.mxu0
        %v2532 = vadd.f32 %v2443, %v2531
        %v2533 = vpop.f32.mrf.mxu0
        %v2534 = vadd.f32 %v2445, %v2533
        %2535 = vmatmul.bf16.gmra.mxu0 %v1693
        %v2536 = vpop.f32.mrf.mxu0
        %v2537 = vadd.f32 %v2448, %v2536
        %v2538 = vpop.f32.mrf.mxu0
        %v2539 = vadd.f32 %v2450, %v2538
        %2540 = vmatmul.bf16.gmra.mxu0 %v1699
        %v2541 = vpop.f32.mrf.mxu0
        %v2542 = vadd.f32 %v2453, %v2541
        %v2543 = vpop.f32.mrf.mxu0
        %v2544 = vadd.f32 %v2455, %v2543
        %2545 = vmatmul.bf16.gmra.mxu0 %v1705
        %v2546 = vpop.f32.mrf.mxu0
        %v2547 = vadd.f32 %v2458, %v2546
        %v2548 = vpop.f32.mrf.mxu0
        %v2549 = vadd.f32 %v2460, %v2548
        %2550 = vmatmul.bf16.gmra.mxu0 %v1711
        %v2551 = vpop.f32.mrf.mxu0
        %v2552 = vadd.f32 %v2463, %v2551
        %v2553 = vpop.f32.mrf.mxu0
        %v2554 = vadd.f32 %v2465, %v2553
        %2555 = vmatmul.bf16.gmra.mxu0 %v1717
        %v2556 = vpop.f32.mrf.mxu0
        %v2557 = vadd.f32 %v2468, %v2556
        %v2558 = vpop.f32.mrf.mxu0
        %v2559 = vadd.f32 %v2470, %v2558
        %2560 = vmatmul.bf16.gmra.mxu0 %v1723
        %v2561 = vpop.f32.mrf.mxu0
        %v2562 = vadd.f32 %v2473, %v2561
        %v2563 = vpop.f32.mrf.mxu0
        %v2564 = vadd.f32 %v2475, %v2563
        %2565 = vmatmul.bf16.gmra.mxu0 %v1729
        %v2566 = vpop.f32.mrf.mxu0
        %v2567 = vadd.f32 %v2478, %v2566
        %v2568 = vpop.f32.mrf.mxu0
        %v2569 = vadd.f32 %v2480, %v2568
        %2570 = vmatmul.bf16.gmra.mxu0 %v1735
        %v2571 = vpop.f32.mrf.mxu0
        %v2572 = vadd.f32 %v2483, %v2571
        %v2573 = vpop.f32.mrf.mxu0
        %v2574 = vadd.f32 %v2485, %v2573
        %2575 = vmatmul.bf16.gmra.mxu0 %v1741
        %v2576 = vpop.f32.mrf.mxu0
        %v2577 = vadd.f32 %v2488, %v2576
        %v2578 = vpop.f32.mrf.mxu0
        %v2579 = vadd.f32 %v2490, %v2578
        %2580 = vmatmul.bf16.gmra.mxu0 %v1747
        %v2581 = vpop.f32.mrf.mxu0
        %v2582 = vadd.f32 %v2493, %v2581
        %v2583 = vpop.f32.mrf.mxu0
        %v2584 = vadd.f32 %v2495, %v2583
        %2585 = vmatmul.bf16.gmra.mxu0 %v1753
        %v2586 = vpop.f32.mrf.mxu0
        %v2587 = vadd.f32 %v2498, %v2586
        %v2588 = vpop.f32.mrf.mxu0
        %v2589 = vadd.f32 %v2500, %v2588
        %2590 = vmatmul.bf16.gmra.mxu0 %v1759
        %v2591 = vpop.f32.mrf.mxu0
        %v2592 = vadd.f32 %v2503, %v2591
        %v2593 = vpop.f32.mrf.mxu0
        %v2594 = vadd.f32 %v2505, %v2593
        %2595 = vmatmul.bf16.gmra.mxu0 %v1765
        %v2596 = vpop.f32.mrf.mxu0
        %v2597 = vadd.f32 %v2508, %v2596
        %v2598 = vpop.f32.mrf.mxu0
        %v2599 = vadd.f32 %v2510, %v2598
        %2600 = vmatmul.bf16.gmra.mxu0 %v1771
        %v2601 = vpop.f32.mrf.mxu0
        %v2602 = vadd.f32 %v2513, %v2601
        %v2603 = vpop.f32.mrf.mxu0
        %v2604 = vadd.f32 %v2515, %v2603
        %2605 = vdwg.mxu0
        %2606 = vmatpush.bf16.msra.mxu0 %v2112
        %2607 = vmatpush.bf16.msra.mxu0 %v2111
        %2608 = vmatpush.bf16.msra.mxu0 %v2110
        %2609 = vmatpush.bf16.msra.mxu0 %v2109
        %2610 = vmatpush.bf16.msra.mxu0 %v2108
        %2611 = vmatpush.bf16.msra.mxu0 %v2107
        %2612 = vmatpush.bf16.msra.mxu0 %v2106
        %2613 = vmatpush.bf16.msra.mxu0 %v2105
        %2614 = vmatmul.bf16.gmra.mxu0 %v1682
        %v2615 = vpop.f32.mrf.mxu0
        %v2616 = vadd.f32 %v2527, %v2615
        %v2617 = vpop.f32.mrf.mxu0
        %v2618 = vadd.f32 %v2529, %v2617
        %2619 = vmatmul.bf16.gmra.mxu0 %v1688
        %v2620 = vpop.f32.mrf.mxu0
        %v2621 = vadd.f32 %v2532, %v2620
        %v2622 = vpop.f32.mrf.mxu0
        %v2623 = vadd.f32 %v2534, %v2622
        %2624 = vmatmul.bf16.gmra.mxu0 %v1694
        %v2625 = vpop.f32.mrf.mxu0
        %v2626 = vadd.f32 %v2537, %v2625
        %v2627 = vpop.f32.mrf.mxu0
        %v2628 = vadd.f32 %v2539, %v2627
        %2629 = vmatmul.bf16.gmra.mxu0 %v1700
        %v2630 = vpop.f32.mrf.mxu0
        %v2631 = vadd.f32 %v2542, %v2630
        %v2632 = vpop.f32.mrf.mxu0
        %v2633 = vadd.f32 %v2544, %v2632
        %2634 = vmatmul.bf16.gmra.mxu0 %v1706
        %v2635 = vpop.f32.mrf.mxu0
        %v2636 = vadd.f32 %v2547, %v2635
        %v2637 = vpop.f32.mrf.mxu0
        %v2638 = vadd.f32 %v2549, %v2637
        %2639 = vmatmul.bf16.gmra.mxu0 %v1712
        %v2640 = vpop.f32.mrf.mxu0
        %v2641 = vadd.f32 %v2552, %v2640
        %v2642 = vpop.f32.mrf.mxu0
        %v2643 = vadd.f32 %v2554, %v2642
        %2644 = vmatmul.bf16.gmra.mxu0 %v1718
        %v2645 = vpop.f32.mrf.mxu0
        %v2646 = vadd.f32 %v2557, %v2645
        %v2647 = vpop.f32.mrf.mxu0
        %v2648 = vadd.f32 %v2559, %v2647
        %2649 = vmatmul.bf16.gmra.mxu0 %v1724
        %v2650 = vpop.f32.mrf.mxu0
        %v2651 = vadd.f32 %v2562, %v2650
        %v2652 = vpop.f32.mrf.mxu0
        %v2653 = vadd.f32 %v2564, %v2652
        %2654 = vmatmul.bf16.gmra.mxu0 %v1730
        %v2655 = vpop.f32.mrf.mxu0
        %v2656 = vadd.f32 %v2567, %v2655
        %v2657 = vpop.f32.mrf.mxu0
        %v2658 = vadd.f32 %v2569, %v2657
        %2659 = vmatmul.bf16.gmra.mxu0 %v1736
        %v2660 = vpop.f32.mrf.mxu0
        %v2661 = vadd.f32 %v2572, %v2660
        %v2662 = vpop.f32.mrf.mxu0
        %v2663 = vadd.f32 %v2574, %v2662
        %2664 = vmatmul.bf16.gmra.mxu0 %v1742
        %v2665 = vpop.f32.mrf.mxu0
        %v2666 = vadd.f32 %v2577, %v2665
        %v2667 = vpop.f32.mrf.mxu0
        %v2668 = vadd.f32 %v2579, %v2667
        %2669 = vmatmul.bf16.gmra.mxu0 %v1748
        %v2670 = vpop.f32.mrf.mxu0
        %v2671 = vadd.f32 %v2582, %v2670
        %v2672 = vpop.f32.mrf.mxu0
        %v2673 = vadd.f32 %v2584, %v2672
        %2674 = vmatmul.bf16.gmra.mxu0 %v1754
        %v2675 = vpop.f32.mrf.mxu0
        %v2676 = vadd.f32 %v2587, %v2675
        %v2677 = vpop.f32.mrf.mxu0
        %v2678 = vadd.f32 %v2589, %v2677
        %2679 = vmatmul.bf16.gmra.mxu0 %v1760
        %v2680 = vpop.f32.mrf.mxu0
        %v2681 = vadd.f32 %v2592, %v2680
        %v2682 = vpop.f32.mrf.mxu0
        %v2683 = vadd.f32 %v2594, %v2682
        %2684 = vmatmul.bf16.gmra.mxu0 %v1766
        %v2685 = vpop.f32.mrf.mxu0
        %v2686 = vadd.f32 %v2597, %v2685
        %v2687 = vpop.f32.mrf.mxu0
        %v2688 = vadd.f32 %v2599, %v2687
        %2689 = vmatmul.bf16.gmra.mxu0 %v1772
        %v2690 = vpop.f32.mrf.mxu0
        %v2691 = vadd.f32 %v2602, %v2690
        %v2692 = vpop.f32.mrf.mxu0
        %v2693 = vadd.f32 %v2604, %v2692
        %2694 = vdwg.mxu0
        %v2695 = vmax.f32 %v2616, -1.0
        %v2696 = vmax.f32 %v2618, -1.0
        %v2697 = vmax.f32 %v2621, -1.0
        %v2698 = vmax.f32 %v2623, -1.0
        %v2699 = vmax.f32 %v2626, -1.0
        %v2700 = vmax.f32 %v2628, -1.0
        %v2701 = vmax.f32 %v2631, -1.0
        %v2702 = vmax.f32 %v2633, -1.0
        %v2703 = vmax.f32 %v2636, -1.0
        %v2704 = vmax.f32 %v2638, -1.0
        %v2705 = vmax.f32 %v2641, -1.0
        %v2706 = vmax.f32 %v2643, -1.0
        %v2707 = vmax.f32 %v2646, -1.0
        %v2708 = vmax.f32 %v2648, -1.0
        %v2709 = vmax.f32 %v2651, -1.0
        %v2710 = vmax.f32 %v2653, -1.0
        %v2711 = vmax.f32 %v2656, -1.0
        %v2712 = vmax.f32 %v2658, -1.0
        %v2713 = vmax.f32 %v2661, -1.0
        %v2714 = vmax.f32 %v2663, -1.0
        %v2715 = vmax.f32 %v2666, -1.0
        %v2716 = vmax.f32 %v2668, -1.0
        %v2717 = vmax.f32 %v2671, -1.0
        %v2718 = vmax.f32 %v2673, -1.0
        %v2719 = vmax.f32 %v2676, -1.0
        %v2720 = vmax.f32 %v2678, -1.0
        %v2721 = vmax.f32 %v2681, -1.0
        %v2722 = vmax.f32 %v2683, -1.0
        %v2723 = vmax.f32 %v2686, -1.0
        %v2724 = vmax.f32 %v2688, -1.0
        %v2725 = vmax.f32 %v2691, -1.0
        %v2726 = vmax.f32 %v2693, -1.0
        %v2727 = vmin.f32 %v2695, 1.0
        %v2728 = vmin.f32 %v2696, 1.0
        %v2729 = vmin.f32 %v2697, 1.0
        %v2730 = vmin.f32 %v2698, 1.0
        %v2731 = vmin.f32 %v2699, 1.0
        %v2732 = vmin.f32 %v2700, 1.0
        %v2733 = vmin.f32 %v2701, 1.0
        %v2734 = vmin.f32 %v2702, 1.0
        %v2735 = vmin.f32 %v2703, 1.0
        %v2736 = vmin.f32 %v2704, 1.0
        %v2737 = vmin.f32 %v2705, 1.0
        %v2738 = vmin.f32 %v2706, 1.0
        %v2739 = vmin.f32 %v2707, 1.0
        %v2740 = vmin.f32 %v2708, 1.0
        %v2741 = vmin.f32 %v2709, 1.0
        %v2742 = vmin.f32 %v2710, 1.0
        %v2743 = vmin.f32 %v2711, 1.0
        %v2744 = vmin.f32 %v2712, 1.0
        %v2745 = vmin.f32 %v2713, 1.0
        %v2746 = vmin.f32 %v2714, 1.0
        %v2747 = vmin.f32 %v2715, 1.0
        %v2748 = vmin.f32 %v2716, 1.0
        %v2749 = vmin.f32 %v2717, 1.0
        %v2750 = vmin.f32 %v2718, 1.0
        %v2751 = vmin.f32 %v2719, 1.0
        %v2752 = vmin.f32 %v2720, 1.0
        %v2753 = vmin.f32 %v2721, 1.0
        %v2754 = vmin.f32 %v2722, 1.0
        %v2755 = vmin.f32 %v2723, 1.0
        %v2756 = vmin.f32 %v2724, 1.0
        %v2757 = vmin.f32 %v2725, 1.0
        %v2758 = vmin.f32 %v2726, 1.0
        %v2759 = vmul.f32 %v2727, 7.0
        %v2760 = vmul.f32 %v2728, 7.0
        %v2761 = vmul.f32 %v2729, 7.0
        %v2762 = vmul.f32 %v2730, 7.0
        %v2763 = vmul.f32 %v2731, 7.0
        %v2764 = vmul.f32 %v2732, 7.0
        %v2765 = vmul.f32 %v2733, 7.0
        %v2766 = vmul.f32 %v2734, 7.0
        %v2767 = vmul.f32 %v2735, 7.0
        %v2768 = vmul.f32 %v2736, 7.0
        %v2769 = vmul.f32 %v2737, 7.0
        %v2770 = vmul.f32 %v2738, 7.0
        %v2771 = vmul.f32 %v2739, 7.0
        %v2772 = vmul.f32 %v2740, 7.0
        %v2773 = vmul.f32 %v2741, 7.0
        %v2774 = vmul.f32 %v2742, 7.0
        %v2775 = vmul.f32 %v2743, 7.0
        %v2776 = vmul.f32 %v2744, 7.0
        %v2777 = vmul.f32 %v2745, 7.0
        %v2778 = vmul.f32 %v2746, 7.0
        %v2779 = vmul.f32 %v2747, 7.0
        %v2780 = vmul.f32 %v2748, 7.0
        %v2781 = vmul.f32 %v2749, 7.0
        %v2782 = vmul.f32 %v2750, 7.0
        %v2783 = vmul.f32 %v2751, 7.0
        %v2784 = vmul.f32 %v2752, 7.0
        %v2785 = vmul.f32 %v2753, 7.0
        %v2786 = vmul.f32 %v2754, 7.0
        %v2787 = vmul.f32 %v2755, 7.0
        %v2788 = vmul.f32 %v2756, 7.0
        %v2789 = vmul.f32 %v2757, 7.0
        %v2790 = vmul.f32 %v2758, 7.0
        %v2791 = vround.ne.pseudo %v2759
        %v2792 = vround.ne.pseudo %v2760
        %v2793 = vround.ne.pseudo %v2761
        %v2794 = vround.ne.pseudo %v2762
        %v2795 = vround.ne.pseudo %v2763
        %v2796 = vround.ne.pseudo %v2764
        %v2797 = vround.ne.pseudo %v2765
        %v2798 = vround.ne.pseudo %v2766
        %v2799 = vround.ne.pseudo %v2767
        %v2800 = vround.ne.pseudo %v2768
        %v2801 = vround.ne.pseudo %v2769
        %v2802 = vround.ne.pseudo %v2770
        %v2803 = vround.ne.pseudo %v2771
        %v2804 = vround.ne.pseudo %v2772
        %v2805 = vround.ne.pseudo %v2773
        %v2806 = vround.ne.pseudo %v2774
        %v2807 = vround.ne.pseudo %v2775
        %v2808 = vround.ne.pseudo %v2776
        %v2809 = vround.ne.pseudo %v2777
        %v2810 = vround.ne.pseudo %v2778
        %v2811 = vround.ne.pseudo %v2779
        %v2812 = vround.ne.pseudo %v2780
        %v2813 = vround.ne.pseudo %v2781
        %v2814 = vround.ne.pseudo %v2782
        %v2815 = vround.ne.pseudo %v2783
        %v2816 = vround.ne.pseudo %v2784
        %v2817 = vround.ne.pseudo %v2785
        %v2818 = vround.ne.pseudo %v2786
        %v2819 = vround.ne.pseudo %v2787
        %v2820 = vround.ne.pseudo %v2788
        %v2821 = vround.ne.pseudo %v2789
        %v2822 = vround.ne.pseudo %v2790
        %v2823 = vrcp.pop 7.0
        %v2824 = vmul.f32 7.0, %v2823
        %v2825 = vsub.f32 1.0, %v2824
        %v2826 = vmul.f32 %v2823, %v2825
        %v2827 = vadd.f32 %v2823, %v2826
        %vm2828 = vweird.f32 %v2823
        %v2829 = vsel %vm2828, %v2823, %v2827
        %v2830 = vmul.f32 %v2791, %v2829
        %v2831 = vmul.f32 %v2792, %v2829
        %v2832 = vmul.f32 %v2793, %v2829
        %v2833 = vmul.f32 %v2794, %v2829
        %v2834 = vmul.f32 %v2795, %v2829
        %v2835 = vmul.f32 %v2796, %v2829
        %v2836 = vmul.f32 %v2797, %v2829
        %v2837 = vmul.f32 %v2798, %v2829
        %v2838 = vmul.f32 %v2799, %v2829
        %v2839 = vmul.f32 %v2800, %v2829
        %v2840 = vmul.f32 %v2801, %v2829
        %v2841 = vmul.f32 %v2802, %v2829
        %v2842 = vmul.f32 %v2803, %v2829
        %v2843 = vmul.f32 %v2804, %v2829
        %v2844 = vmul.f32 %v2805, %v2829
        %v2845 = vmul.f32 %v2806, %v2829
        %v2846 = vmul.f32 %v2807, %v2829
        %v2847 = vmul.f32 %v2808, %v2829
        %v2848 = vmul.f32 %v2809, %v2829
        %v2849 = vmul.f32 %v2810, %v2829
        %v2850 = vmul.f32 %v2811, %v2829
        %v2851 = vmul.f32 %v2812, %v2829
        %v2852 = vmul.f32 %v2813, %v2829
        %v2853 = vmul.f32 %v2814, %v2829
        %v2854 = vmul.f32 %v2815, %v2829
        %v2855 = vmul.f32 %v2816, %v2829
        %v2856 = vmul.f32 %v2817, %v2829
        %v2857 = vmul.f32 %v2818, %v2829
        %v2858 = vmul.f32 %v2819, %v2829
        %v2859 = vmul.f32 %v2820, %v2829
        %v2860 = vmul.f32 %v2821, %v2829
        %v2861 = vmul.f32 %v2822, %v2829
        %v2862 = vpack.c.bf16 %v2831, %v2830
        %v2863 = vpack.c.bf16 %v2833, %v2832
        %v2864 = vpack.c.bf16 %v2835, %v2834
        %v2865 = vpack.c.bf16 %v2837, %v2836
        %v2866 = vpack.c.bf16 %v2839, %v2838
        %v2867 = vpack.c.bf16 %v2841, %v2840
        %v2868 = vpack.c.bf16 %v2843, %v2842
        %v2869 = vpack.c.bf16 %v2845, %v2844
        %v2870 = vpack.c.bf16 %v2847, %v2846
        %v2871 = vpack.c.bf16 %v2849, %v2848
        %v2872 = vpack.c.bf16 %v2851, %v2850
        %v2873 = vpack.c.bf16 %v2853, %v2852
        %v2874 = vpack.c.bf16 %v2855, %v2854
        %v2875 = vpack.c.bf16 %v2857, %v2856
        %v2876 = vpack.c.bf16 %v2859, %v2858
        %v2877 = vpack.c.bf16 %v2861, %v2860
        %v2878 = vld [vmem:[#allocation7] sm:$0xf]
        %v2879 = vld [vmem:[#allocation7 + $0x4] sm:$0xf]
        %v2880 = vld [vmem:[#allocation7 + $0x8] sm:$0xf]
        %v2881 = vld [vmem:[#allocation7 + $0xc] sm:$0xf]
        %v2882 = vld [vmem:[#allocation7 + $0x10] sm:$0xf]
        %v2883 = vld [vmem:[#allocation7 + $0x14] sm:$0xf]
        %v2884 = vld [vmem:[#allocation7 + $0x18] sm:$0xf]
        %v2885 = vld [vmem:[#allocation7 + $0x1c] sm:$0xf]
        %v2886 = vld [vmem:[#allocation7 + $0x20] sm:$0xf]
        %v2887 = vld [vmem:[#allocation7 + $0x24] sm:$0xf]
        %v2888 = vld [vmem:[#allocation7 + $0x28] sm:$0xf]
        %v2889 = vld [vmem:[#allocation7 + $0x2c] sm:$0xf]
        %v2890 = vld [vmem:[#allocation7 + $0x30] sm:$0xf]
        %v2891 = vld [vmem:[#allocation7 + $0x34] sm:$0xf]
        %v2892 = vld [vmem:[#allocation7 + $0x38] sm:$0xf]
        %v2893 = vld [vmem:[#allocation7 + $0x3c] sm:$0xf]
        %v2894 = vld [vmem:[%s4] sm:$0x1]
        %v2896 = vperm.slane %v2894, 0
        %v2914 = vunpack.c.l.b16 %v2878
        %v2915 = vunpack.c.l.b16 %v2879
        %v2916 = vunpack.c.l.b16 %v2880
        %v2917 = vunpack.c.l.b16 %v2881
        %v2918 = vunpack.c.l.b16 %v2882
        %v2919 = vunpack.c.l.b16 %v2883
        %v2920 = vunpack.c.l.b16 %v2884
        %v2921 = vunpack.c.l.b16 %v2885
        %v2922 = vunpack.c.l.b16 %v2886
        %v2923 = vunpack.c.l.b16 %v2887
        %v2924 = vunpack.c.l.b16 %v2888
        %v2925 = vunpack.c.l.b16 %v2889
        %v2926 = vunpack.c.l.b16 %v2890
        %v2927 = vunpack.c.l.b16 %v2891
        %v2928 = vunpack.c.l.b16 %v2892
        %v2929 = vunpack.c.l.b16 %v2893
        %v2930 = vpack.c.b16 %v2915, %v2914
        %v2931 = vpack.c.b16 %v2917, %v2916
        %v2932 = vpack.c.b16 %v2919, %v2918
        %v2933 = vpack.c.b16 %v2921, %v2920
        %v2934 = vpack.c.b16 %v2923, %v2922
        %v2935 = vpack.c.b16 %v2925, %v2924
        %v2936 = vpack.c.b16 %v2927, %v2926
        %v2937 = vpack.c.b16 %v2929, %v2928
        %2946 = vmatpush.bf16.msra.mxu0 %v2937
        %2947 = vmatpush.bf16.msra.mxu0 %v2936
        %2948 = vmatpush.bf16.msra.mxu0 %v2935
        %2949 = vmatpush.bf16.msra.mxu0 %v2934
        %2950 = vmatpush.bf16.msra.mxu0 %v2933
        %2951 = vmatpush.bf16.msra.mxu0 %v2932
        %2952 = vmatpush.bf16.msra.mxu0 %v2931
        %2953 = vmatpush.bf16.msra.mxu0 %v2930
        %2954 = vmatmul.bf16.gmra.mxu0 %v2862
        %v2955 = vpop.f32.mrf.mxu0
        %v2956 = vadd.f32 %v2896, %v2955
        %v2957 = vpop.f32.mrf.mxu0
        %v2958 = vadd.f32 %v2896, %v2957
        %2959 = vmatmul.bf16.gmra.mxu0 %v2863
        %v2960 = vpop.f32.mrf.mxu0
        %v2961 = vadd.f32 %v2896, %v2960
        %v2962 = vpop.f32.mrf.mxu0
        %v2963 = vadd.f32 %v2896, %v2962
        %2964 = vmatmul.bf16.gmra.mxu0 %v2864
        %v2965 = vpop.f32.mrf.mxu0
        %v2966 = vadd.f32 %v2896, %v2965
        %v2967 = vpop.f32.mrf.mxu0
        %v2968 = vadd.f32 %v2896, %v2967
        %2969 = vmatmul.bf16.gmra.mxu0 %v2865
        %v2970 = vpop.f32.mrf.mxu0
        %v2971 = vadd.f32 %v2896, %v2970
        %v2972 = vpop.f32.mrf.mxu0
        %v2973 = vadd.f32 %v2896, %v2972
        %2974 = vmatmul.bf16.gmra.mxu0 %v2866
        %v2975 = vpop.f32.mrf.mxu0
        %v2976 = vadd.f32 %v2896, %v2975
        %v2977 = vpop.f32.mrf.mxu0
        %v2978 = vadd.f32 %v2896, %v2977
        %2979 = vmatmul.bf16.gmra.mxu0 %v2867
        %v2980 = vpop.f32.mrf.mxu0
        %v2981 = vadd.f32 %v2896, %v2980
        %v2982 = vpop.f32.mrf.mxu0
        %v2983 = vadd.f32 %v2896, %v2982
        %2984 = vmatmul.bf16.gmra.mxu0 %v2868
        %v2985 = vpop.f32.mrf.mxu0
        %v2986 = vadd.f32 %v2896, %v2985
        %v2987 = vpop.f32.mrf.mxu0
        %v2988 = vadd.f32 %v2896, %v2987
        %2989 = vmatmul.bf16.gmra.mxu0 %v2869
        %v2990 = vpop.f32.mrf.mxu0
        %v2991 = vadd.f32 %v2896, %v2990
        %v2992 = vpop.f32.mrf.mxu0
        %v2993 = vadd.f32 %v2896, %v2992
        %2994 = vmatmul.bf16.gmra.mxu0 %v2870
        %v2995 = vpop.f32.mrf.mxu0
        %v2996 = vadd.f32 %v2896, %v2995
        %v2997 = vpop.f32.mrf.mxu0
        %v2998 = vadd.f32 %v2896, %v2997
        %2999 = vmatmul.bf16.gmra.mxu0 %v2871
        %v3000 = vpop.f32.mrf.mxu0
        %v3001 = vadd.f32 %v2896, %v3000
        %v3002 = vpop.f32.mrf.mxu0
        %v3003 = vadd.f32 %v2896, %v3002
        %3004 = vmatmul.bf16.gmra.mxu0 %v2872
        %v3005 = vpop.f32.mrf.mxu0
        %v3006 = vadd.f32 %v2896, %v3005
        %v3007 = vpop.f32.mrf.mxu0
        %v3008 = vadd.f32 %v2896, %v3007
        %3009 = vmatmul.bf16.gmra.mxu0 %v2873
        %v3010 = vpop.f32.mrf.mxu0
        %v3011 = vadd.f32 %v2896, %v3010
        %v3012 = vpop.f32.mrf.mxu0
        %v3013 = vadd.f32 %v2896, %v3012
        %3014 = vmatmul.bf16.gmra.mxu0 %v2874
        %v3015 = vpop.f32.mrf.mxu0
        %v3016 = vadd.f32 %v2896, %v3015
        %v3017 = vpop.f32.mrf.mxu0
        %v3018 = vadd.f32 %v2896, %v3017
        %3019 = vmatmul.bf16.gmra.mxu0 %v2875
        %v3020 = vpop.f32.mrf.mxu0
        %v3021 = vadd.f32 %v2896, %v3020
        %v3022 = vpop.f32.mrf.mxu0
        %v3023 = vadd.f32 %v2896, %v3022
        %3024 = vmatmul.bf16.gmra.mxu0 %v2876
        %v3025 = vpop.f32.mrf.mxu0
        %v3026 = vadd.f32 %v2896, %v3025
        %v3027 = vpop.f32.mrf.mxu0
        %v3028 = vadd.f32 %v2896, %v3027
        %3029 = vmatmul.bf16.gmra.mxu0 %v2877
        %v3030 = vpop.f32.mrf.mxu0
        %v3031 = vadd.f32 %v2896, %v3030
        %v3032 = vpop.f32.mrf.mxu0
        %v3033 = vadd.f32 %v2896, %v3032
        %3034 = vdwg.mxu0
        %v3035 = vmax.f32 %v2956, -1.0
        %v3036 = vmax.f32 %v2958, -1.0
        %v3037 = vmax.f32 %v2961, -1.0
        %v3038 = vmax.f32 %v2963, -1.0
        %v3039 = vmax.f32 %v2966, -1.0
        %v3040 = vmax.f32 %v2968, -1.0
        %v3041 = vmax.f32 %v2971, -1.0
        %v3042 = vmax.f32 %v2973, -1.0
        %v3043 = vmax.f32 %v2976, -1.0
        %v3044 = vmax.f32 %v2978, -1.0
        %v3045 = vmax.f32 %v2981, -1.0
        %v3046 = vmax.f32 %v2983, -1.0
        %v3047 = vmax.f32 %v2986, -1.0
        %v3048 = vmax.f32 %v2988, -1.0
        %v3049 = vmax.f32 %v2991, -1.0
        %v3050 = vmax.f32 %v2993, -1.0
        %v3051 = vmax.f32 %v2996, -1.0
        %v3052 = vmax.f32 %v2998, -1.0
        %v3053 = vmax.f32 %v3001, -1.0
        %v3054 = vmax.f32 %v3003, -1.0
        %v3055 = vmax.f32 %v3006, -1.0
        %v3056 = vmax.f32 %v3008, -1.0
        %v3057 = vmax.f32 %v3011, -1.0
        %v3058 = vmax.f32 %v3013, -1.0
        %v3059 = vmax.f32 %v3016, -1.0
        %v3060 = vmax.f32 %v3018, -1.0
        %v3061 = vmax.f32 %v3021, -1.0
        %v3062 = vmax.f32 %v3023, -1.0
        %v3063 = vmax.f32 %v3026, -1.0
        %v3064 = vmax.f32 %v3028, -1.0
        %v3065 = vmax.f32 %v3031, -1.0
        %v3066 = vmax.f32 %v3033, -1.0
        %v3067 = vmin.f32 %v3035, 1.0
        %v3068 = vmin.f32 %v3036, 1.0
        %v3069 = vmin.f32 %v3037, 1.0
        %v3070 = vmin.f32 %v3038, 1.0
        %v3071 = vmin.f32 %v3039, 1.0
        %v3072 = vmin.f32 %v3040, 1.0
        %v3073 = vmin.f32 %v3041, 1.0
        %v3074 = vmin.f32 %v3042, 1.0
        %v3075 = vmin.f32 %v3043, 1.0
        %v3076 = vmin.f32 %v3044, 1.0
        %v3077 = vmin.f32 %v3045, 1.0
        %v3078 = vmin.f32 %v3046, 1.0
        %v3079 = vmin.f32 %v3047, 1.0
        %v3080 = vmin.f32 %v3048, 1.0
        %v3081 = vmin.f32 %v3049, 1.0
        %v3082 = vmin.f32 %v3050, 1.0
        %v3083 = vmin.f32 %v3051, 1.0
        %v3084 = vmin.f32 %v3052, 1.0
        %v3085 = vmin.f32 %v3053, 1.0
        %v3086 = vmin.f32 %v3054, 1.0
        %v3087 = vmin.f32 %v3055, 1.0
        %v3088 = vmin.f32 %v3056, 1.0
        %v3089 = vmin.f32 %v3057, 1.0
        %v3090 = vmin.f32 %v3058, 1.0
        %v3091 = vmin.f32 %v3059, 1.0
        %v3092 = vmin.f32 %v3060, 1.0
        %v3093 = vmin.f32 %v3061, 1.0
        %v3094 = vmin.f32 %v3062, 1.0
        %v3095 = vmin.f32 %v3063, 1.0
        %v3096 = vmin.f32 %v3064, 1.0
        %v3097 = vmin.f32 %v3065, 1.0
        %v3098 = vmin.f32 %v3066, 1.0
        %v3099 = vmul.f32 %v3067, 7.0
        %v3100 = vmul.f32 %v3068, 7.0
        %v3101 = vmul.f32 %v3069, 7.0
        %v3102 = vmul.f32 %v3070, 7.0
        %v3103 = vmul.f32 %v3071, 7.0
        %v3104 = vmul.f32 %v3072, 7.0
        %v3105 = vmul.f32 %v3073, 7.0
        %v3106 = vmul.f32 %v3074, 7.0
        %v3107 = vmul.f32 %v3075, 7.0
        %v3108 = vmul.f32 %v3076, 7.0
        %v3109 = vmul.f32 %v3077, 7.0
        %v3110 = vmul.f32 %v3078, 7.0
        %v3111 = vmul.f32 %v3079, 7.0
        %v3112 = vmul.f32 %v3080, 7.0
        %v3113 = vmul.f32 %v3081, 7.0
        %v3114 = vmul.f32 %v3082, 7.0
        %v3115 = vmul.f32 %v3083, 7.0
        %v3116 = vmul.f32 %v3084, 7.0
        %v3117 = vmul.f32 %v3085, 7.0
        %v3118 = vmul.f32 %v3086, 7.0
        %v3119 = vmul.f32 %v3087, 7.0
        %v3120 = vmul.f32 %v3088, 7.0
        %v3121 = vmul.f32 %v3089, 7.0
        %v3122 = vmul.f32 %v3090, 7.0
        %v3123 = vmul.f32 %v3091, 7.0
        %v3124 = vmul.f32 %v3092, 7.0
        %v3125 = vmul.f32 %v3093, 7.0
        %v3126 = vmul.f32 %v3094, 7.0
        %v3127 = vmul.f32 %v3095, 7.0
        %v3128 = vmul.f32 %v3096, 7.0
        %v3129 = vmul.f32 %v3097, 7.0
        %v3130 = vmul.f32 %v3098, 7.0
        %v3131 = vround.ne.pseudo %v3099
        %v3132 = vround.ne.pseudo %v3100
        %v3133 = vround.ne.pseudo %v3101
        %v3134 = vround.ne.pseudo %v3102
        %v3135 = vround.ne.pseudo %v3103
        %v3136 = vround.ne.pseudo %v3104
        %v3137 = vround.ne.pseudo %v3105
        %v3138 = vround.ne.pseudo %v3106
        %v3139 = vround.ne.pseudo %v3107
        %v3140 = vround.ne.pseudo %v3108
        %v3141 = vround.ne.pseudo %v3109
        %v3142 = vround.ne.pseudo %v3110
        %v3143 = vround.ne.pseudo %v3111
        %v3144 = vround.ne.pseudo %v3112
        %v3145 = vround.ne.pseudo %v3113
        %v3146 = vround.ne.pseudo %v3114
        %v3147 = vround.ne.pseudo %v3115
        %v3148 = vround.ne.pseudo %v3116
        %v3149 = vround.ne.pseudo %v3117
        %v3150 = vround.ne.pseudo %v3118
        %v3151 = vround.ne.pseudo %v3119
        %v3152 = vround.ne.pseudo %v3120
        %v3153 = vround.ne.pseudo %v3121
        %v3154 = vround.ne.pseudo %v3122
        %v3155 = vround.ne.pseudo %v3123
        %v3156 = vround.ne.pseudo %v3124
        %v3157 = vround.ne.pseudo %v3125
        %v3158 = vround.ne.pseudo %v3126
        %v3159 = vround.ne.pseudo %v3127
        %v3160 = vround.ne.pseudo %v3128
        %v3161 = vround.ne.pseudo %v3129
        %v3162 = vround.ne.pseudo %v3130
        %v3163 = vmul.f32 %v3131, %v2829
        %v3164 = vmul.f32 %v3132, %v2829
        %v3165 = vmul.f32 %v3133, %v2829
        %v3166 = vmul.f32 %v3134, %v2829
        %v3167 = vmul.f32 %v3135, %v2829
        %v3168 = vmul.f32 %v3136, %v2829
        %v3169 = vmul.f32 %v3137, %v2829
        %v3170 = vmul.f32 %v3138, %v2829
        %v3171 = vmul.f32 %v3139, %v2829
        %v3172 = vmul.f32 %v3140, %v2829
        %v3173 = vmul.f32 %v3141, %v2829
        %v3174 = vmul.f32 %v3142, %v2829
        %v3175 = vmul.f32 %v3143, %v2829
        %v3176 = vmul.f32 %v3144, %v2829
        %v3177 = vmul.f32 %v3145, %v2829
        %v3178 = vmul.f32 %v3146, %v2829
        %v3179 = vmul.f32 %v3147, %v2829
        %v3180 = vmul.f32 %v3148, %v2829
        %v3181 = vmul.f32 %v3149, %v2829
        %v3182 = vmul.f32 %v3150, %v2829
        %v3183 = vmul.f32 %v3151, %v2829
        %v3184 = vmul.f32 %v3152, %v2829
        %v3185 = vmul.f32 %v3153, %v2829
        %v3186 = vmul.f32 %v3154, %v2829
        %v3187 = vmul.f32 %v3155, %v2829
        %v3188 = vmul.f32 %v3156, %v2829
        %v3189 = vmul.f32 %v3157, %v2829
        %v3190 = vmul.f32 %v3158, %v2829
        %v3191 = vmul.f32 %v3159, %v2829
        %v3192 = vmul.f32 %v3160, %v2829
        %v3193 = vmul.f32 %v3161, %v2829
        %v3194 = vmul.f32 %v3162, %v2829
        %v3195 = vpack.c.bf16 %v3164, %v3163
        %v3196 = vpack.c.bf16 %v3166, %v3165
        %v3197 = vpack.c.bf16 %v3168, %v3167
        %v3198 = vpack.c.bf16 %v3170, %v3169
        %v3199 = vpack.c.bf16 %v3172, %v3171
        %v3200 = vpack.c.bf16 %v3174, %v3173
        %v3201 = vpack.c.bf16 %v3176, %v3175
        %v3202 = vpack.c.bf16 %v3178, %v3177
        %v3203 = vpack.c.bf16 %v3180, %v3179
        %v3204 = vpack.c.bf16 %v3182, %v3181
        %v3205 = vpack.c.bf16 %v3184, %v3183
        %v3206 = vpack.c.bf16 %v3186, %v3185
        %v3207 = vpack.c.bf16 %v3188, %v3187
        %v3208 = vpack.c.bf16 %v3190, %v3189
        %v3209 = vpack.c.bf16 %v3192, %v3191
        %v3210 = vpack.c.bf16 %v3194, %v3193
        %v3211 = vld [vmem:[#allocation8] sm:$0xf]
        %v3212 = vld [vmem:[#allocation8 + $0x4] sm:$0xf]
        %v3213 = vld [vmem:[#allocation8 + $0x8] sm:$0xf]
        %v3214 = vld [vmem:[#allocation8 + $0xc] sm:$0xf]
        %v3215 = vld [vmem:[#allocation8 + $0x10] sm:$0xf]
        %v3216 = vld [vmem:[#allocation8 + $0x14] sm:$0xf]
        %v3217 = vld [vmem:[#allocation8 + $0x18] sm:$0xf]
        %v3218 = vld [vmem:[#allocation8 + $0x1c] sm:$0xf]
        %v3219 = vld [vmem:[#allocation8 + $0x20] sm:$0xf]
        %v3220 = vld [vmem:[#allocation8 + $0x24] sm:$0xf]
        %v3221 = vld [vmem:[#allocation8 + $0x28] sm:$0xf]
        %v3222 = vld [vmem:[#allocation8 + $0x2c] sm:$0xf]
        %v3223 = vld [vmem:[#allocation8 + $0x30] sm:$0xf]
        %v3224 = vld [vmem:[#allocation8 + $0x34] sm:$0xf]
        %v3225 = vld [vmem:[#allocation8 + $0x38] sm:$0xf]
        %v3226 = vld [vmem:[#allocation8 + $0x3c] sm:$0xf]
        %v3227 = vld [vmem:[%s6] sm:$0x1]
        %v3229 = vperm.slane %v3227, 0
        %v3247 = vunpack.c.l.b16 %v3211
        %v3248 = vunpack.c.l.b16 %v3212
        %v3249 = vunpack.c.l.b16 %v3213
        %v3250 = vunpack.c.l.b16 %v3214
        %v3251 = vunpack.c.l.b16 %v3215
        %v3252 = vunpack.c.l.b16 %v3216
        %v3253 = vunpack.c.l.b16 %v3217
        %v3254 = vunpack.c.l.b16 %v3218
        %v3255 = vunpack.c.l.b16 %v3219
        %v3256 = vunpack.c.l.b16 %v3220
        %v3257 = vunpack.c.l.b16 %v3221
        %v3258 = vunpack.c.l.b16 %v3222
        %v3259 = vunpack.c.l.b16 %v3223
        %v3260 = vunpack.c.l.b16 %v3224
        %v3261 = vunpack.c.l.b16 %v3225
        %v3262 = vunpack.c.l.b16 %v3226
        %v3263 = vpack.c.b16 %v3248, %v3247
        %v3264 = vpack.c.b16 %v3250, %v3249
        %v3265 = vpack.c.b16 %v3252, %v3251
        %v3266 = vpack.c.b16 %v3254, %v3253
        %v3267 = vpack.c.b16 %v3256, %v3255
        %v3268 = vpack.c.b16 %v3258, %v3257
        %v3269 = vpack.c.b16 %v3260, %v3259
        %v3270 = vpack.c.b16 %v3262, %v3261
        %3279 = vmatpush.bf16.msra.mxu0 %v3270
        %3280 = vmatpush.bf16.msra.mxu0 %v3269
        %3281 = vmatpush.bf16.msra.mxu0 %v3268
        %3282 = vmatpush.bf16.msra.mxu0 %v3267
        %3283 = vmatpush.bf16.msra.mxu0 %v3266
        %3284 = vmatpush.bf16.msra.mxu0 %v3265
        %3285 = vmatpush.bf16.msra.mxu0 %v3264
        %3286 = vmatpush.bf16.msra.mxu0 %v3263
        %3287 = vmatmul.bf16.gmra.mxu0 %v3195
        %v3288 = vpop.f32.mrf.mxu0
        %v3289 = vadd.f32 %v3229, %v3288
        %v3290 = vpop.f32.mrf.mxu0
        %v3291 = vadd.f32 %v3229, %v3290
        %3292 = vmatmul.bf16.gmra.mxu0 %v3196
        %v3293 = vpop.f32.mrf.mxu0
        %v3294 = vadd.f32 %v3229, %v3293
        %v3295 = vpop.f32.mrf.mxu0
        %v3296 = vadd.f32 %v3229, %v3295
        %3297 = vmatmul.bf16.gmra.mxu0 %v3197
        %v3298 = vpop.f32.mrf.mxu0
        %v3299 = vadd.f32 %v3229, %v3298
        %v3300 = vpop.f32.mrf.mxu0
        %v3301 = vadd.f32 %v3229, %v3300
        %3302 = vmatmul.bf16.gmra.mxu0 %v3198
        %v3303 = vpop.f32.mrf.mxu0
        %v3304 = vadd.f32 %v3229, %v3303
        %v3305 = vpop.f32.mrf.mxu0
        %v3306 = vadd.f32 %v3229, %v3305
        %3307 = vmatmul.bf16.gmra.mxu0 %v3199
        %v3308 = vpop.f32.mrf.mxu0
        %v3309 = vadd.f32 %v3229, %v3308
        %v3310 = vpop.f32.mrf.mxu0
        %v3311 = vadd.f32 %v3229, %v3310
        %3312 = vmatmul.bf16.gmra.mxu0 %v3200
        %v3313 = vpop.f32.mrf.mxu0
        %v3314 = vadd.f32 %v3229, %v3313
        %v3315 = vpop.f32.mrf.mxu0
        %v3316 = vadd.f32 %v3229, %v3315
        %3317 = vmatmul.bf16.gmra.mxu0 %v3201
        %v3318 = vpop.f32.mrf.mxu0
        %v3319 = vadd.f32 %v3229, %v3318
        %v3320 = vpop.f32.mrf.mxu0
        %v3321 = vadd.f32 %v3229, %v3320
        %3322 = vmatmul.bf16.gmra.mxu0 %v3202
        %v3323 = vpop.f32.mrf.mxu0
        %v3324 = vadd.f32 %v3229, %v3323
        %v3325 = vpop.f32.mrf.mxu0
        %v3326 = vadd.f32 %v3229, %v3325
        %3327 = vmatmul.bf16.gmra.mxu0 %v3203
        %v3328 = vpop.f32.mrf.mxu0
        %v3329 = vadd.f32 %v3229, %v3328
        %v3330 = vpop.f32.mrf.mxu0
        %v3331 = vadd.f32 %v3229, %v3330
        %3332 = vmatmul.bf16.gmra.mxu0 %v3204
        %v3333 = vpop.f32.mrf.mxu0
        %v3334 = vadd.f32 %v3229, %v3333
        %v3335 = vpop.f32.mrf.mxu0
        %v3336 = vadd.f32 %v3229, %v3335
        %3337 = vmatmul.bf16.gmra.mxu0 %v3205
        %v3338 = vpop.f32.mrf.mxu0
        %v3339 = vadd.f32 %v3229, %v3338
        %v3340 = vpop.f32.mrf.mxu0
        %v3341 = vadd.f32 %v3229, %v3340
        %3342 = vmatmul.bf16.gmra.mxu0 %v3206
        %v3343 = vpop.f32.mrf.mxu0
        %v3344 = vadd.f32 %v3229, %v3343
        %v3345 = vpop.f32.mrf.mxu0
        %v3346 = vadd.f32 %v3229, %v3345
        %3347 = vmatmul.bf16.gmra.mxu0 %v3207
        %v3348 = vpop.f32.mrf.mxu0
        %v3349 = vadd.f32 %v3229, %v3348
        %v3350 = vpop.f32.mrf.mxu0
        %v3351 = vadd.f32 %v3229, %v3350
        %3352 = vmatmul.bf16.gmra.mxu0 %v3208
        %v3353 = vpop.f32.mrf.mxu0
        %v3354 = vadd.f32 %v3229, %v3353
        %v3355 = vpop.f32.mrf.mxu0
        %v3356 = vadd.f32 %v3229, %v3355
        %3357 = vmatmul.bf16.gmra.mxu0 %v3209
        %v3358 = vpop.f32.mrf.mxu0
        %v3359 = vadd.f32 %v3229, %v3358
        %v3360 = vpop.f32.mrf.mxu0
        %v3361 = vadd.f32 %v3229, %v3360
        %3362 = vmatmul.bf16.gmra.mxu0 %v3210
        %v3363 = vpop.f32.mrf.mxu0
        %v3364 = vadd.f32 %v3229, %v3363
        %v3365 = vpop.f32.mrf.mxu0
        %v3366 = vadd.f32 %v3229, %v3365
        %3367 = vdwg.mxu0
        %v3368 = vmax.f32 %v3289, -1.0
        %v3369 = vmax.f32 %v3291, -1.0
        %v3370 = vmax.f32 %v3294, -1.0
        %v3371 = vmax.f32 %v3296, -1.0
        %v3372 = vmax.f32 %v3299, -1.0
        %v3373 = vmax.f32 %v3301, -1.0
        %v3374 = vmax.f32 %v3304, -1.0
        %v3375 = vmax.f32 %v3306, -1.0
        %v3376 = vmax.f32 %v3309, -1.0
        %v3377 = vmax.f32 %v3311, -1.0
        %v3378 = vmax.f32 %v3314, -1.0
        %v3379 = vmax.f32 %v3316, -1.0
        %v3380 = vmax.f32 %v3319, -1.0
        %v3381 = vmax.f32 %v3321, -1.0
        %v3382 = vmax.f32 %v3324, -1.0
        %v3383 = vmax.f32 %v3326, -1.0
        %v3384 = vmax.f32 %v3329, -1.0
        %v3385 = vmax.f32 %v3331, -1.0
        %v3386 = vmax.f32 %v3334, -1.0
        %v3387 = vmax.f32 %v3336, -1.0
        %v3388 = vmax.f32 %v3339, -1.0
        %v3389 = vmax.f32 %v3341, -1.0
        %v3390 = vmax.f32 %v3344, -1.0
        %v3391 = vmax.f32 %v3346, -1.0
        %v3392 = vmax.f32 %v3349, -1.0
        %v3393 = vmax.f32 %v3351, -1.0
        %v3394 = vmax.f32 %v3354, -1.0
        %v3395 = vmax.f32 %v3356, -1.0
        %v3396 = vmax.f32 %v3359, -1.0
        %v3397 = vmax.f32 %v3361, -1.0
        %v3398 = vmax.f32 %v3364, -1.0
        %v3399 = vmax.f32 %v3366, -1.0
        %v3400 = vmin.f32 %v3368, 1.0
        %v3401 = vmin.f32 %v3369, 1.0
        %v3402 = vmin.f32 %v3370, 1.0
        %v3403 = vmin.f32 %v3371, 1.0
        %v3404 = vmin.f32 %v3372, 1.0
        %v3405 = vmin.f32 %v3373, 1.0
        %v3406 = vmin.f32 %v3374, 1.0
        %v3407 = vmin.f32 %v3375, 1.0
        %v3408 = vmin.f32 %v3376, 1.0
        %v3409 = vmin.f32 %v3377, 1.0
        %v3410 = vmin.f32 %v3378, 1.0
        %v3411 = vmin.f32 %v3379, 1.0
        %v3412 = vmin.f32 %v3380, 1.0
        %v3413 = vmin.f32 %v3381, 1.0
        %v3414 = vmin.f32 %v3382, 1.0
        %v3415 = vmin.f32 %v3383, 1.0
        %v3416 = vmin.f32 %v3384, 1.0
        %v3417 = vmin.f32 %v3385, 1.0
        %v3418 = vmin.f32 %v3386, 1.0
        %v3419 = vmin.f32 %v3387, 1.0
        %v3420 = vmin.f32 %v3388, 1.0
        %v3421 = vmin.f32 %v3389, 1.0
        %v3422 = vmin.f32 %v3390, 1.0
        %v3423 = vmin.f32 %v3391, 1.0
        %v3424 = vmin.f32 %v3392, 1.0
        %v3425 = vmin.f32 %v3393, 1.0
        %v3426 = vmin.f32 %v3394, 1.0
        %v3427 = vmin.f32 %v3395, 1.0
        %v3428 = vmin.f32 %v3396, 1.0
        %v3429 = vmin.f32 %v3397, 1.0
        %v3430 = vmin.f32 %v3398, 1.0
        %v3431 = vmin.f32 %v3399, 1.0
        %v3432 = vmul.f32 %v3400, 7.0
        %v3433 = vmul.f32 %v3401, 7.0
        %v3434 = vmul.f32 %v3402, 7.0
        %v3435 = vmul.f32 %v3403, 7.0
        %v3436 = vmul.f32 %v3404, 7.0
        %v3437 = vmul.f32 %v3405, 7.0
        %v3438 = vmul.f32 %v3406, 7.0
        %v3439 = vmul.f32 %v3407, 7.0
        %v3440 = vmul.f32 %v3408, 7.0
        %v3441 = vmul.f32 %v3409, 7.0
        %v3442 = vmul.f32 %v3410, 7.0
        %v3443 = vmul.f32 %v3411, 7.0
        %v3444 = vmul.f32 %v3412, 7.0
        %v3445 = vmul.f32 %v3413, 7.0
        %v3446 = vmul.f32 %v3414, 7.0
        %v3447 = vmul.f32 %v3415, 7.0
        %v3448 = vmul.f32 %v3416, 7.0
        %v3449 = vmul.f32 %v3417, 7.0
        %v3450 = vmul.f32 %v3418, 7.0
        %v3451 = vmul.f32 %v3419, 7.0
        %v3452 = vmul.f32 %v3420, 7.0
        %v3453 = vmul.f32 %v3421, 7.0
        %v3454 = vmul.f32 %v3422, 7.0
        %v3455 = vmul.f32 %v3423, 7.0
        %v3456 = vmul.f32 %v3424, 7.0
        %v3457 = vmul.f32 %v3425, 7.0
        %v3458 = vmul.f32 %v3426, 7.0
        %v3459 = vmul.f32 %v3427, 7.0
        %v3460 = vmul.f32 %v3428, 7.0
        %v3461 = vmul.f32 %v3429, 7.0
        %v3462 = vmul.f32 %v3430, 7.0
        %v3463 = vmul.f32 %v3431, 7.0
        %v3464 = vround.ne.pseudo %v3432
        %v3465 = vround.ne.pseudo %v3433
        %v3466 = vround.ne.pseudo %v3434
        %v3467 = vround.ne.pseudo %v3435
        %v3468 = vround.ne.pseudo %v3436
        %v3469 = vround.ne.pseudo %v3437
        %v3470 = vround.ne.pseudo %v3438
        %v3471 = vround.ne.pseudo %v3439
        %v3472 = vround.ne.pseudo %v3440
        %v3473 = vround.ne.pseudo %v3441
        %v3474 = vround.ne.pseudo %v3442
        %v3475 = vround.ne.pseudo %v3443
        %v3476 = vround.ne.pseudo %v3444
        %v3477 = vround.ne.pseudo %v3445
        %v3478 = vround.ne.pseudo %v3446
        %v3479 = vround.ne.pseudo %v3447
        %v3480 = vround.ne.pseudo %v3448
        %v3481 = vround.ne.pseudo %v3449
        %v3482 = vround.ne.pseudo %v3450
        %v3483 = vround.ne.pseudo %v3451
        %v3484 = vround.ne.pseudo %v3452
        %v3485 = vround.ne.pseudo %v3453
        %v3486 = vround.ne.pseudo %v3454
        %v3487 = vround.ne.pseudo %v3455
        %v3488 = vround.ne.pseudo %v3456
        %v3489 = vround.ne.pseudo %v3457
        %v3490 = vround.ne.pseudo %v3458
        %v3491 = vround.ne.pseudo %v3459
        %v3492 = vround.ne.pseudo %v3460
        %v3493 = vround.ne.pseudo %v3461
        %v3494 = vround.ne.pseudo %v3462
        %v3495 = vround.ne.pseudo %v3463
        %v3496 = vmul.f32 %v3464, %v2829
        %v3497 = vmul.f32 %v3465, %v2829
        %v3498 = vmul.f32 %v3466, %v2829
        %v3499 = vmul.f32 %v3467, %v2829
        %v3500 = vmul.f32 %v3468, %v2829
        %v3501 = vmul.f32 %v3469, %v2829
        %v3502 = vmul.f32 %v3470, %v2829
        %v3503 = vmul.f32 %v3471, %v2829
        %v3504 = vmul.f32 %v3472, %v2829
        %v3505 = vmul.f32 %v3473, %v2829
        %v3506 = vmul.f32 %v3474, %v2829
        %v3507 = vmul.f32 %v3475, %v2829
        %v3508 = vmul.f32 %v3476, %v2829
        %v3509 = vmul.f32 %v3477, %v2829
        %v3510 = vmul.f32 %v3478, %v2829
        %v3511 = vmul.f32 %v3479, %v2829
        %v3512 = vmul.f32 %v3480, %v2829
        %v3513 = vmul.f32 %v3481, %v2829
        %v3514 = vmul.f32 %v3482, %v2829
        %v3515 = vmul.f32 %v3483, %v2829
        %v3516 = vmul.f32 %v3484, %v2829
        %v3517 = vmul.f32 %v3485, %v2829
        %v3518 = vmul.f32 %v3486, %v2829
        %v3519 = vmul.f32 %v3487, %v2829
        %v3520 = vmul.f32 %v3488, %v2829
        %v3521 = vmul.f32 %v3489, %v2829
        %v3522 = vmul.f32 %v3490, %v2829
        %v3523 = vmul.f32 %v3491, %v2829
        %v3524 = vmul.f32 %v3492, %v2829
        %v3525 = vmul.f32 %v3493, %v2829
        %v3526 = vmul.f32 %v3494, %v2829
        %v3527 = vmul.f32 %v3495, %v2829
        %v3528 = vpack.c.bf16 %v3497, %v3496
        %v3529 = vpack.c.bf16 %v3499, %v3498
        %v3530 = vpack.c.bf16 %v3501, %v3500
        %v3531 = vpack.c.bf16 %v3503, %v3502
        %v3532 = vpack.c.bf16 %v3505, %v3504
        %v3533 = vpack.c.bf16 %v3507, %v3506
        %v3534 = vpack.c.bf16 %v3509, %v3508
        %v3535 = vpack.c.bf16 %v3511, %v3510
        %v3536 = vpack.c.bf16 %v3513, %v3512
        %v3537 = vpack.c.bf16 %v3515, %v3514
        %v3538 = vpack.c.bf16 %v3517, %v3516
        %v3539 = vpack.c.bf16 %v3519, %v3518
        %v3540 = vpack.c.bf16 %v3521, %v3520
        %v3541 = vpack.c.bf16 %v3523, %v3522
        %v3542 = vpack.c.bf16 %v3525, %v3524
        %v3543 = vpack.c.bf16 %v3527, %v3526
        %v3544 = vld [vmem:[#allocation10] sm:$0xf]
        %v3545 = vld [vmem:[#allocation10 + $0x4] sm:$0xf]
        %v3546 = vld [vmem:[#allocation10 + $0x8] sm:$0xf]
        %v3547 = vld [vmem:[#allocation10 + $0xc] sm:$0xf]
        %v3548 = vld [vmem:[#allocation10 + $0x10] sm:$0xf]
        %v3549 = vld [vmem:[#allocation10 + $0x14] sm:$0xf]
        %v3550 = vld [vmem:[#allocation10 + $0x18] sm:$0xf]
        %v3551 = vld [vmem:[#allocation10 + $0x1c] sm:$0xf]
        %v3552 = vld [vmem:[#allocation10 + $0x20] sm:$0xf]
        %v3553 = vld [vmem:[#allocation10 + $0x24] sm:$0xf]
        %v3554 = vld [vmem:[#allocation10 + $0x28] sm:$0xf]
        %v3555 = vld [vmem:[#allocation10 + $0x2c] sm:$0xf]
        %v3556 = vld [vmem:[#allocation10 + $0x30] sm:$0xf]
        %v3557 = vld [vmem:[#allocation10 + $0x34] sm:$0xf]
        %v3558 = vld [vmem:[#allocation10 + $0x38] sm:$0xf]
        %v3559 = vld [vmem:[#allocation10 + $0x3c] sm:$0xf]
        %v3560 = vld [vmem:[%s8] sm:$0x1]
        %v3562 = vperm.slane %v3560, 0
        %v3580 = vunpack.c.l.b16 %v3544
        %v3581 = vunpack.c.l.b16 %v3545
        %v3582 = vunpack.c.l.b16 %v3546
        %v3583 = vunpack.c.l.b16 %v3547
        %v3584 = vunpack.c.l.b16 %v3548
        %v3585 = vunpack.c.l.b16 %v3549
        %v3586 = vunpack.c.l.b16 %v3550
        %v3587 = vunpack.c.l.b16 %v3551
        %v3588 = vunpack.c.l.b16 %v3552
        %v3589 = vunpack.c.l.b16 %v3553
        %v3590 = vunpack.c.l.b16 %v3554
        %v3591 = vunpack.c.l.b16 %v3555
        %v3592 = vunpack.c.l.b16 %v3556
        %v3593 = vunpack.c.l.b16 %v3557
        %v3594 = vunpack.c.l.b16 %v3558
        %v3595 = vunpack.c.l.b16 %v3559
        %v3596 = vpack.c.b16 %v3581, %v3580
        %v3597 = vpack.c.b16 %v3583, %v3582
        %v3598 = vpack.c.b16 %v3585, %v3584
        %v3599 = vpack.c.b16 %v3587, %v3586
        %v3600 = vpack.c.b16 %v3589, %v3588
        %v3601 = vpack.c.b16 %v3591, %v3590
        %v3602 = vpack.c.b16 %v3593, %v3592
        %v3603 = vpack.c.b16 %v3595, %v3594
        %3612 = vmatpush.bf16.msra.mxu0 %v3603
        %3613 = vmatpush.bf16.msra.mxu0 %v3602
        %3614 = vmatpush.bf16.msra.mxu0 %v3601
        %3615 = vmatpush.bf16.msra.mxu0 %v3600
        %3616 = vmatpush.bf16.msra.mxu0 %v3599
        %3617 = vmatpush.bf16.msra.mxu0 %v3598
        %3618 = vmatpush.bf16.msra.mxu0 %v3597
        %3619 = vmatpush.bf16.msra.mxu0 %v3596
        %3620 = vmatmul.bf16.gmra.mxu0 %v3528
        %v3621 = vpop.f32.mrf.mxu0
        %v3622 = vadd.f32 %v3562, %v3621
        %v3623 = vpop.f32.mrf.mxu0
        %v3624 = vadd.f32 %v3562, %v3623
        %3625 = vmatmul.bf16.gmra.mxu0 %v3529
        %v3626 = vpop.f32.mrf.mxu0
        %v3627 = vadd.f32 %v3562, %v3626
        %v3628 = vpop.f32.mrf.mxu0
        %v3629 = vadd.f32 %v3562, %v3628
        %3630 = vmatmul.bf16.gmra.mxu0 %v3530
        %v3631 = vpop.f32.mrf.mxu0
        %v3632 = vadd.f32 %v3562, %v3631
        %v3633 = vpop.f32.mrf.mxu0
        %v3634 = vadd.f32 %v3562, %v3633
        %3635 = vmatmul.bf16.gmra.mxu0 %v3531
        %v3636 = vpop.f32.mrf.mxu0
        %v3637 = vadd.f32 %v3562, %v3636
        %v3638 = vpop.f32.mrf.mxu0
        %v3639 = vadd.f32 %v3562, %v3638
        %3640 = vmatmul.bf16.gmra.mxu0 %v3532
        %v3641 = vpop.f32.mrf.mxu0
        %v3642 = vadd.f32 %v3562, %v3641
        %v3643 = vpop.f32.mrf.mxu0
        %v3644 = vadd.f32 %v3562, %v3643
        %3645 = vmatmul.bf16.gmra.mxu0 %v3533
        %v3646 = vpop.f32.mrf.mxu0
        %v3647 = vadd.f32 %v3562, %v3646
        %v3648 = vpop.f32.mrf.mxu0
        %v3649 = vadd.f32 %v3562, %v3648
        %3650 = vmatmul.bf16.gmra.mxu0 %v3534
        %v3651 = vpop.f32.mrf.mxu0
        %v3652 = vadd.f32 %v3562, %v3651
        %v3653 = vpop.f32.mrf.mxu0
        %v3654 = vadd.f32 %v3562, %v3653
        %3655 = vmatmul.bf16.gmra.mxu0 %v3535
        %v3656 = vpop.f32.mrf.mxu0
        %v3657 = vadd.f32 %v3562, %v3656
        %v3658 = vpop.f32.mrf.mxu0
        %v3659 = vadd.f32 %v3562, %v3658
        %3660 = vmatmul.bf16.gmra.mxu0 %v3536
        %v3661 = vpop.f32.mrf.mxu0
        %v3662 = vadd.f32 %v3562, %v3661
        %v3663 = vpop.f32.mrf.mxu0
        %v3664 = vadd.f32 %v3562, %v3663
        %3665 = vmatmul.bf16.gmra.mxu0 %v3537
        %v3666 = vpop.f32.mrf.mxu0
        %v3667 = vadd.f32 %v3562, %v3666
        %v3668 = vpop.f32.mrf.mxu0
        %v3669 = vadd.f32 %v3562, %v3668
        %3670 = vmatmul.bf16.gmra.mxu0 %v3538
        %v3671 = vpop.f32.mrf.mxu0
        %v3672 = vadd.f32 %v3562, %v3671
        %v3673 = vpop.f32.mrf.mxu0
        %v3674 = vadd.f32 %v3562, %v3673
        %3675 = vmatmul.bf16.gmra.mxu0 %v3539
        %v3676 = vpop.f32.mrf.mxu0
        %v3677 = vadd.f32 %v3562, %v3676
        %v3678 = vpop.f32.mrf.mxu0
        %v3679 = vadd.f32 %v3562, %v3678
        %3680 = vmatmul.bf16.gmra.mxu0 %v3540
        %v3681 = vpop.f32.mrf.mxu0
        %v3682 = vadd.f32 %v3562, %v3681
        %v3683 = vpop.f32.mrf.mxu0
        %v3684 = vadd.f32 %v3562, %v3683
        %3685 = vmatmul.bf16.gmra.mxu0 %v3541
        %v3686 = vpop.f32.mrf.mxu0
        %v3687 = vadd.f32 %v3562, %v3686
        %v3688 = vpop.f32.mrf.mxu0
        %v3689 = vadd.f32 %v3562, %v3688
        %3690 = vmatmul.bf16.gmra.mxu0 %v3542
        %v3691 = vpop.f32.mrf.mxu0
        %v3692 = vadd.f32 %v3562, %v3691
        %v3693 = vpop.f32.mrf.mxu0
        %v3694 = vadd.f32 %v3562, %v3693
        %3695 = vmatmul.bf16.gmra.mxu0 %v3543
        %v3696 = vpop.f32.mrf.mxu0
        %v3697 = vadd.f32 %v3562, %v3696
        %v3698 = vpop.f32.mrf.mxu0
        %v3699 = vadd.f32 %v3562, %v3698
        %3700 = vdwg.mxu0
        %3701 = vst [vmem:[%s419] sm:$0xff] %v3622
        %3702 = vst [vmem:[%s419 + $0x8] sm:$0xff] %v3624
        %3703 = vst [vmem:[%s419 + $0x10] sm:$0xff] %v3627
        %3704 = vst [vmem:[%s419 + $0x18] sm:$0xff] %v3629
        %3705 = vst [vmem:[%s419 + $0x20] sm:$0xff] %v3632
        %3706 = vst [vmem:[%s419 + $0x28] sm:$0xff] %v3634
        %3707 = vst [vmem:[%s419 + $0x30] sm:$0xff] %v3637
        %3708 = vst [vmem:[%s419 + $0x38] sm:$0xff] %v3639
        %3709 = vst [vmem:[%s419 + $0x40] sm:$0xff] %v3642
        %3710 = vst [vmem:[%s419 + $0x48] sm:$0xff] %v3644
        %3711 = vst [vmem:[%s419 + $0x50] sm:$0xff] %v3647
        %3712 = vst [vmem:[%s419 + $0x58] sm:$0xff] %v3649
        %3713 = vst [vmem:[%s419 + $0x60] sm:$0xff] %v3652
        %3714 = vst [vmem:[%s419 + $0x68] sm:$0xff] %v3654
        %3715 = vst [vmem:[%s419 + $0x70] sm:$0xff] %v3657
        %3716 = vst [vmem:[%s419 + $0x78] sm:$0xff] %v3659
        %3717 = vst [vmem:[%s419 + $0x80] sm:$0xff] %v3662
        %3718 = vst [vmem:[%s419 + $0x88] sm:$0xff] %v3664
        %3719 = vst [vmem:[%s419 + $0x90] sm:$0xff] %v3667
        %3720 = vst [vmem:[%s419 + $0x98] sm:$0xff] %v3669
        %3721 = vst [vmem:[%s419 + $0xa0] sm:$0xff] %v3672
        %3722 = vst [vmem:[%s419 + $0xa8] sm:$0xff] %v3674
        %3723 = vst [vmem:[%s419 + $0xb0] sm:$0xff] %v3677
        %3724 = vst [vmem:[%s419 + $0xb8] sm:$0xff] %v3679
        %3725 = vst [vmem:[%s419 + $0xc0] sm:$0xff] %v3682
        %3726 = vst [vmem:[%s419 + $0xc8] sm:$0xff] %v3684
        %3727 = vst [vmem:[%s419 + $0xd0] sm:$0xff] %v3687
        %3728 = vst [vmem:[%s419 + $0xd8] sm:$0xff] %v3689
        %3729 = vst [vmem:[%s419 + $0xe0] sm:$0xff] %v3692
        %3730 = vst [vmem:[%s419 + $0xe8] sm:$0xff] %v3694
        %3731 = vst [vmem:[%s419 + $0xf0] sm:$0xff] %v3697
        %3732 = vst [vmem:[%s419 + $0xf8] sm:$0xff] %v3699
        %s3733 = sand.u32 %s230, 1
        %s3734 = scalar_lea.sflag [#allocation4], %s3733
        %s3735 = sand.u32 %s230, 1
        %s3736 = smul.addr %s3735, 256
        %s3737 = scalar_lea.vmem [#allocation11], %s3736
        // Predicated region
        $region77: #{tpu_custom_call.1} parent=55 // pred_check
          %p3738 = pneg %p240
        $region78: #{tpu_custom_call.1} parent=55 // pred_check_branch
          %3740 = sbr.rel (%p3738) target = $region80
        $region79: #{tpu_custom_call.1} parent=55 // pred_region
          %s3741 = smul.u32 32, %s28
          %3743 = vsyncadd %s3734, 0
          %s3744 = smul.addr %s3741, 8
          %s3745 = scalar_lea.hbm %s9, %s3744
          %s3746 = sshll.u32 %s3737, 4
          %s3747 = int_to_ptr.vmem [resolvable:$true] %s3746
          %s3748 = sshll.u32 %s3745, 4
          %s3749 = int_to_ptr.hbm [resolvable:$true] %s3748
          %3754 = dma.vmem_to_hbm [thread:$0]  %s3747, 4096, %s3749, %s3734, 128, 128, 8
        $region80: #{tpu_custom_call.1} parent=55 // pred_fallthru
          _
      $region56: #{tpu_custom_call.1} parent=5 // pred_fallthru
        _
      %p3755 = scmp.le.s32.totalorder 2, %s23
      // Predicated region
      $region81: #{tpu_custom_call.1} parent=5 // pred_check
        %p3756 = pneg %p3755
      $region82: #{tpu_custom_call.1} parent=5 // pred_check_branch
        %3758 = sbr.rel (%p3756) target = $region84
      $region83: #{tpu_custom_call.1} parent=5 // pred_region
        %s3759 = ssub.s32 %s23, 2
        // Predicated region
        $region85: #{tpu_custom_call.1} parent=83 // pred_check
          %p3760 = pneg %p246
        $region86: #{tpu_custom_call.1} parent=83 // pred_check_branch
          %3762 = sbr.rel (%p3760) target = $region88
        $region87: #{tpu_custom_call.1} parent=83 // pred_region
          %s3763 = sand.u32 %s231, 1
          %s3764 = scalar_lea.sflag [#allocation4], %s3763
          %s3765 = sand.u32 %s231, 1
          %s3766 = smul.addr %s3765, 256
          %s3767 = scalar_lea.vmem [#allocation11], %s3766
          %3769 = dma.done %s3764, 4096
        $region88: #{tpu_custom_call.1} parent=83 // pred_fallthru
          _
      $region84: #{tpu_custom_call.1} parent=5 // pred_fallthru
        _
    $region6: #{tpu_custom_call.1} parent=1 // loop_footer
      %s27 = sadd.s32 1, %s23
    $region7: #{tpu_custom_call.1} parent=1 // loop_footer_branch
      %22 = sbr.rel target = $region3
    $region8: #{tpu_custom_call.1} parent=1 // loop_exit
      _
    %3770 = vsyncpa [#allocation3], 1
    %s3771 = scalar_lea.sflag [#allocation3], 1
    %3772 = vsyncpa %s3771, 1
    %3773 = vsyncpa [#allocation6], 1
    %3774 = vsyncpa [#allocation9], 1
    %3775 = vsyncpa [#allocation4], 1
    %s3776 = scalar_lea.sflag [#allocation4], 1
    %3777 = vsyncpa %s3776, 1

</llo_original>
